<compile_context>
chip_gen: v7x
topology: tpu7x:2x2x1
jax: 0.10.0
libtpu: 0.0.40
codegen_flags: <defaults>
</compile_context>

<pallas_src>
import functools

import jax
import jax.numpy as jnp
from jax.experimental import pallas as pl
from jax.experimental.pallas import tpu as pltpu


# ----------------------------------------------------------------------------
# Pallas kernels (one grid step, whole-array blocks, lane-dense outputs)
# ----------------------------------------------------------------------------
def _conv_kernel(w_ref, x_ref, b_ref, o_ref, *, act):
    """out[Cout, M] = act(W[Cout, K] @ X[K, M] + b[Cout, 1])."""
    y = jnp.dot(w_ref[...], x_ref[...], preferred_element_type=jnp.float32)
    y = y + b_ref[...]
    if act == "relu":
        y = jnp.maximum(y, 0.0)
    elif act == "sigmoid":
        y = jax.nn.sigmoid(y)
    o_ref[...] = y


def _conv_pool_kernel(w_ref, x_ref, b_ref, o_ref):
    """Fused conv + bias + relu + 2x2 max-pool.

    x_ref: (4, K, Mp) im2col patches, one slab per pool corner; columns are ordered
    (n, i, j) over the *pooled* grid, so pooling is a plain elementwise max of the
    4 per-corner GEMM results.  relu(max_c y_c + b) == max_c relu(y_c + b), so the
    bias/relu epilogue commutes with the pooling max.
    """
    w = w_ref[...]
    y0 = jnp.dot(w, x_ref[0], preferred_element_type=jnp.float32)
    y1 = jnp.dot(w, x_ref[1], preferred_element_type=jnp.float32)
    y2 = jnp.dot(w, x_ref[2], preferred_element_type=jnp.float32)
    y3 = jnp.dot(w, x_ref[3], preferred_element_type=jnp.float32)
    y = jnp.maximum(jnp.maximum(y0, y1), jnp.maximum(y2, y3))
    o_ref[...] = jnp.maximum(y + b_ref[...], 0.0)


# ----------------------------------------------------------------------------
# pallas_call wrappers: single grid step, operands as whole VMEM-resident blocks
# ----------------------------------------------------------------------------
_CP = pltpu.CompilerParams(dimension_semantics=("arbitrary",))


def _full_spec(shape):
    nd = len(shape)
    return pl.BlockSpec(shape, lambda i: (0,) * nd)


def _gemm(wt, xt, b, act):
    """act(wt @ xt + b): wt (Cout, K), xt (K, M), b (Cout,) -> (Cout, M) float32."""
    cout, k = wt.shape
    m = xt.shape[1]
    return pl.pallas_call(
        functools.partial(_conv_kernel, act=act),
        out_shape=jax.ShapeDtypeStruct((cout, m), jnp.float32),
        grid=(1,),
        in_specs=[_full_spec((cout, k)), _full_spec((k, m)), _full_spec((cout, 1))],
        out_specs=_full_spec((cout, m)),
        compiler_params=_CP,
    )(wt.astype(jnp.bfloat16), xt.astype(jnp.bfloat16),
      b.reshape(cout, 1).astype(jnp.float32))


def _gemm_pool(wt, xt4, b):
    """Fused conv+relu+2x2pool: wt (Cout, K), xt4 (4, K, Mp) -> (Cout, Mp) float32."""
    cout, k = wt.shape
    mp = xt4.shape[2]
    return pl.pallas_call(
        _conv_pool_kernel,
        out_shape=jax.ShapeDtypeStruct((cout, mp), jnp.float32),
        grid=(1,),
        in_specs=[_full_spec((cout, k)), _full_spec((4, k, mp)), _full_spec((cout, 1))],
        out_specs=_full_spec((cout, mp)),
        compiler_params=_CP,
    )(wt.astype(jnp.bfloat16), xt4.astype(jnp.bfloat16),
      b.reshape(cout, 1).astype(jnp.float32))


# ----------------------------------------------------------------------------
# JAX glue: activations live as (C, N, H, W); im2col is built directly in the
# transposed (K, M) layout so the large N*H*W dim is the GEMM lane axis.
# ----------------------------------------------------------------------------
def _conv_weight_mat(w):
    """PyTorch Conv2d weight (Cout, Cin, kh, kw) -> (Cout, kh*kw*Cin), K ordered (dy, dx, cin)."""
    cout, cin, kh, kw = w.shape
    return jnp.transpose(w, (0, 2, 3, 1)).reshape(cout, kh * kw * cin)


def _patches(x, kh, kw, pad):
    """x (C, N, H, W) -> (kh*kw*C, N*Ho*Wo); rows ordered (dy, dx, c), cols (n, ho, wo)."""
    c, n, h, w = x.shape
    xp = jnp.pad(x, ((0, 0), (0, 0), (pad, pad), (pad, pad)))
    ho, wo = h + 2 * pad - kh + 1, w + 2 * pad - kw + 1
    rows = []
    for dy in range(kh):
        for dx in range(kw):
            rows.append(xp[:, :, dy:dy + ho, dx:dx + wo].reshape(c, n * ho * wo))
    return jnp.concatenate(rows, axis=0), (ho, wo)


def _pool_patches(x, kh, kw, pad):
    """im2col restricted to the 2x2-pooled region, one slab per pool corner.

    Returns (4, kh*kw*C, N*Ho2*Wo2).  Corner (di, dj) slab holds the patches of the
    conv-output positions (2i+di, 2j+dj); odd trailing rows/cols (floor pooling) are
    simply never computed.
    """
    c, n, h, w = x.shape
    xp = jnp.pad(x, ((0, 0), (0, 0), (pad, pad), (pad, pad)))
    ho, wo = h + 2 * pad - kh + 1, w + 2 * pad - kw + 1
    ho2, wo2 = ho // 2, wo // 2
    corners = []
    for di in range(2):
        for dj in range(2):
            rows = []
            for dy in range(kh):
                for dx in range(kw):
                    sl = xp[:, :, di + dy:di + dy + 2 * ho2:2,
                            dj + dx:dj + dx + 2 * wo2:2]
                    rows.append(sl.reshape(c, n * ho2 * wo2))
            corners.append(jnp.concatenate(rows, axis=0))
    return jnp.stack(corners, axis=0), (ho2, wo2)


def conv_pool_stage(x, w, b):
    """Conv2d(3x3, pad=1) + ReLU + MaxPool2d(2,2) fused into one Pallas call."""
    cout = w.shape[0]
    n = x.shape[1]
    xt4, (ho2, wo2) = _pool_patches(x, w.shape[2], w.shape[3], pad=1)
    y = _gemm_pool(_conv_weight_mat(w), xt4, b)
    return y.reshape(cout, n, ho2, wo2)


def conv_stage(x, w, b, pad, act):
    """Plain Conv2d (stride 1) + activation."""
    cout = w.shape[0]
    n = x.shape[1]
    xt, (ho, wo) = _patches(x, w.shape[2], w.shape[3], pad)
    y = _gemm(_conv_weight_mat(w), xt, b, act)
    return y.reshape(cout, n, ho, wo)


def tconv_k2s2_stage(x, w, b):
    """ConvTranspose2d(k=2, stride=2, pad=0) + ReLU via output-phase decomposition.

    Every output pixel receives exactly one kernel tap, so the 4 phases are stacked on
    the Cout axis of a single zero-free GEMM (bias+relu fused) and interleaved afterwards.
    """
    cin, cout = w.shape[0], w.shape[1]
    _, n, h, wd = x.shape
    wbig = jnp.transpose(w, (2, 3, 1, 0)).reshape(4 * cout, cin)   # rows (rh, rw, cout)
    bbig = jnp.tile(b, 4)
    y = _gemm(wbig, x.reshape(cin, n * h * wd), bbig, act="relu")  # (4*cout, n*h*wd)
    y = y.reshape(2, 2, cout, n, h, wd)                            # (rh, rw, cout, n, ih, iw)
    y = jnp.transpose(y, (2, 3, 4, 0, 5, 1)).reshape(cout, n, 2 * h, 2 * wd)
    return y


def tconv_k3s2_stage(x, w, b):
    """ConvTranspose2d(k=3, stride=2, pad=0) + ReLU via tap decomposition.

    One GEMM over all 9 taps (no structural zeros).  Taps overlap on even output
    rows/cols, so the tiny scatter-add + bias + relu epilogue runs as XLA glue.
    """
    cin, cout, kh, kw = w.shape
    _, n, h, wd = x.shape
    wbig = jnp.transpose(w, (2, 3, 1, 0)).reshape(kh * kw * cout, cin)  # rows (dy, dx, cout)
    zeros = jnp.zeros((kh * kw * cout,), jnp.float32)
    y = _gemm(wbig, x.reshape(cin, n * h * wd), zeros, act="none")
    taps = y.reshape(kh, kw, cout, n, h, wd)
    oh, ow = 2 * (h - 1) + kh, 2 * (wd - 1) + kw
    out = jnp.zeros((cout, n, oh, ow), jnp.float32)
    for dy in range(kh):
        for dx in range(kw):
            out = out.at[:, :, dy:dy + 2 * h:2, dx:dx + 2 * wd:2].add(taps[dy, dx])
    return jnp.maximum(out + b.reshape(cout, 1, 1, 1), 0.0)


# ----------------------------------------------------------------------------
# Parameters (deterministic synthetic init, PyTorch-like scaling)
# ----------------------------------------------------------------------------
def init_params(key):
    def conv_p(key, cout, cin, k):
        k1, k2 = jax.random.split(key)
        bound = 1.0 / jnp.sqrt(cin * k * k)
        w = jax.random.uniform(k1, (cout, cin, k, k), jnp.float32, -bound, bound)
        b = jax.random.uniform(k2, (cout,), jnp.float32, -bound, bound)
        return w, b

    def tconv_p(key, cin, cout, k):
        k1, k2 = jax.random.split(key)
        bound = 1.0 / jnp.sqrt(cin * k * k)
        w = jax.random.uniform(k1, (cin, cout, k, k), jnp.float32, -bound, bound)
        b = jax.random.uniform(k2, (cout,), jnp.float32, -bound, bound)
        return w, b

    keys = jax.random.split(key, 7)
    return {
        "conv1": conv_p(keys[0], 32, 1, 3),
        "conv2": conv_p(keys[1], 16, 32, 3),
        "conv3": conv_p(keys[2], 8, 16, 3),
        "t_conv1": tconv_p(keys[3], 8, 8, 3),
        "t_conv2": tconv_p(keys[4], 8, 16, 2),
        "t_conv3": tconv_p(keys[5], 16, 32, 2),
        "conv_out": conv_p(keys[6], 1, 32, 3),
    }


# ----------------------------------------------------------------------------
# Forward pass (matches ConvDenoiser.forward semantics)
# ----------------------------------------------------------------------------
def conv_denoiser_forward(params, x_nchw):
    x = jnp.transpose(x_nchw, (1, 0, 2, 3))              # NCHW -> (C, N, H, W)

    x = conv_pool_stage(x, *params["conv1"])             # (32, N, 14, 14)
    x = conv_pool_stage(x, *params["conv2"])             # (16, N,  7,  7)
    x = conv_pool_stage(x, *params["conv3"])             # ( 8, N,  3,  3)

    x = tconv_k3s2_stage(x, *params["t_conv1"])          # ( 8, N,  7,  7)
    x = tconv_k2s2_stage(x, *params["t_conv2"])          # (16, N, 14, 14)
    x = tconv_k2s2_stage(x, *params["t_conv3"])          # (32, N, 28, 28)

    x = conv_stage(x, *params["conv_out"], pad=1, act="sigmoid")   # (1, N, 28, 28)

    return jnp.transpose(x, (1, 0, 2, 3))                # (C, N, H, W) -> NCHW


# ----------------------------------------------------------------------------
# Pure-XLA float32 reference (for tolerance check against the bf16-MXU kernels)
# ----------------------------------------------------------------------------
def conv_denoiser_reference(params, x):
    dn = ("NCHW", "OIHW", "NCHW")

    def conv(x, w, b, pad):
        y = jax.lax.conv_general_dilated(x, w, (1, 1), ((pad, pad), (pad, pad)),
                                         dimension_numbers=dn)
        return y + b.reshape(1, -1, 1, 1)

    def tconv(x, w, b, k):
        wc = jnp.transpose(w[:, :, ::-1, ::-1], (1, 0, 2, 3))
        y = jax.lax.conv_general_dilated(x, wc, (1, 1), ((k - 1, k - 1), (k - 1, k - 1)),
                                         lhs_dilation=(2, 2), dimension_numbers=dn)
        return y + b.reshape(1, -1, 1, 1)

    def pool(x):
        return jax.lax.reduce_window(x, -jnp.inf, jax.lax.max,
                                     (1, 1, 2, 2), (1, 1, 2, 2), "VALID")

    x = pool(jax.nn.relu(conv(x, *params["conv1"], 1)))
    x = pool(jax.nn.relu(conv(x, *params["conv2"], 1)))
    x = pool(jax.nn.relu(conv(x, *params["conv3"], 1)))
    x = jax.nn.relu(tconv(x, *params["t_conv1"], 3))
    x = jax.nn.relu(tconv(x, *params["t_conv2"], 2))
    x = jax.nn.relu(tconv(x, *params["t_conv3"], 2))
    x = jax.nn.sigmoid(conv(x, *params["conv_out"], 1))
    return x


# ----------------------------------------------------------------------------
if __name__ == "__main__":
    key = jax.random.PRNGKey(0)
    pkey, xkey = jax.random.split(key)

    params = init_params(pkey)
    # MNIST-like shape the module was designed around: (N=2, C=1, 28, 28)
    x = jax.random.uniform(xkey, (2, 1, 28, 28), jnp.float32)

    fwd = jax.jit(conv_denoiser_forward)
    out = jax.block_until_ready(fwd(params, x))

    assert out.shape == (2, 1, 28, 28), out.shape
    assert out.dtype == jnp.float32
    assert bool(jnp.all(jnp.isfinite(out)))
    assert bool(jnp.all((out >= 0.0) & (out <= 1.0)))     # sigmoid output range

    ref = jax.block_until_ready(jax.jit(conv_denoiser_reference)(params, x))
    max_err = float(jnp.max(jnp.abs(out - ref)))
    assert max_err < 3e-2, f"max abs error vs f32 reference: {max_err}"

    print("KERNEL_OK")
</pallas_src>

<mosaic_0001>
module attributes {stable_mosaic.version = 11 : i64} {
  func.func @_conv_pool_kernel(%arg0: i32, %arg1: memref<32x9xbf16, #tpu.memory_space<vmem>>, %arg2: memref<4x9x392xbf16, #tpu.memory_space<vmem>>, %arg3: memref<32x1xf32, #tpu.memory_space<vmem>>, %arg4: memref<32x392xf32, #tpu.memory_space<vmem>>) attributes {dimension_semantics = [#tpu.dimension_semantics<arbitrary>], iteration_bounds = array<i64: 1>, scalar_prefetch = 0 : i64, scratch_operands = 0 : i64, tpu.core_type = #tpu.core_type<tc>, window_params = [{pipeline_mode = #tpu.pipeline_mode<synchronous>, transform_indices = @transform_0, window_bounds = array<i64: 32, 9>}, {pipeline_mode = #tpu.pipeline_mode<synchronous>, transform_indices = @transform_1, window_bounds = array<i64: 4, 9, 392>}, {pipeline_mode = #tpu.pipeline_mode<synchronous>, transform_indices = @transform_2, window_bounds = array<i64: 32, 1>}, {pipeline_mode = #tpu.pipeline_mode<synchronous>, transform_indices = @transform_3, window_bounds = array<i64: 32, 392>}]} {
    %c0 = arith.constant 0 : index
    %c0_0 = arith.constant 0 : index
    %0 = vector.load %arg1[%c0, %c0_0] : memref<32x9xbf16, #tpu.memory_space<vmem>>, vector<32x9xbf16>
    %c0_1 = arith.constant 0 : index
    %c0_2 = arith.constant 0 : index
    %c0_3 = arith.constant 0 : index
    %1 = vector.load %arg2[%c0_1, %c0_2, %c0_3] : memref<4x9x392xbf16, #tpu.memory_space<vmem>>, vector<1x9x392xbf16>
    %2 = vector.shape_cast %1 : vector<1x9x392xbf16> to vector<9x392xbf16>
    %cst = arith.constant dense<0.000000e+00> : vector<32x392xf32>
    %3 = tpu.matmul %0, %2, %cst {dimension_numbers = #tpu.dot_dimension_numbers<[1], [0], [0], [1], [0, 0, 1, 1], [], []>} : vector<32x9xbf16>, vector<9x392xbf16>, vector<32x392xf32> -> vector<32x392xf32>
    %c1 = arith.constant 1 : index
    %c0_4 = arith.constant 0 : index
    %c0_5 = arith.constant 0 : index
    %4 = vector.load %arg2[%c1, %c0_4, %c0_5] : memref<4x9x392xbf16, #tpu.memory_space<vmem>>, vector<1x9x392xbf16>
    %5 = vector.shape_cast %4 : vector<1x9x392xbf16> to vector<9x392xbf16>
    %cst_6 = arith.constant dense<0.000000e+00> : vector<32x392xf32>
    %6 = tpu.matmul %0, %5, %cst_6 {dimension_numbers = #tpu.dot_dimension_numbers<[1], [0], [0], [1], [0, 0, 1, 1], [], []>} : vector<32x9xbf16>, vector<9x392xbf16>, vector<32x392xf32> -> vector<32x392xf32>
    %c2 = arith.constant 2 : index
    %c0_7 = arith.constant 0 : index
    %c0_8 = arith.constant 0 : index
    %7 = vector.load %arg2[%c2, %c0_7, %c0_8] : memref<4x9x392xbf16, #tpu.memory_space<vmem>>, vector<1x9x392xbf16>
    %8 = vector.shape_cast %7 : vector<1x9x392xbf16> to vector<9x392xbf16>
    %cst_9 = arith.constant dense<0.000000e+00> : vector<32x392xf32>
    %9 = tpu.matmul %0, %8, %cst_9 {dimension_numbers = #tpu.dot_dimension_numbers<[1], [0], [0], [1], [0, 0, 1, 1], [], []>} : vector<32x9xbf16>, vector<9x392xbf16>, vector<32x392xf32> -> vector<32x392xf32>
    %c3 = arith.constant 3 : index
    %c0_10 = arith.constant 0 : index
    %c0_11 = arith.constant 0 : index
    %10 = vector.load %arg2[%c3, %c0_10, %c0_11] : memref<4x9x392xbf16, #tpu.memory_space<vmem>>, vector<1x9x392xbf16>
    %11 = vector.shape_cast %10 : vector<1x9x392xbf16> to vector<9x392xbf16>
    %cst_12 = arith.constant dense<0.000000e+00> : vector<32x392xf32>
    %12 = tpu.matmul %0, %11, %cst_12 {dimension_numbers = #tpu.dot_dimension_numbers<[1], [0], [0], [1], [0, 0, 1, 1], [], []>} : vector<32x9xbf16>, vector<9x392xbf16>, vector<32x392xf32> -> vector<32x392xf32>
    %13 = arith.maximumf %3, %6 : vector<32x392xf32>
    %14 = arith.maximumf %9, %12 : vector<32x392xf32>
    %15 = arith.maximumf %13, %14 : vector<32x392xf32>
    %c0_13 = arith.constant 0 : index
    %c0_14 = arith.constant 0 : index
    %16 = vector.load %arg3[%c0_13, %c0_14] : memref<32x1xf32, #tpu.memory_space<vmem>>, vector<32x1xf32>
    %17 = vector.broadcast %16 : vector<32x1xf32> to vector<32x392xf32>
    %18 = arith.addf %15, %17 : vector<32x392xf32>
    %cst_15 = arith.constant 0.000000e+00 : f32
    %19 = vector.broadcast %cst_15 : f32 to vector<32x392xf32>
    %20 = arith.maximumf %18, %19 : vector<32x392xf32>
    %c0_16 = arith.constant 0 : index
    %c0_17 = arith.constant 0 : index
    %21 = vector.load %arg4[%c0_16, %c0_17] : memref<32x392xf32, #tpu.memory_space<vmem>>, vector<32x392xf32>
    tpu.vector_store %arg4[%c0_16, %c0_17], %20 {strides = array<i32>} : memref<32x392xf32, #tpu.memory_space<vmem>>, vector<32x392xf32>,
    return
  }
  func.func @transform_0(%arg0: i32) -> (i32, i32) {
    %c0_i32 = arith.constant 0 : i32
    %c0_i32_0 = arith.constant 0 : i32
    %c0_i32_1 = arith.constant 0 : i32
    return %c0_i32, %c0_i32_0 : i32, i32
  }
  func.func @transform_1(%arg0: i32) -> (i32, i32, i32) {
    %c0_i32 = arith.constant 0 : i32
    %c0_i32_0 = arith.constant 0 : i32
    %c0_i32_1 = arith.constant 0 : i32
    %c0_i32_2 = arith.constant 0 : i32
    return %c0_i32, %c0_i32_0, %c0_i32_1 : i32, i32, i32
  }
  func.func @transform_2(%arg0: i32) -> (i32, i32) {
    %c0_i32 = arith.constant 0 : i32
    %c0_i32_0 = arith.constant 0 : i32
    %c0_i32_1 = arith.constant 0 : i32
    return %c0_i32, %c0_i32_0 : i32, i32
  }
  func.func @transform_3(%arg0: i32) -> (i32, i32) {
    %c0_i32 = arith.constant 0 : i32
    %c0_i32_0 = arith.constant 0 : i32
    %c0_i32_1 = arith.constant 0 : i32
    return %c0_i32, %c0_i32_0 : i32, i32
  }
}

module attributes {stable_mosaic.version = 11 : i64} {
  func.func @_conv_pool_kernel(%arg0: i32, %arg1: memref<16x288xbf16, #tpu.memory_space<vmem>>, %arg2: memref<4x288x98xbf16, #tpu.memory_space<vmem>>, %arg3: memref<16x1xf32, #tpu.memory_space<vmem>>, %arg4: memref<16x98xf32, #tpu.memory_space<vmem>>) attributes {dimension_semantics = [#tpu.dimension_semantics<arbitrary>], iteration_bounds = array<i64: 1>, scalar_prefetch = 0 : i64, scratch_operands = 0 : i64, tpu.core_type = #tpu.core_type<tc>, window_params = [{pipeline_mode = #tpu.pipeline_mode<synchronous>, transform_indices = @transform_0, window_bounds = array<i64: 16, 288>}, {pipeline_mode = #tpu.pipeline_mode<synchronous>, transform_indices = @transform_1, window_bounds = array<i64: 4, 288, 98>}, {pipeline_mode = #tpu.pipeline_mode<synchronous>, transform_indices = @transform_2, window_bounds = array<i64: 16, 1>}, {pipeline_mode = #tpu.pipeline_mode<synchronous>, transform_indices = @transform_3, window_bounds = array<i64: 16, 98>}]} {
    %c0 = arith.constant 0 : index
    %c0_0 = arith.constant 0 : index
    %0 = vector.load %arg1[%c0, %c0_0] : memref<16x288xbf16, #tpu.memory_space<vmem>>, vector<16x288xbf16>
    %c0_1 = arith.constant 0 : index
    %c0_2 = arith.constant 0 : index
    %c0_3 = arith.constant 0 : index
    %1 = vector.load %arg2[%c0_1, %c0_2, %c0_3] : memref<4x288x98xbf16, #tpu.memory_space<vmem>>, vector<1x288x98xbf16>
    %2 = vector.shape_cast %1 : vector<1x288x98xbf16> to vector<288x98xbf16>
    %cst = arith.constant dense<0.000000e+00> : vector<16x98xf32>
    %3 = tpu.matmul %0, %2, %cst {dimension_numbers = #tpu.dot_dimension_numbers<[1], [0], [0], [1], [0, 0, 1, 1], [], []>} : vector<16x288xbf16>, vector<288x98xbf16>, vector<16x98xf32> -> vector<16x98xf32>
    %c1 = arith.constant 1 : index
    %c0_4 = arith.constant 0 : index
    %c0_5 = arith.constant 0 : index
    %4 = vector.load %arg2[%c1, %c0_4, %c0_5] : memref<4x288x98xbf16, #tpu.memory_space<vmem>>, vector<1x288x98xbf16>
    %5 = vector.shape_cast %4 : vector<1x288x98xbf16> to vector<288x98xbf16>
    %cst_6 = arith.constant dense<0.000000e+00> : vector<16x98xf32>
    %6 = tpu.matmul %0, %5, %cst_6 {dimension_numbers = #tpu.dot_dimension_numbers<[1], [0], [0], [1], [0, 0, 1, 1], [], []>} : vector<16x288xbf16>, vector<288x98xbf16>, vector<16x98xf32> -> vector<16x98xf32>
    %c2 = arith.constant 2 : index
    %c0_7 = arith.constant 0 : index
    %c0_8 = arith.constant 0 : index
    %7 = vector.load %arg2[%c2, %c0_7, %c0_8] : memref<4x288x98xbf16, #tpu.memory_space<vmem>>, vector<1x288x98xbf16>
    %8 = vector.shape_cast %7 : vector<1x288x98xbf16> to vector<288x98xbf16>
    %cst_9 = arith.constant dense<0.000000e+00> : vector<16x98xf32>
    %9 = tpu.matmul %0, %8, %cst_9 {dimension_numbers = #tpu.dot_dimension_numbers<[1], [0], [0], [1], [0, 0, 1, 1], [], []>} : vector<16x288xbf16>, vector<288x98xbf16>, vector<16x98xf32> -> vector<16x98xf32>
    %c3 = arith.constant 3 : index
    %c0_10 = arith.constant 0 : index
    %c0_11 = arith.constant 0 : index
    %10 = vector.load %arg2[%c3, %c0_10, %c0_11] : memref<4x288x98xbf16, #tpu.memory_space<vmem>>, vector<1x288x98xbf16>
    %11 = vector.shape_cast %10 : vector<1x288x98xbf16> to vector<288x98xbf16>
    %cst_12 = arith.constant dense<0.000000e+00> : vector<16x98xf32>
    %12 = tpu.matmul %0, %11, %cst_12 {dimension_numbers = #tpu.dot_dimension_numbers<[1], [0], [0], [1], [0, 0, 1, 1], [], []>} : vector<16x288xbf16>, vector<288x98xbf16>, vector<16x98xf32> -> vector<16x98xf32>
    %13 = arith.maximumf %3, %6 : vector<16x98xf32>
    %14 = arith.maximumf %9, %12 : vector<16x98xf32>
    %15 = arith.maximumf %13, %14 : vector<16x98xf32>
    %c0_13 = arith.constant 0 : index
    %c0_14 = arith.constant 0 : index
    %16 = vector.load %arg3[%c0_13, %c0_14] : memref<16x1xf32, #tpu.memory_space<vmem>>, vector<16x1xf32>
    %17 = vector.broadcast %16 : vector<16x1xf32> to vector<16x98xf32>
    %18 = arith.addf %15, %17 : vector<16x98xf32>
    %cst_15 = arith.constant 0.000000e+00 : f32
    %19 = vector.broadcast %cst_15 : f32 to vector<16x98xf32>
    %20 = arith.maximumf %18, %19 : vector<16x98xf32>
    %c0_16 = arith.constant 0 : index
    %c0_17 = arith.constant 0 : index
    %21 = vector.load %arg4[%c0_16, %c0_17] : memref<16x98xf32, #tpu.memory_space<vmem>>, vector<16x98xf32>
    tpu.vector_store %arg4[%c0_16, %c0_17], %20 {strides = array<i32>} : memref<16x98xf32, #tpu.memory_space<vmem>>, vector<16x98xf32>,
    return
  }
  func.func @transform_0(%arg0: i32) -> (i32, i32) {
    %c0_i32 = arith.constant 0 : i32
    %c0_i32_0 = arith.constant 0 : i32
    %c0_i32_1 = arith.constant 0 : i32
    return %c0_i32, %c0_i32_0 : i32, i32
  }
  func.func @transform_1(%arg0: i32) -> (i32, i32, i32) {
    %c0_i32 = arith.constant 0 : i32
    %c0_i32_0 = arith.constant 0 : i32
    %c0_i32_1 = arith.constant 0 : i32
    %c0_i32_2 = arith.constant 0 : i32
    return %c0_i32, %c0_i32_0, %c0_i32_1 : i32, i32, i32
  }
  func.func @transform_2(%arg0: i32) -> (i32, i32) {
    %c0_i32 = arith.constant 0 : i32
    %c0_i32_0 = arith.constant 0 : i32
    %c0_i32_1 = arith.constant 0 : i32
    return %c0_i32, %c0_i32_0 : i32, i32
  }
  func.func @transform_3(%arg0: i32) -> (i32, i32) {
    %c0_i32 = arith.constant 0 : i32
    %c0_i32_0 = arith.constant 0 : i32
    %c0_i32_1 = arith.constant 0 : i32
    return %c0_i32, %c0_i32_0 : i32, i32
  }
}

module attributes {stable_mosaic.version = 11 : i64} {
  func.func @_conv_pool_kernel(%arg0: i32, %arg1: memref<8x144xbf16, #tpu.memory_space<vmem>>, %arg2: memref<4x144x18xbf16, #tpu.memory_space<vmem>>, %arg3: memref<8x1xf32, #tpu.memory_space<vmem>>, %arg4: memref<8x18xf32, #tpu.memory_space<vmem>>) attributes {dimension_semantics = [#tpu.dimension_semantics<arbitrary>], iteration_bounds = array<i64: 1>, scalar_prefetch = 0 : i64, scratch_operands = 0 : i64, tpu.core_type = #tpu.core_type<tc>, window_params = [{pipeline_mode = #tpu.pipeline_mode<synchronous>, transform_indices = @transform_0, window_bounds = array<i64: 8, 144>}, {pipeline_mode = #tpu.pipeline_mode<synchronous>, transform_indices = @transform_1, window_bounds = array<i64: 4, 144, 18>}, {pipeline_mode = #tpu.pipeline_mode<synchronous>, transform_indices = @transform_2, window_bounds = array<i64: 8, 1>}, {pipeline_mode = #tpu.pipeline_mode<synchronous>, transform_indices = @transform_3, window_bounds = array<i64: 8, 18>}]} {
    %c0 = arith.constant 0 : index
    %c0_0 = arith.constant 0 : index
    %0 = vector.load %arg1[%c0, %c0_0] : memref<8x144xbf16, #tpu.memory_space<vmem>>, vector<8x144xbf16>
    %c0_1 = arith.constant 0 : index
    %c0_2 = arith.constant 0 : index
    %c0_3 = arith.constant 0 : index
    %1 = vector.load %arg2[%c0_1, %c0_2, %c0_3] : memref<4x144x18xbf16, #tpu.memory_space<vmem>>, vector<1x144x18xbf16>
    %2 = vector.shape_cast %1 : vector<1x144x18xbf16> to vector<144x18xbf16>
    %cst = arith.constant dense<0.000000e+00> : vector<8x18xf32>
    %3 = tpu.matmul %0, %2, %cst {dimension_numbers = #tpu.dot_dimension_numbers<[1], [0], [0], [1], [0, 0, 1, 1], [], []>} : vector<8x144xbf16>, vector<144x18xbf16>, vector<8x18xf32> -> vector<8x18xf32>
    %c1 = arith.constant 1 : index
    %c0_4 = arith.constant 0 : index
    %c0_5 = arith.constant 0 : index
    %4 = vector.load %arg2[%c1, %c0_4, %c0_5] : memref<4x144x18xbf16, #tpu.memory_space<vmem>>, vector<1x144x18xbf16>
    %5 = vector.shape_cast %4 : vector<1x144x18xbf16> to vector<144x18xbf16>
    %cst_6 = arith.constant dense<0.000000e+00> : vector<8x18xf32>
    %6 = tpu.matmul %0, %5, %cst_6 {dimension_numbers = #tpu.dot_dimension_numbers<[1], [0], [0], [1], [0, 0, 1, 1], [], []>} : vector<8x144xbf16>, vector<144x18xbf16>, vector<8x18xf32> -> vector<8x18xf32>
    %c2 = arith.constant 2 : index
    %c0_7 = arith.constant 0 : index
    %c0_8 = arith.constant 0 : index
    %7 = vector.load %arg2[%c2, %c0_7, %c0_8] : memref<4x144x18xbf16, #tpu.memory_space<vmem>>, vector<1x144x18xbf16>
    %8 = vector.shape_cast %7 : vector<1x144x18xbf16> to vector<144x18xbf16>
    %cst_9 = arith.constant dense<0.000000e+00> : vector<8x18xf32>
    %9 = tpu.matmul %0, %8, %cst_9 {dimension_numbers = #tpu.dot_dimension_numbers<[1], [0], [0], [1], [0, 0, 1, 1], [], []>} : vector<8x144xbf16>, vector<144x18xbf16>, vector<8x18xf32> -> vector<8x18xf32>
    %c3 = arith.constant 3 : index
    %c0_10 = arith.constant 0 : index
    %c0_11 = arith.constant 0 : index
    %10 = vector.load %arg2[%c3, %c0_10, %c0_11] : memref<4x144x18xbf16, #tpu.memory_space<vmem>>, vector<1x144x18xbf16>
    %11 = vector.shape_cast %10 : vector<1x144x18xbf16> to vector<144x18xbf16>
    %cst_12 = arith.constant dense<0.000000e+00> : vector<8x18xf32>
    %12 = tpu.matmul %0, %11, %cst_12 {dimension_numbers = #tpu.dot_dimension_numbers<[1], [0], [0], [1], [0, 0, 1, 1], [], []>} : vector<8x144xbf16>, vector<144x18xbf16>, vector<8x18xf32> -> vector<8x18xf32>
    %13 = arith.maximumf %3, %6 : vector<8x18xf32>
    %14 = arith.maximumf %9, %12 : vector<8x18xf32>
    %15 = arith.maximumf %13, %14 : vector<8x18xf32>
    %c0_13 = arith.constant 0 : index
    %c0_14 = arith.constant 0 : index
    %16 = vector.load %arg3[%c0_13, %c0_14] : memref<8x1xf32, #tpu.memory_space<vmem>>, vector<8x1xf32>
    %17 = vector.broadcast %16 : vector<8x1xf32> to vector<8x18xf32>
    %18 = arith.addf %15, %17 : vector<8x18xf32>
    %cst_15 = arith.constant 0.000000e+00 : f32
    %19 = vector.broadcast %cst_15 : f32 to vector<8x18xf32>
    %20 = arith.maximumf %18, %19 : vector<8x18xf32>
    %c0_16 = arith.constant 0 : index
    %c0_17 = arith.constant 0 : index
    %21 = vector.load %arg4[%c0_16, %c0_17] : memref<8x18xf32, #tpu.memory_space<vmem>>, vector<8x18xf32>
    tpu.vector_store %arg4[%c0_16, %c0_17], %20 {strides = array<i32>} : memref<8x18xf32, #tpu.memory_space<vmem>>, vector<8x18xf32>,
    return
  }
  func.func @transform_0(%arg0: i32) -> (i32, i32) {
    %c0_i32 = arith.constant 0 : i32
    %c0_i32_0 = arith.constant 0 : i32
    %c0_i32_1 = arith.constant 0 : i32
    return %c0_i32, %c0_i32_0 : i32, i32
  }
  func.func @transform_1(%arg0: i32) -> (i32, i32, i32) {
    %c0_i32 = arith.constant 0 : i32
    %c0_i32_0 = arith.constant 0 : i32
    %c0_i32_1 = arith.constant 0 : i32
    %c0_i32_2 = arith.constant 0 : i32
    return %c0_i32, %c0_i32_0, %c0_i32_1 : i32, i32, i32
  }
  func.func @transform_2(%arg0: i32) -> (i32, i32) {
    %c0_i32 = arith.constant 0 : i32
    %c0_i32_0 = arith.constant 0 : i32
    %c0_i32_1 = arith.constant 0 : i32
    return %c0_i32, %c0_i32_0 : i32, i32
  }
  func.func @transform_3(%arg0: i32) -> (i32, i32) {
    %c0_i32 = arith.constant 0 : i32
    %c0_i32_0 = arith.constant 0 : i32
    %c0_i32_1 = arith.constant 0 : i32
    return %c0_i32, %c0_i32_0 : i32, i32
  }
}

module attributes {stable_mosaic.version = 11 : i64} {
  func.func @_conv_kernel(%arg0: i32, %arg1: memref<72x8xbf16, #tpu.memory_space<vmem>>, %arg2: memref<8x18xbf16, #tpu.memory_space<vmem>>, %arg3: memref<72x1xf32, #tpu.memory_space<vmem>>, %arg4: memref<72x18xf32, #tpu.memory_space<vmem>>) attributes {dimension_semantics = [#tpu.dimension_semantics<arbitrary>], iteration_bounds = array<i64: 1>, scalar_prefetch = 0 : i64, scratch_operands = 0 : i64, tpu.core_type = #tpu.core_type<tc>, window_params = [{pipeline_mode = #tpu.pipeline_mode<synchronous>, transform_indices = @transform_0, window_bounds = array<i64: 72, 8>}, {pipeline_mode = #tpu.pipeline_mode<synchronous>, transform_indices = @transform_1, window_bounds = array<i64: 8, 18>}, {pipeline_mode = #tpu.pipeline_mode<synchronous>, transform_indices = @transform_2, window_bounds = array<i64: 72, 1>}, {pipeline_mode = #tpu.pipeline_mode<synchronous>, transform_indices = @transform_3, window_bounds = array<i64: 72, 18>}]} {
    %c0 = arith.constant 0 : index
    %c0_0 = arith.constant 0 : index
    %0 = vector.load %arg1[%c0, %c0_0] : memref<72x8xbf16, #tpu.memory_space<vmem>>, vector<72x8xbf16>
    %c0_1 = arith.constant 0 : index
    %c0_2 = arith.constant 0 : index
    %1 = vector.load %arg2[%c0_1, %c0_2] : memref<8x18xbf16, #tpu.memory_space<vmem>>, vector<8x18xbf16>
    %cst = arith.constant dense<0.000000e+00> : vector<72x18xf32>
    %2 = tpu.matmul %0, %1, %cst {dimension_numbers = #tpu.dot_dimension_numbers<[1], [0], [0], [1], [0, 0, 1, 1], [], []>} : vector<72x8xbf16>, vector<8x18xbf16>, vector<72x18xf32> -> vector<72x18xf32>
    %c0_3 = arith.constant 0 : index
    %c0_4 = arith.constant 0 : index
    %3 = vector.load %arg3[%c0_3, %c0_4] : memref<72x1xf32, #tpu.memory_space<vmem>>, vector<72x1xf32>
    %4 = vector.broadcast %3 : vector<72x1xf32> to vector<72x18xf32>
    %5 = arith.addf %2, %4 : vector<72x18xf32>
    %c0_5 = arith.constant 0 : index
    %c0_6 = arith.constant 0 : index
    %6 = vector.load %arg4[%c0_5, %c0_6] : memref<72x18xf32, #tpu.memory_space<vmem>>, vector<72x18xf32>
    tpu.vector_store %arg4[%c0_5, %c0_6], %5 {strides = array<i32>} : memref<72x18xf32, #tpu.memory_space<vmem>>, vector<72x18xf32>,
    return
  }
  func.func @transform_0(%arg0: i32) -> (i32, i32) {
    %c0_i32 = arith.constant 0 : i32
    %c0_i32_0 = arith.constant 0 : i32
    %c0_i32_1 = arith.constant 0 : i32
    return %c0_i32, %c0_i32_0 : i32, i32
  }
  func.func @transform_1(%arg0: i32) -> (i32, i32) {
    %c0_i32 = arith.constant 0 : i32
    %c0_i32_0 = arith.constant 0 : i32
    %c0_i32_1 = arith.constant 0 : i32
    return %c0_i32, %c0_i32_0 : i32, i32
  }
  func.func @transform_2(%arg0: i32) -> (i32, i32) {
    %c0_i32 = arith.constant 0 : i32
    %c0_i32_0 = arith.constant 0 : i32
    %c0_i32_1 = arith.constant 0 : i32
    return %c0_i32, %c0_i32_0 : i32, i32
  }
  func.func @transform_3(%arg0: i32) -> (i32, i32) {
    %c0_i32 = arith.constant 0 : i32
    %c0_i32_0 = arith.constant 0 : i32
    %c0_i32_1 = arith.constant 0 : i32
    return %c0_i32, %c0_i32_0 : i32, i32
  }
}

module attributes {stable_mosaic.version = 11 : i64} {
  func.func @_conv_kernel(%arg0: i32, %arg1: memref<64x8xbf16, #tpu.memory_space<vmem>>, %arg2: memref<8x98xbf16, #tpu.memory_space<vmem>>, %arg3: memref<64x1xf32, #tpu.memory_space<vmem>>, %arg4: memref<64x98xf32, #tpu.memory_space<vmem>>) attributes {dimension_semantics = [#tpu.dimension_semantics<arbitrary>], iteration_bounds = array<i64: 1>, scalar_prefetch = 0 : i64, scratch_operands = 0 : i64, tpu.core_type = #tpu.core_type<tc>, window_params = [{pipeline_mode = #tpu.pipeline_mode<synchronous>, transform_indices = @transform_0, window_bounds = array<i64: 64, 8>}, {pipeline_mode = #tpu.pipeline_mode<synchronous>, transform_indices = @transform_1, window_bounds = array<i64: 8, 98>}, {pipeline_mode = #tpu.pipeline_mode<synchronous>, transform_indices = @transform_2, window_bounds = array<i64: 64, 1>}, {pipeline_mode = #tpu.pipeline_mode<synchronous>, transform_indices = @transform_3, window_bounds = array<i64: 64, 98>}]} {
    %c0 = arith.constant 0 : index
    %c0_0 = arith.constant 0 : index
    %0 = vector.load %arg1[%c0, %c0_0] : memref<64x8xbf16, #tpu.memory_space<vmem>>, vector<64x8xbf16>
    %c0_1 = arith.constant 0 : index
    %c0_2 = arith.constant 0 : index
    %1 = vector.load %arg2[%c0_1, %c0_2] : memref<8x98xbf16, #tpu.memory_space<vmem>>, vector<8x98xbf16>
    %cst = arith.constant dense<0.000000e+00> : vector<64x98xf32>
    %2 = tpu.matmul %0, %1, %cst {dimension_numbers = #tpu.dot_dimension_numbers<[1], [0], [0], [1], [0, 0, 1, 1], [], []>} : vector<64x8xbf16>, vector<8x98xbf16>, vector<64x98xf32> -> vector<64x98xf32>
    %c0_3 = arith.constant 0 : index
    %c0_4 = arith.constant 0 : index
    %3 = vector.load %arg3[%c0_3, %c0_4] : memref<64x1xf32, #tpu.memory_space<vmem>>, vector<64x1xf32>
    %4 = vector.broadcast %3 : vector<64x1xf32> to vector<64x98xf32>
    %5 = arith.addf %2, %4 : vector<64x98xf32>
    %cst_5 = arith.constant 0.000000e+00 : f32
    %6 = vector.broadcast %cst_5 : f32 to vector<64x98xf32>
    %7 = arith.maximumf %5, %6 : vector<64x98xf32>
    %c0_6 = arith.constant 0 : index
    %c0_7 = arith.constant 0 : index
    %8 = vector.load %arg4[%c0_6, %c0_7] : memref<64x98xf32, #tpu.memory_space<vmem>>, vector<64x98xf32>
    tpu.vector_store %arg4[%c0_6, %c0_7], %7 {strides = array<i32>} : memref<64x98xf32, #tpu.memory_space<vmem>>, vector<64x98xf32>,
    return
  }
  func.func @transform_0(%arg0: i32) -> (i32, i32) {
    %c0_i32 = arith.constant 0 : i32
    %c0_i32_0 = arith.constant 0 : i32
    %c0_i32_1 = arith.constant 0 : i32
    return %c0_i32, %c0_i32_0 : i32, i32
  }
  func.func @transform_1(%arg0: i32) -> (i32, i32) {
    %c0_i32 = arith.constant 0 : i32
    %c0_i32_0 = arith.constant 0 : i32
    %c0_i32_1 = arith.constant 0 : i32
    return %c0_i32, %c0_i32_0 : i32, i32
  }
  func.func @transform_2(%arg0: i32) -> (i32, i32) {
    %c0_i32 = arith.constant 0 : i32
    %c0_i32_0 = arith.constant 0 : i32
    %c0_i32_1 = arith.constant 0 : i32
    return %c0_i32, %c0_i32_0 : i32, i32
  }
  func.func @transform_3(%arg0: i32) -> (i32, i32) {
    %c0_i32 = arith.constant 0 : i32
    %c0_i32_0 = arith.constant 0 : i32
    %c0_i32_1 = arith.constant 0 : i32
    return %c0_i32, %c0_i32_0 : i32, i32
  }
}

module attributes {stable_mosaic.version = 11 : i64} {
  func.func @_conv_kernel(%arg0: i32, %arg1: memref<128x16xbf16, #tpu.memory_space<vmem>>, %arg2: memref<16x392xbf16, #tpu.memory_space<vmem>>, %arg3: memref<128x1xf32, #tpu.memory_space<vmem>>, %arg4: memref<128x392xf32, #tpu.memory_space<vmem>>) attributes {dimension_semantics = [#tpu.dimension_semantics<arbitrary>], iteration_bounds = array<i64: 1>, scalar_prefetch = 0 : i64, scratch_operands = 0 : i64, tpu.core_type = #tpu.core_type<tc>, window_params = [{pipeline_mode = #tpu.pipeline_mode<synchronous>, transform_indices = @transform_0, window_bounds = array<i64: 128, 16>}, {pipeline_mode = #tpu.pipeline_mode<synchronous>, transform_indices = @transform_1, window_bounds = array<i64: 16, 392>}, {pipeline_mode = #tpu.pipeline_mode<synchronous>, transform_indices = @transform_2, window_bounds = array<i64: 128, 1>}, {pipeline_mode = #tpu.pipeline_mode<synchronous>, transform_indices = @transform_3, window_bounds = array<i64: 128, 392>}]} {
    %c0 = arith.constant 0 : index
    %c0_0 = arith.constant 0 : index
    %0 = vector.load %arg1[%c0, %c0_0] : memref<128x16xbf16, #tpu.memory_space<vmem>>, vector<128x16xbf16>
    %c0_1 = arith.constant 0 : index
    %c0_2 = arith.constant 0 : index
    %1 = vector.load %arg2[%c0_1, %c0_2] : memref<16x392xbf16, #tpu.memory_space<vmem>>, vector<16x392xbf16>
    %cst = arith.constant dense<0.000000e+00> : vector<128x392xf32>
    %2 = tpu.matmul %0, %1, %cst {dimension_numbers = #tpu.dot_dimension_numbers<[1], [0], [0], [1], [0, 0, 1, 1], [], []>} : vector<128x16xbf16>, vector<16x392xbf16>, vector<128x392xf32> -> vector<128x392xf32>
    %c0_3 = arith.constant 0 : index
    %c0_4 = arith.constant 0 : index
    %3 = vector.load %arg3[%c0_3, %c0_4] : memref<128x1xf32, #tpu.memory_space<vmem>>, vector<128x1xf32>
    %4 = vector.broadcast %3 : vector<128x1xf32> to vector<128x392xf32>
    %5 = arith.addf %2, %4 : vector<128x392xf32>
    %cst_5 = arith.constant 0.000000e+00 : f32
    %6 = vector.broadcast %cst_5 : f32 to vector<128x392xf32>
    %7 = arith.maximumf %5, %6 : vector<128x392xf32>
    %c0_6 = arith.constant 0 : index
    %c0_7 = arith.constant 0 : index
    %8 = vector.load %arg4[%c0_6, %c0_7] : memref<128x392xf32, #tpu.memory_space<vmem>>, vector<128x392xf32>
    tpu.vector_store %arg4[%c0_6, %c0_7], %7 {strides = array<i32>} : memref<128x392xf32, #tpu.memory_space<vmem>>, vector<128x392xf32>,
    return
  }
  func.func @transform_0(%arg0: i32) -> (i32, i32) {
    %c0_i32 = arith.constant 0 : i32
    %c0_i32_0 = arith.constant 0 : i32
    %c0_i32_1 = arith.constant 0 : i32
    return %c0_i32, %c0_i32_0 : i32, i32
  }
  func.func @transform_1(%arg0: i32) -> (i32, i32) {
    %c0_i32 = arith.constant 0 : i32
    %c0_i32_0 = arith.constant 0 : i32
    %c0_i32_1 = arith.constant 0 : i32
    return %c0_i32, %c0_i32_0 : i32, i32
  }
  func.func @transform_2(%arg0: i32) -> (i32, i32) {
    %c0_i32 = arith.constant 0 : i32
    %c0_i32_0 = arith.constant 0 : i32
    %c0_i32_1 = arith.constant 0 : i32
    return %c0_i32, %c0_i32_0 : i32, i32
  }
  func.func @transform_3(%arg0: i32) -> (i32, i32) {
    %c0_i32 = arith.constant 0 : i32
    %c0_i32_0 = arith.constant 0 : i32
    %c0_i32_1 = arith.constant 0 : i32
    return %c0_i32, %c0_i32_0 : i32, i32
  }
}

module attributes {stable_mosaic.version = 11 : i64} {
  func.func @_conv_kernel(%arg0: i32, %arg1: memref<1x288xbf16, #tpu.memory_space<vmem>>, %arg2: memref<288x1568xbf16, #tpu.memory_space<vmem>>, %arg3: memref<1x1xf32, #tpu.memory_space<vmem>>, %arg4: memref<1x1568xf32, #tpu.memory_space<vmem>>) attributes {dimension_semantics = [#tpu.dimension_semantics<arbitrary>], iteration_bounds = array<i64: 1>, scalar_prefetch = 0 : i64, scratch_operands = 0 : i64, tpu.core_type = #tpu.core_type<tc>, window_params = [{pipeline_mode = #tpu.pipeline_mode<synchronous>, transform_indices = @transform_0, window_bounds = array<i64: 1, 288>}, {pipeline_mode = #tpu.pipeline_mode<synchronous>, transform_indices = @transform_1, window_bounds = array<i64: 288, 1568>}, {pipeline_mode = #tpu.pipeline_mode<synchronous>, transform_indices = @transform_2, window_bounds = array<i64: 1, 1>}, {pipeline_mode = #tpu.pipeline_mode<synchronous>, transform_indices = @transform_3, window_bounds = array<i64: 1, 1568>}]} {
    %c0 = arith.constant 0 : index
    %c0_0 = arith.constant 0 : index
    %0 = vector.load %arg1[%c0, %c0_0] : memref<1x288xbf16, #tpu.memory_space<vmem>>, vector<1x288xbf16>
    %c0_1 = arith.constant 0 : index
    %c0_2 = arith.constant 0 : index
    %1 = vector.load %arg2[%c0_1, %c0_2] : memref<288x1568xbf16, #tpu.memory_space<vmem>>, vector<288x1568xbf16>
    %cst = arith.constant dense<0.000000e+00> : vector<1x1568xf32>
    %2 = tpu.matmul %0, %1, %cst {dimension_numbers = #tpu.dot_dimension_numbers<[1], [0], [0], [1], [0, 0, 1, 1], [], []>} : vector<1x288xbf16>, vector<288x1568xbf16>, vector<1x1568xf32> -> vector<1x1568xf32>
    %c0_3 = arith.constant 0 : index
    %c0_4 = arith.constant 0 : index
    %3 = vector.load %arg3[%c0_3, %c0_4] : memref<1x1xf32, #tpu.memory_space<vmem>>, vector<1x1xf32>
    %4 = vector.broadcast %3 : vector<1x1xf32> to vector<1x1568xf32>
    %5 = arith.addf %2, %4 : vector<1x1568xf32>
    %6 = arith.negf %5 : vector<1x1568xf32>
    %7 = math.exp %6 : vector<1x1568xf32>
    %cst_5 = arith.constant 1.000000e+00 : f32
    %8 = vector.broadcast %cst_5 : f32 to vector<1x1568xf32>
    %9 = arith.addf %8, %7 : vector<1x1568xf32>
    %10 = arith.divf %8, %9 : vector<1x1568xf32>
    %c0_6 = arith.constant 0 : index
    %c0_7 = arith.constant 0 : index
    %11 = vector.load %arg4[%c0_6, %c0_7] : memref<1x1568xf32, #tpu.memory_space<vmem>>, vector<1x1568xf32>
    tpu.vector_store %arg4[%c0_6, %c0_7], %10 {strides = array<i32>} : memref<1x1568xf32, #tpu.memory_space<vmem>>, vector<1x1568xf32>,
    return
  }
  func.func @transform_0(%arg0: i32) -> (i32, i32) {
    %c0_i32 = arith.constant 0 : i32
    %c0_i32_0 = arith.constant 0 : i32
    %c0_i32_1 = arith.constant 0 : i32
    return %c0_i32, %c0_i32_0 : i32, i32
  }
  func.func @transform_1(%arg0: i32) -> (i32, i32) {
    %c0_i32 = arith.constant 0 : i32
    %c0_i32_0 = arith.constant 0 : i32
    %c0_i32_1 = arith.constant 0 : i32
    return %c0_i32, %c0_i32_0 : i32, i32
  }
  func.func @transform_2(%arg0: i32) -> (i32, i32) {
    %c0_i32 = arith.constant 0 : i32
    %c0_i32_0 = arith.constant 0 : i32
    %c0_i32_1 = arith.constant 0 : i32
    return %c0_i32, %c0_i32_0 : i32, i32
  }
  func.func @transform_3(%arg0: i32) -> (i32, i32) {
    %c0_i32 = arith.constant 0 : i32
    %c0_i32_0 = arith.constant 0 : i32
    %c0_i32_1 = arith.constant 0 : i32
    return %c0_i32, %c0_i32_0 : i32, i32
  }
}

</mosaic_0001>

<llo_original>
// kernel: tile.13
$region0: #{tile.13}
  #allocation0 [shape = 's32[1]{0}', space=sflag, size = 0x4, scoped, tag = 'scoped memory for tile.13']
  %s0 = inlined_call_operand.vmem [shape: f32[16], index: 0, kind: input, shape index: {}]
  %s1 = inlined_call_operand.vmem [shape: f32[4,16], index: 1, kind: output, shape index: {}]
  // Predicated region
  $region2: #{tile.13} parent=0 // pred_check
    _
  $region3: #{tile.13} parent=0 // pred_check_branch
    %3 = sbr.rel (0) target = $region5
  $region4: #{tile.13} parent=0 // pred_region
    _
  $region5: #{tile.13} parent=0 // pred_fallthru
    _
  %v4 = vld [vmem:[%s0] ss:$0 sm:$0xff]
  %5 = vst [vmem:[%s1] sm:$0xf] %v4

// kernel: tile.18
$region0: #{tile.18}
  #allocation0 [shape = 's32[1]{0}', space=sflag, size = 0x4, scoped, tag = 'scoped memory for tile.18']
  %s0 = inlined_call_operand.vmem [shape: f32[32], index: 0, kind: input, shape index: {}]
  %s1 = inlined_call_operand.vmem [shape: f32[4,32], index: 1, kind: output, shape index: {}]
  // Predicated region
  $region2: #{tile.18} parent=0 // pred_check
    _
  $region3: #{tile.18} parent=0 // pred_check_branch
    %3 = sbr.rel (0) target = $region5
  $region4: #{tile.18} parent=0 // pred_region
    _
  $region5: #{tile.18} parent=0 // pred_fallthru
    _
  %v4 = vld [vmem:[%s0] ss:$0 sm:$0xff]
  %5 = vst [vmem:[%s1] sm:$0xf] %v4

// kernel: tile.0
$region0: #{tile.0}
  %s0 = inlined_call_operand.vmem [shape: f32[4,16], index: 0, kind: input, shape index: {}]
  %s1 = inlined_call_operand.vmem [shape: f32[64,1], index: 1, kind: output, shape index: {}]
  $region1: #{tile.0} parent=0
    #allocation0 [shape = 'u8[4096]{0}', space=vmem, size = 0x1000, scoped, tag = 'scoped mem for input reshape']
    %s3 = sshllo.u32 0, 4
    %v4 = vld [vmem:[%s0] sm:%s3]
    %5 = vst [vmem:[#allocation0] sm:%s3] %v4
    %v6 = vld [vmem:[#allocation0] sm:$0xf]
    %vm7 = vcmask 7168
    %8 = vst.msk [vmem:[%s1] ss:$16 sm:$0x3] %vm7, %v6
    %9 = vst.msk [vmem:[%s1] ss:$16 sm:$0xc] %vm7, %v6
    %v10 = vld [vmem:[#allocation0] sm:$0xf]
    %11 = vrot.lane.b32.xlu0 %v10, 127
    %v12 = vpop.permute.xlu0 %11
    %vm13 = vcmask 7168
    %s14 = scalar_lea.vmem %s1, 1
    %15 = vst.msk [vmem:[%s14] ss:$16 sm:$0x3] %vm13, %v12
    %s16 = scalar_lea.vmem %s1, 1
    %17 = vst.msk [vmem:[%s16] ss:$16 sm:$0xc] %vm13, %v12
    %v18 = vld [vmem:[#allocation0] sm:$0xf]
    %19 = vrot.lane.b32.xlu0 %v18, 126
    %v20 = vpop.permute.xlu0 %19
    %vm21 = vcmask 7168
    %s22 = scalar_lea.vmem %s1, 2
    %23 = vst.msk [vmem:[%s22] ss:$16 sm:$0x3] %vm21, %v20
    %s24 = scalar_lea.vmem %s1, 2
    %25 = vst.msk [vmem:[%s24] ss:$16 sm:$0xc] %vm21, %v20
    %v26 = vld [vmem:[#allocation0] sm:$0xf]
    %27 = vrot.lane.b32.xlu0 %v26, 125
    %v28 = vpop.permute.xlu0 %27
    %vm29 = vcmask 7168
    %s30 = scalar_lea.vmem %s1, 3
    %31 = vst.msk [vmem:[%s30] ss:$16 sm:$0x3] %vm29, %v28
    %s32 = scalar_lea.vmem %s1, 3
    %33 = vst.msk [vmem:[%s32] ss:$16 sm:$0xc] %vm29, %v28
    %v34 = vld [vmem:[#allocation0] sm:$0xf]
    %35 = vrot.lane.b32.xlu0 %v34, 124
    %v36 = vpop.permute.xlu0 %35
    %vm37 = vcmask 7168
    %s38 = scalar_lea.vmem %s1, 4
    %39 = vst.msk [vmem:[%s38] ss:$16 sm:$0x3] %vm37, %v36
    %s40 = scalar_lea.vmem %s1, 4
    %41 = vst.msk [vmem:[%s40] ss:$16 sm:$0xc] %vm37, %v36
    %v42 = vld [vmem:[#allocation0] sm:$0xf]
    %43 = vrot.lane.b32.xlu0 %v42, 123
    %v44 = vpop.permute.xlu0 %43
    %vm45 = vcmask 7168
    %s46 = scalar_lea.vmem %s1, 5
    %47 = vst.msk [vmem:[%s46] ss:$16 sm:$0x3] %vm45, %v44
    %s48 = scalar_lea.vmem %s1, 5
    %49 = vst.msk [vmem:[%s48] ss:$16 sm:$0xc] %vm45, %v44
    %v50 = vld [vmem:[#allocation0] sm:$0xf]
    %51 = vrot.lane.b32.xlu0 %v50, 122
    %v52 = vpop.permute.xlu0 %51
    %vm53 = vcmask 7168
    %s54 = scalar_lea.vmem %s1, 6
    %55 = vst.msk [vmem:[%s54] ss:$16 sm:$0x3] %vm53, %v52
    %s56 = scalar_lea.vmem %s1, 6
    %57 = vst.msk [vmem:[%s56] ss:$16 sm:$0xc] %vm53, %v52
    %v58 = vld [vmem:[#allocation0] sm:$0xf]
    %59 = vrot.lane.b32.xlu0 %v58, 121
    %v60 = vpop.permute.xlu0 %59
    %vm61 = vcmask 7168
    %s62 = scalar_lea.vmem %s1, 7
    %63 = vst.msk [vmem:[%s62] ss:$16 sm:$0x3] %vm61, %v60
    %s64 = scalar_lea.vmem %s1, 7
    %65 = vst.msk [vmem:[%s64] ss:$16 sm:$0xc] %vm61, %v60
    %v66 = vld [vmem:[#allocation0] sm:$0xf]
    %67 = vrot.lane.b32.xlu0 %v66, 120
    %v68 = vpop.permute.xlu0 %67
    %vm69 = vcmask 7168
    %s70 = scalar_lea.vmem %s1, 8
    %71 = vst.msk [vmem:[%s70] ss:$16 sm:$0x3] %vm69, %v68
    %s72 = scalar_lea.vmem %s1, 8
    %73 = vst.msk [vmem:[%s72] ss:$16 sm:$0xc] %vm69, %v68
    %v74 = vld [vmem:[#allocation0] sm:$0xf]
    %75 = vrot.lane.b32.xlu0 %v74, 119
    %v76 = vpop.permute.xlu0 %75
    %vm77 = vcmask 7168
    %s78 = scalar_lea.vmem %s1, 9
    %79 = vst.msk [vmem:[%s78] ss:$16 sm:$0x3] %vm77, %v76
    %s80 = scalar_lea.vmem %s1, 9
    %81 = vst.msk [vmem:[%s80] ss:$16 sm:$0xc] %vm77, %v76
    %v82 = vld [vmem:[#allocation0] sm:$0xf]
    %83 = vrot.lane.b32.xlu0 %v82, 118
    %v84 = vpop.permute.xlu0 %83
    %vm85 = vcmask 7168
    %s86 = scalar_lea.vmem %s1, 10
    %87 = vst.msk [vmem:[%s86] ss:$16 sm:$0x3] %vm85, %v84
    %s88 = scalar_lea.vmem %s1, 10
    %89 = vst.msk [vmem:[%s88] ss:$16 sm:$0xc] %vm85, %v84
    %v90 = vld [vmem:[#allocation0] sm:$0xf]
    %91 = vrot.lane.b32.xlu0 %v90, 117
    %v92 = vpop.permute.xlu0 %91
    %vm93 = vcmask 7168
    %s94 = scalar_lea.vmem %s1, 11
    %95 = vst.msk [vmem:[%s94] ss:$16 sm:$0x3] %vm93, %v92
    %s96 = scalar_lea.vmem %s1, 11
    %97 = vst.msk [vmem:[%s96] ss:$16 sm:$0xc] %vm93, %v92
    %v98 = vld [vmem:[#allocation0] sm:$0xf]
    %99 = vrot.lane.b32.xlu0 %v98, 116
    %v100 = vpop.permute.xlu0 %99
    %vm101 = vcmask 7168
    %s102 = scalar_lea.vmem %s1, 12
    %103 = vst.msk [vmem:[%s102] ss:$16 sm:$0x3] %vm101, %v100
    %s104 = scalar_lea.vmem %s1, 12
    %105 = vst.msk [vmem:[%s104] ss:$16 sm:$0xc] %vm101, %v100
    %v106 = vld [vmem:[#allocation0] sm:$0xf]
    %107 = vrot.lane.b32.xlu0 %v106, 115
    %v108 = vpop.permute.xlu0 %107
    %vm109 = vcmask 7168
    %s110 = scalar_lea.vmem %s1, 13
    %111 = vst.msk [vmem:[%s110] ss:$16 sm:$0x3] %vm109, %v108
    %s112 = scalar_lea.vmem %s1, 13
    %113 = vst.msk [vmem:[%s112] ss:$16 sm:$0xc] %vm109, %v108
    %v114 = vld [vmem:[#allocation0] sm:$0xf]
    %115 = vrot.lane.b32.xlu0 %v114, 114
    %v116 = vpop.permute.xlu0 %115
    %vm117 = vcmask 7168
    %s118 = scalar_lea.vmem %s1, 14
    %119 = vst.msk [vmem:[%s118] ss:$16 sm:$0x3] %vm117, %v116
    %s120 = scalar_lea.vmem %s1, 14
    %121 = vst.msk [vmem:[%s120] ss:$16 sm:$0xc] %vm117, %v116
    %v122 = vld [vmem:[#allocation0] sm:$0xf]
    %123 = vrot.lane.b32.xlu0 %v122, 113
    %v124 = vpop.permute.xlu0 %123
    %vm125 = vcmask 7168
    %s126 = scalar_lea.vmem %s1, 15
    %127 = vst.msk [vmem:[%s126] ss:$16 sm:$0x3] %vm125, %v124
    %s128 = scalar_lea.vmem %s1, 15
    %129 = vst.msk [vmem:[%s128] ss:$16 sm:$0xc] %vm125, %v124

// kernel: tile.1
$region0: #{tile.1}
  %s0 = inlined_call_operand.vmem [shape: f32[4,32], index: 0, kind: input, shape index: {}]
  %s1 = inlined_call_operand.vmem [shape: f32[128,1], index: 1, kind: output, shape index: {}]
  $region1: #{tile.1} parent=0
    #allocation0 [shape = 'u8[4096]{0}', space=vmem, size = 0x1000, scoped, tag = 'scoped mem for input reshape']
    %s3 = sshllo.u32 0, 4
    %v4 = vld [vmem:[%s0] sm:%s3]
    %5 = vst [vmem:[#allocation0] sm:%s3] %v4
    %v6 = vld [vmem:[#allocation0] sm:$0xf]
    %vm7 = vcmask 7168
    %8 = vst.msk [vmem:[%s1] sm:$0x1] %vm7, %v6
    %s9 = scalar_lea.vmem %s1, 31
    %10 = vst.msk [vmem:[%s9] sm:$0x2] %vm7, %v6
    %s11 = scalar_lea.vmem %s1, 62
    %12 = vst.msk [vmem:[%s11] sm:$0x4] %vm7, %v6
    %s13 = scalar_lea.vmem %s1, 93
    %14 = vst.msk [vmem:[%s13] sm:$0x8] %vm7, %v6
    %v15 = vld [vmem:[#allocation0] sm:$0xf]
    %16 = vrot.lane.b32.xlu0 %v15, 127
    %v17 = vpop.permute.xlu0 %16
    %vm18 = vcmask 7168
    %s19 = scalar_lea.vmem %s1, 1
    %20 = vst.msk [vmem:[%s19] sm:$0x1] %vm18, %v17
    %s21 = scalar_lea.vmem %s1, 32
    %22 = vst.msk [vmem:[%s21] sm:$0x2] %vm18, %v17
    %s23 = scalar_lea.vmem %s1, 63
    %24 = vst.msk [vmem:[%s23] sm:$0x4] %vm18, %v17
    %s25 = scalar_lea.vmem %s1, 94
    %26 = vst.msk [vmem:[%s25] sm:$0x8] %vm18, %v17
    %v27 = vld [vmem:[#allocation0] sm:$0xf]
    %28 = vrot.lane.b32.xlu0 %v27, 126
    %v29 = vpop.permute.xlu0 %28
    %vm30 = vcmask 7168
    %s31 = scalar_lea.vmem %s1, 2
    %32 = vst.msk [vmem:[%s31] sm:$0x1] %vm30, %v29
    %s33 = scalar_lea.vmem %s1, 33
    %34 = vst.msk [vmem:[%s33] sm:$0x2] %vm30, %v29
    %s35 = scalar_lea.vmem %s1, 64
    %36 = vst.msk [vmem:[%s35] sm:$0x4] %vm30, %v29
    %s37 = scalar_lea.vmem %s1, 95
    %38 = vst.msk [vmem:[%s37] sm:$0x8] %vm30, %v29
    %v39 = vld [vmem:[#allocation0] sm:$0xf]
    %40 = vrot.lane.b32.xlu0 %v39, 125
    %v41 = vpop.permute.xlu0 %40
    %vm42 = vcmask 7168
    %s43 = scalar_lea.vmem %s1, 3
    %44 = vst.msk [vmem:[%s43] sm:$0x1] %vm42, %v41
    %s45 = scalar_lea.vmem %s1, 34
    %46 = vst.msk [vmem:[%s45] sm:$0x2] %vm42, %v41
    %s47 = scalar_lea.vmem %s1, 65
    %48 = vst.msk [vmem:[%s47] sm:$0x4] %vm42, %v41
    %s49 = scalar_lea.vmem %s1, 96
    %50 = vst.msk [vmem:[%s49] sm:$0x8] %vm42, %v41
    %v51 = vld [vmem:[#allocation0] sm:$0xf]
    %52 = vrot.lane.b32.xlu0 %v51, 124
    %v53 = vpop.permute.xlu0 %52
    %vm54 = vcmask 7168
    %s55 = scalar_lea.vmem %s1, 4
    %56 = vst.msk [vmem:[%s55] sm:$0x1] %vm54, %v53
    %s57 = scalar_lea.vmem %s1, 35
    %58 = vst.msk [vmem:[%s57] sm:$0x2] %vm54, %v53
    %s59 = scalar_lea.vmem %s1, 66
    %60 = vst.msk [vmem:[%s59] sm:$0x4] %vm54, %v53
    %s61 = scalar_lea.vmem %s1, 97
    %62 = vst.msk [vmem:[%s61] sm:$0x8] %vm54, %v53
    %v63 = vld [vmem:[#allocation0] sm:$0xf]
    %64 = vrot.lane.b32.xlu0 %v63, 123
    %v65 = vpop.permute.xlu0 %64
    %vm66 = vcmask 7168
    %s67 = scalar_lea.vmem %s1, 5
    %68 = vst.msk [vmem:[%s67] sm:$0x1] %vm66, %v65
    %s69 = scalar_lea.vmem %s1, 36
    %70 = vst.msk [vmem:[%s69] sm:$0x2] %vm66, %v65
    %s71 = scalar_lea.vmem %s1, 67
    %72 = vst.msk [vmem:[%s71] sm:$0x4] %vm66, %v65
    %s73 = scalar_lea.vmem %s1, 98
    %74 = vst.msk [vmem:[%s73] sm:$0x8] %vm66, %v65
    %v75 = vld [vmem:[#allocation0] sm:$0xf]
    %76 = vrot.lane.b32.xlu0 %v75, 122
    %v77 = vpop.permute.xlu0 %76
    %vm78 = vcmask 7168
    %s79 = scalar_lea.vmem %s1, 6
    %80 = vst.msk [vmem:[%s79] sm:$0x1] %vm78, %v77
    %s81 = scalar_lea.vmem %s1, 37
    %82 = vst.msk [vmem:[%s81] sm:$0x2] %vm78, %v77
    %s83 = scalar_lea.vmem %s1, 68
    %84 = vst.msk [vmem:[%s83] sm:$0x4] %vm78, %v77
    %s85 = scalar_lea.vmem %s1, 99
    %86 = vst.msk [vmem:[%s85] sm:$0x8] %vm78, %v77
    %v87 = vld [vmem:[#allocation0] sm:$0xf]
    %88 = vrot.lane.b32.xlu0 %v87, 121
    %v89 = vpop.permute.xlu0 %88
    %vm90 = vcmask 7168
    %s91 = scalar_lea.vmem %s1, 7
    %92 = vst.msk [vmem:[%s91] sm:$0x1] %vm90, %v89
    %s93 = scalar_lea.vmem %s1, 38
    %94 = vst.msk [vmem:[%s93] sm:$0x2] %vm90, %v89
    %s95 = scalar_lea.vmem %s1, 69
    %96 = vst.msk [vmem:[%s95] sm:$0x4] %vm90, %v89
    %s97 = scalar_lea.vmem %s1, 100
    %98 = vst.msk [vmem:[%s97] sm:$0x8] %vm90, %v89
    %v99 = vld [vmem:[#allocation0] sm:$0xf]
    %100 = vrot.lane.b32.xlu0 %v99, 120
    %v101 = vpop.permute.xlu0 %100
    %vm102 = vcmask 7168
    %s103 = scalar_lea.vmem %s1, 8
    %104 = vst.msk [vmem:[%s103] sm:$0x1] %vm102, %v101
    %s105 = scalar_lea.vmem %s1, 39
    %106 = vst.msk [vmem:[%s105] sm:$0x2] %vm102, %v101
    %s107 = scalar_lea.vmem %s1, 70
    %108 = vst.msk [vmem:[%s107] sm:$0x4] %vm102, %v101
    %s109 = scalar_lea.vmem %s1, 101
    %110 = vst.msk [vmem:[%s109] sm:$0x8] %vm102, %v101
    %v111 = vld [vmem:[#allocation0] sm:$0xf]
    %112 = vrot.lane.b32.xlu0 %v111, 119
    %v113 = vpop.permute.xlu0 %112
    %vm114 = vcmask 7168
    %s115 = scalar_lea.vmem %s1, 9
    %116 = vst.msk [vmem:[%s115] sm:$0x1] %vm114, %v113
    %s117 = scalar_lea.vmem %s1, 40
    %118 = vst.msk [vmem:[%s117] sm:$0x2] %vm114, %v113
    %s119 = scalar_lea.vmem %s1, 71
    %120 = vst.msk [vmem:[%s119] sm:$0x4] %vm114, %v113
    %s121 = scalar_lea.vmem %s1, 102
    %122 = vst.msk [vmem:[%s121] sm:$0x8] %vm114, %v113
    %v123 = vld [vmem:[#allocation0] sm:$0xf]
    %124 = vrot.lane.b32.xlu0 %v123, 118
    %v125 = vpop.permute.xlu0 %124
    %vm126 = vcmask 7168
    %s127 = scalar_lea.vmem %s1, 10
    %128 = vst.msk [vmem:[%s127] sm:$0x1] %vm126, %v125
    %s129 = scalar_lea.vmem %s1, 41
    %130 = vst.msk [vmem:[%s129] sm:$0x2] %vm126, %v125
    %s131 = scalar_lea.vmem %s1, 72
    %132 = vst.msk [vmem:[%s131] sm:$0x4] %vm126, %v125
    %s133 = scalar_lea.vmem %s1, 103
    %134 = vst.msk [vmem:[%s133] sm:$0x8] %vm126, %v125
    %v135 = vld [vmem:[#allocation0] sm:$0xf]
    %136 = vrot.lane.b32.xlu0 %v135, 117
    %v137 = vpop.permute.xlu0 %136
    %vm138 = vcmask 7168
    %s139 = scalar_lea.vmem %s1, 11
    %140 = vst.msk [vmem:[%s139] sm:$0x1] %vm138, %v137
    %s141 = scalar_lea.vmem %s1, 42
    %142 = vst.msk [vmem:[%s141] sm:$0x2] %vm138, %v137
    %s143 = scalar_lea.vmem %s1, 73
    %144 = vst.msk [vmem:[%s143] sm:$0x4] %vm138, %v137
    %s145 = scalar_lea.vmem %s1, 104
    %146 = vst.msk [vmem:[%s145] sm:$0x8] %vm138, %v137
    %v147 = vld [vmem:[#allocation0] sm:$0xf]
    %148 = vrot.lane.b32.xlu0 %v147, 116
    %v149 = vpop.permute.xlu0 %148
    %vm150 = vcmask 7168
    %s151 = scalar_lea.vmem %s1, 12
    %152 = vst.msk [vmem:[%s151] sm:$0x1] %vm150, %v149
    %s153 = scalar_lea.vmem %s1, 43
    %154 = vst.msk [vmem:[%s153] sm:$0x2] %vm150, %v149
    %s155 = scalar_lea.vmem %s1, 74
    %156 = vst.msk [vmem:[%s155] sm:$0x4] %vm150, %v149
    %s157 = scalar_lea.vmem %s1, 105
    %158 = vst.msk [vmem:[%s157] sm:$0x8] %vm150, %v149
    %v159 = vld [vmem:[#allocation0] sm:$0xf]
    %160 = vrot.lane.b32.xlu0 %v159, 115
    %v161 = vpop.permute.xlu0 %160
    %vm162 = vcmask 7168
    %s163 = scalar_lea.vmem %s1, 13
    %164 = vst.msk [vmem:[%s163] sm:$0x1] %vm162, %v161
    %s165 = scalar_lea.vmem %s1, 44
    %166 = vst.msk [vmem:[%s165] sm:$0x2] %vm162, %v161
    %s167 = scalar_lea.vmem %s1, 75
    %168 = vst.msk [vmem:[%s167] sm:$0x4] %vm162, %v161
    %s169 = scalar_lea.vmem %s1, 106
    %170 = vst.msk [vmem:[%s169] sm:$0x8] %vm162, %v161
    %v171 = vld [vmem:[#allocation0] sm:$0xf]
    %172 = vrot.lane.b32.xlu0 %v171, 114
    %v173 = vpop.permute.xlu0 %172
    %vm174 = vcmask 7168
    %s175 = scalar_lea.vmem %s1, 14
    %176 = vst.msk [vmem:[%s175] sm:$0x1] %vm174, %v173
    %s177 = scalar_lea.vmem %s1, 45
    %178 = vst.msk [vmem:[%s177] sm:$0x2] %vm174, %v173
    %s179 = scalar_lea.vmem %s1, 76
    %180 = vst.msk [vmem:[%s179] sm:$0x4] %vm174, %v173
    %s181 = scalar_lea.vmem %s1, 107
    %182 = vst.msk [vmem:[%s181] sm:$0x8] %vm174, %v173
    %v183 = vld [vmem:[#allocation0] sm:$0xf]
    %184 = vrot.lane.b32.xlu0 %v183, 113
    %v185 = vpop.permute.xlu0 %184
    %vm186 = vcmask 7168
    %s187 = scalar_lea.vmem %s1, 15
    %188 = vst.msk [vmem:[%s187] sm:$0x1] %vm186, %v185
    %s189 = scalar_lea.vmem %s1, 46
    %190 = vst.msk [vmem:[%s189] sm:$0x2] %vm186, %v185
    %s191 = scalar_lea.vmem %s1, 77
    %192 = vst.msk [vmem:[%s191] sm:$0x4] %vm186, %v185
    %s193 = scalar_lea.vmem %s1, 108
    %194 = vst.msk [vmem:[%s193] sm:$0x8] %vm186, %v185
    %v195 = vld [vmem:[#allocation0] sm:$0xf]
    %196 = vrot.lane.b32.xlu0 %v195, 112
    %v197 = vpop.permute.xlu0 %196
    %vm198 = vcmask 7168
    %s199 = scalar_lea.vmem %s1, 16
    %200 = vst.msk [vmem:[%s199] sm:$0x1] %vm198, %v197
    %s201 = scalar_lea.vmem %s1, 47
    %202 = vst.msk [vmem:[%s201] sm:$0x2] %vm198, %v197
    %s203 = scalar_lea.vmem %s1, 78
    %204 = vst.msk [vmem:[%s203] sm:$0x4] %vm198, %v197
    %s205 = scalar_lea.vmem %s1, 109
    %206 = vst.msk [vmem:[%s205] sm:$0x8] %vm198, %v197
    %v207 = vld [vmem:[#allocation0] sm:$0xf]
    %208 = vrot.lane.b32.xlu0 %v207, 111
    %v209 = vpop.permute.xlu0 %208
    %vm210 = vcmask 7168
    %s211 = scalar_lea.vmem %s1, 17
    %212 = vst.msk [vmem:[%s211] sm:$0x1] %vm210, %v209
    %s213 = scalar_lea.vmem %s1, 48
    %214 = vst.msk [vmem:[%s213] sm:$0x2] %vm210, %v209
    %s215 = scalar_lea.vmem %s1, 79
    %216 = vst.msk [vmem:[%s215] sm:$0x4] %vm210, %v209
    %s217 = scalar_lea.vmem %s1, 110
    %218 = vst.msk [vmem:[%s217] sm:$0x8] %vm210, %v209
    %v219 = vld [vmem:[#allocation0] sm:$0xf]
    %220 = vrot.lane.b32.xlu0 %v219, 110
    %v221 = vpop.permute.xlu0 %220
    %vm222 = vcmask 7168
    %s223 = scalar_lea.vmem %s1, 18
    %224 = vst.msk [vmem:[%s223] sm:$0x1] %vm222, %v221
    %s225 = scalar_lea.vmem %s1, 49
    %226 = vst.msk [vmem:[%s225] sm:$0x2] %vm222, %v221
    %s227 = scalar_lea.vmem %s1, 80
    %228 = vst.msk [vmem:[%s227] sm:$0x4] %vm222, %v221
    %s229 = scalar_lea.vmem %s1, 111
    %230 = vst.msk [vmem:[%s229] sm:$0x8] %vm222, %v221
    %v231 = vld [vmem:[#allocation0] sm:$0xf]
    %232 = vrot.lane.b32.xlu0 %v231, 109
    %v233 = vpop.permute.xlu0 %232
    %vm234 = vcmask 7168
    %s235 = scalar_lea.vmem %s1, 19
    %236 = vst.msk [vmem:[%s235] sm:$0x1] %vm234, %v233
    %s237 = scalar_lea.vmem %s1, 50
    %238 = vst.msk [vmem:[%s237] sm:$0x2] %vm234, %v233
    %s239 = scalar_lea.vmem %s1, 81
    %240 = vst.msk [vmem:[%s239] sm:$0x4] %vm234, %v233
    %s241 = scalar_lea.vmem %s1, 112
    %242 = vst.msk [vmem:[%s241] sm:$0x8] %vm234, %v233
    %v243 = vld [vmem:[#allocation0] sm:$0xf]
    %244 = vrot.lane.b32.xlu0 %v243, 108
    %v245 = vpop.permute.xlu0 %244
    %vm246 = vcmask 7168
    %s247 = scalar_lea.vmem %s1, 20
    %248 = vst.msk [vmem:[%s247] sm:$0x1] %vm246, %v245
    %s249 = scalar_lea.vmem %s1, 51
    %250 = vst.msk [vmem:[%s249] sm:$0x2] %vm246, %v245
    %s251 = scalar_lea.vmem %s1, 82
    %252 = vst.msk [vmem:[%s251] sm:$0x4] %vm246, %v245
    %s253 = scalar_lea.vmem %s1, 113
    %254 = vst.msk [vmem:[%s253] sm:$0x8] %vm246, %v245
    %v255 = vld [vmem:[#allocation0] sm:$0xf]
    %256 = vrot.lane.b32.xlu0 %v255, 107
    %v257 = vpop.permute.xlu0 %256
    %vm258 = vcmask 7168
    %s259 = scalar_lea.vmem %s1, 21
    %260 = vst.msk [vmem:[%s259] sm:$0x1] %vm258, %v257
    %s261 = scalar_lea.vmem %s1, 52
    %262 = vst.msk [vmem:[%s261] sm:$0x2] %vm258, %v257
    %s263 = scalar_lea.vmem %s1, 83
    %264 = vst.msk [vmem:[%s263] sm:$0x4] %vm258, %v257
    %s265 = scalar_lea.vmem %s1, 114
    %266 = vst.msk [vmem:[%s265] sm:$0x8] %vm258, %v257
    %v267 = vld [vmem:[#allocation0] sm:$0xf]
    %268 = vrot.lane.b32.xlu0 %v267, 106
    %v269 = vpop.permute.xlu0 %268
    %vm270 = vcmask 7168
    %s271 = scalar_lea.vmem %s1, 22
    %272 = vst.msk [vmem:[%s271] sm:$0x1] %vm270, %v269
    %s273 = scalar_lea.vmem %s1, 53
    %274 = vst.msk [vmem:[%s273] sm:$0x2] %vm270, %v269
    %s275 = scalar_lea.vmem %s1, 84
    %276 = vst.msk [vmem:[%s275] sm:$0x4] %vm270, %v269
    %s277 = scalar_lea.vmem %s1, 115
    %278 = vst.msk [vmem:[%s277] sm:$0x8] %vm270, %v269
    %v279 = vld [vmem:[#allocation0] sm:$0xf]
    %280 = vrot.lane.b32.xlu0 %v279, 105
    %v281 = vpop.permute.xlu0 %280
    %vm282 = vcmask 7168
    %s283 = scalar_lea.vmem %s1, 23
    %284 = vst.msk [vmem:[%s283] sm:$0x1] %vm282, %v281
    %s285 = scalar_lea.vmem %s1, 54
    %286 = vst.msk [vmem:[%s285] sm:$0x2] %vm282, %v281
    %s287 = scalar_lea.vmem %s1, 85
    %288 = vst.msk [vmem:[%s287] sm:$0x4] %vm282, %v281
    %s289 = scalar_lea.vmem %s1, 116
    %290 = vst.msk [vmem:[%s289] sm:$0x8] %vm282, %v281
    %v291 = vld [vmem:[#allocation0] sm:$0xf]
    %292 = vrot.lane.b32.xlu0 %v291, 104
    %v293 = vpop.permute.xlu0 %292
    %vm294 = vcmask 7168
    %s295 = scalar_lea.vmem %s1, 24
    %296 = vst.msk [vmem:[%s295] sm:$0x1] %vm294, %v293
    %s297 = scalar_lea.vmem %s1, 55
    %298 = vst.msk [vmem:[%s297] sm:$0x2] %vm294, %v293
    %s299 = scalar_lea.vmem %s1, 86
    %300 = vst.msk [vmem:[%s299] sm:$0x4] %vm294, %v293
    %s301 = scalar_lea.vmem %s1, 117
    %302 = vst.msk [vmem:[%s301] sm:$0x8] %vm294, %v293
    %v303 = vld [vmem:[#allocation0] sm:$0xf]
    %304 = vrot.lane.b32.xlu0 %v303, 103
    %v305 = vpop.permute.xlu0 %304
    %vm306 = vcmask 7168
    %s307 = scalar_lea.vmem %s1, 25
    %308 = vst.msk [vmem:[%s307] sm:$0x1] %vm306, %v305
    %s309 = scalar_lea.vmem %s1, 56
    %310 = vst.msk [vmem:[%s309] sm:$0x2] %vm306, %v305
    %s311 = scalar_lea.vmem %s1, 87
    %312 = vst.msk [vmem:[%s311] sm:$0x4] %vm306, %v305
    %s313 = scalar_lea.vmem %s1, 118
    %314 = vst.msk [vmem:[%s313] sm:$0x8] %vm306, %v305
    %v315 = vld [vmem:[#allocation0] sm:$0xf]
    %316 = vrot.lane.b32.xlu0 %v315, 102
    %v317 = vpop.permute.xlu0 %316
    %vm318 = vcmask 7168
    %s319 = scalar_lea.vmem %s1, 26
    %320 = vst.msk [vmem:[%s319] sm:$0x1] %vm318, %v317
    %s321 = scalar_lea.vmem %s1, 57
    %322 = vst.msk [vmem:[%s321] sm:$0x2] %vm318, %v317
    %s323 = scalar_lea.vmem %s1, 88
    %324 = vst.msk [vmem:[%s323] sm:$0x4] %vm318, %v317
    %s325 = scalar_lea.vmem %s1, 119
    %326 = vst.msk [vmem:[%s325] sm:$0x8] %vm318, %v317
    %v327 = vld [vmem:[#allocation0] sm:$0xf]
    %328 = vrot.lane.b32.xlu0 %v327, 101
    %v329 = vpop.permute.xlu0 %328
    %vm330 = vcmask 7168
    %s331 = scalar_lea.vmem %s1, 27
    %332 = vst.msk [vmem:[%s331] sm:$0x1] %vm330, %v329
    %s333 = scalar_lea.vmem %s1, 58
    %334 = vst.msk [vmem:[%s333] sm:$0x2] %vm330, %v329
    %s335 = scalar_lea.vmem %s1, 89
    %336 = vst.msk [vmem:[%s335] sm:$0x4] %vm330, %v329
    %s337 = scalar_lea.vmem %s1, 120
    %338 = vst.msk [vmem:[%s337] sm:$0x8] %vm330, %v329
    %v339 = vld [vmem:[#allocation0] sm:$0xf]
    %340 = vrot.lane.b32.xlu0 %v339, 100
    %v341 = vpop.permute.xlu0 %340
    %vm342 = vcmask 7168
    %s343 = scalar_lea.vmem %s1, 28
    %344 = vst.msk [vmem:[%s343] sm:$0x1] %vm342, %v341
    %s345 = scalar_lea.vmem %s1, 59
    %346 = vst.msk [vmem:[%s345] sm:$0x2] %vm342, %v341
    %s347 = scalar_lea.vmem %s1, 90
    %348 = vst.msk [vmem:[%s347] sm:$0x4] %vm342, %v341
    %s349 = scalar_lea.vmem %s1, 121
    %350 = vst.msk [vmem:[%s349] sm:$0x8] %vm342, %v341
    %v351 = vld [vmem:[#allocation0] sm:$0xf]
    %352 = vrot.lane.b32.xlu0 %v351, 99
    %v353 = vpop.permute.xlu0 %352
    %vm354 = vcmask 7168
    %s355 = scalar_lea.vmem %s1, 29
    %356 = vst.msk [vmem:[%s355] sm:$0x1] %vm354, %v353
    %s357 = scalar_lea.vmem %s1, 60
    %358 = vst.msk [vmem:[%s357] sm:$0x2] %vm354, %v353
    %s359 = scalar_lea.vmem %s1, 91
    %360 = vst.msk [vmem:[%s359] sm:$0x4] %vm354, %v353
    %s361 = scalar_lea.vmem %s1, 122
    %362 = vst.msk [vmem:[%s361] sm:$0x8] %vm354, %v353
    %v363 = vld [vmem:[#allocation0] sm:$0xf]
    %364 = vrot.lane.b32.xlu0 %v363, 98
    %v365 = vpop.permute.xlu0 %364
    %vm366 = vcmask 7168
    %s367 = scalar_lea.vmem %s1, 30
    %368 = vst.msk [vmem:[%s367] sm:$0x1] %vm366, %v365
    %s369 = scalar_lea.vmem %s1, 61
    %370 = vst.msk [vmem:[%s369] sm:$0x2] %vm366, %v365
    %s371 = scalar_lea.vmem %s1, 92
    %372 = vst.msk [vmem:[%s371] sm:$0x4] %vm366, %v365
    %s373 = scalar_lea.vmem %s1, 123
    %374 = vst.msk [vmem:[%s373] sm:$0x8] %vm366, %v365
    %v375 = vld [vmem:[#allocation0] sm:$0xf]
    %376 = vrot.lane.b32.xlu0 %v375, 97
    %v377 = vpop.permute.xlu0 %376
    %vm378 = vcmask 7168
    %s379 = scalar_lea.vmem %s1, 31
    %380 = vst.msk [vmem:[%s379] sm:$0x1] %vm378, %v377
    %s381 = scalar_lea.vmem %s1, 62
    %382 = vst.msk [vmem:[%s381] sm:$0x2] %vm378, %v377
    %s383 = scalar_lea.vmem %s1, 93
    %384 = vst.msk [vmem:[%s383] sm:$0x4] %vm378, %v377
    %s385 = scalar_lea.vmem %s1, 124
    %386 = vst.msk [vmem:[%s385] sm:$0x8] %vm378, %v377

// kernel: conv_denoiser_forward.7
$region0: #{conv_denoiser_forward.7}
  #allocation0 [shape = 'u32[]', space=smem, size = 0x4, offset = 0x4, fixed_abs, tag = 'smem constant byte address 0x4 - core index']
  #allocation1 [shape = 'u32[144,128]{1,0:T(1,128)}', space=vmem, size = 0x12000, scoped, tag = 'internal scratch']
  %s0 = inlined_call_operand.vmem [shape: bf16[32,9], index: 0, kind: input, shape index: {}]
  %s1 = inlined_call_operand.vmem [shape: bf16[4,9,392], index: 1, kind: input, shape index: {}]
  %s2 = inlined_call_operand.vmem [shape: f32[32,1], index: 2, kind: input, shape index: {}]
  %s3 = inlined_call_operand.vmem [shape: f32[32,392], index: 3, kind: output, shape index: {}]
  %s4 = sld [smem:[#allocation0]]
  $region22: #{conv_denoiser_forward.7} parent=0
    _
  %s6 = ssub.s32 1, %s4
  %s7 = scalar_select 0, %s6, %s4
  // Predicated region
  $region2: #{conv_denoiser_forward.7} parent=0 // pred_check
    _
  $region3: #{conv_denoiser_forward.7} parent=0 // pred_check_branch
    %9 = sbr.rel (0) target = $region5
  $region4: #{conv_denoiser_forward.7} parent=0 // pred_region
    _
  $region5: #{conv_denoiser_forward.7} parent=0 // pred_fallthru
    _
  // Predicated region
  $region6: #{conv_denoiser_forward.7} parent=0 // pred_check
    _
  $region7: #{conv_denoiser_forward.7} parent=0 // pred_check_branch
    %11 = sbr.rel (0) target = $region9
  $region8: #{conv_denoiser_forward.7} parent=0 // pred_region
    _
  $region9: #{conv_denoiser_forward.7} parent=0 // pred_fallthru
    _
  // Predicated region
  $region10: #{conv_denoiser_forward.7} parent=0 // pred_check
    _
  $region11: #{conv_denoiser_forward.7} parent=0 // pred_check_branch
    %13 = sbr.rel (0) target = $region13
  $region12: #{conv_denoiser_forward.7} parent=0 // pred_region
    _
  $region13: #{conv_denoiser_forward.7} parent=0 // pred_fallthru
    _
  %v15 = vld [vmem:[%s0] sm:$0xf]
  %v16 = vld [vmem:[%s0 + $0x4] sm:$0xf]
  %v17 = vld [vmem:[%s0 + $0x8] sm:$0xf]
  %v18 = vld [vmem:[%s0 + $0xc] sm:$0xf]
  %v19 = vld [vmem:[%s1] sm:$0xff]
  %v20 = vld [vmem:[%s1 + $0x8] sm:$0xff]
  %v21 = vld [vmem:[%s1 + $0x10] sm:$0x11]
  %v22 = vld [vmem:[%s1 + $0x18] sm:$0x11]
  %v27 = vunpack.c.l.b16 %v15
  %v28 = vunpack.c.l.b16 %v16
  %v29 = vunpack.c.l.b16 %v17
  %v30 = vunpack.c.l.b16 %v18
  %v31 = vpack.c.b16 %v28, %v27
  %v32 = vpack.c.b16 %v30, %v29
  %v37 = vunpack.c.l.b16 %v19
  %v38 = vunpack.c.h.b16 %v19
  %v39 = vunpack.c.l.b16 %v20
  %v40 = vunpack.c.h.b16 %v20
  %v41 = vunpack.c.l.b16 %v21
  %v42 = vunpack.c.h.b16 %v21
  %v43 = vunpack.c.l.b16 %v22
  %v44 = vunpack.c.h.b16 %v22
  %v45 = vpack.c.b16 %v41, %v37
  %v46 = vpack.c.b16 %v42, %v38
  %v47 = vpack.c.b16 %v43, %v39
  %v48 = vpack.c.b16 %v44, %v40
  %vm49 = vcmask 72704
  %v51 = vsel %vm49, %v31, 0
  %v54 = vsel %vm49, %v32, 0
  %vm56 = vcmask 1043456
  %vm57 = vcmask 1044480
  %v58 = vsel %vm56, 4294967295, 65535
  %v59 = vsel %vm57, %v58, 0
  %v61 = vand.u32 %v45, %v59
  %v64 = vand.u32 %v46, %v59
  %v67 = vand.u32 %v47, %v59
  %v70 = vand.u32 %v48, %v59
  %72 = vmatprep.subr.bf16.mxu0 %v64
  %73 = vmatpush1.bf16.msra.mxu0 %v61
  %74 = vmatprep.subr.bf16.mxu0 0
  %75 = vmatpush1.bf16.msra.mxu0 0
  %76 = vmatprep.subr.bf16.mxu0 0
  %77 = vmatpush1.bf16.msra.mxu0 0
  %78 = vmatprep.subr.bf16.mxu0 0
  %79 = vmatpush1.bf16.msra.mxu0 0
  %80 = vmatprep.subr.bf16.mxu0 0
  %81 = vmatpush1.bf16.msra.mxu0 0
  %82 = vmatprep.subr.bf16.mxu0 0
  %83 = vmatpush1.bf16.msra.mxu0 0
  %84 = vmatprep.subr.bf16.mxu0 0
  %85 = vmatpush1.bf16.msra.mxu0 0
  %86 = vmatprep.subr.bf16.mxu0 0
  %87 = vmatpush1.bf16.msra.mxu0 0
  %88 = vmatprep.subr.bf16.mxu0 0
  %89 = vmatpush1.bf16.msra.mxu0 0
  %90 = vmatprep.subr.bf16.mxu0 0
  %91 = vmatpush1.bf16.msra.mxu0 0
  %92 = vmatprep.subr.bf16.mxu0 0
  %93 = vmatpush1.bf16.msra.mxu0 0
  %94 = vmatprep.subr.bf16.mxu0 0
  %95 = vmatpush1.bf16.msra.mxu0 0
  %96 = vmatprep.subr.bf16.mxu0 0
  %97 = vmatpush1.bf16.msra.mxu0 0
  %98 = vmatprep.subr.bf16.mxu0 0
  %99 = vmatpush1.bf16.msra.mxu0 0
  %100 = vmatprep.subr.bf16.mxu0 0
  %101 = vmatpush1.bf16.msra.mxu0 0
  %102 = vmatprep.subr.bf16.mxu0 0
  %103 = vmatpush1.bf16.msra.mxu0 0
  %104 = vmatprep.mubr.bf16.mxu0 0
  %105 = vmatmul.mubr.bf16.gmra.mrb[0].mxu0 %v51
  %v106 = vpop.f32.mrb[0].mxu0
  %v107 = vadd.f32 0.0, %v106
  %v108 = vpop.f32.mrb[0].mxu0
  %v109 = vadd.f32 0.0, %v108
  %v110 = vpop.f32.mrb[0].mxu0
  %v111 = vadd.f32 0.0, %v110
  %v112 = vpop.f32.mrb[0].mxu0
  %v113 = vadd.f32 0.0, %v112
  %114 = vmatprep.mubr.bf16.mxu0 0
  %115 = vmatmul.mubr.bf16.gmra.mrb[0].mxu0 %v54
  %v116 = vpop.f32.mrb[0].mxu0
  %v117 = vadd.f32 0.0, %v116
  %v118 = vpop.f32.mrb[0].mxu0
  %v119 = vadd.f32 0.0, %v118
  %v120 = vpop.f32.mrb[0].mxu0
  %v121 = vadd.f32 0.0, %v120
  %v122 = vpop.f32.mrb[0].mxu0
  %v123 = vadd.f32 0.0, %v122
  %124 = vdwg.mxu0
  %125 = vmatprep.subr.bf16.mxu0 %v70
  %126 = vmatpush1.bf16.msra.mxu0 %v67
  %127 = vmatprep.subr.bf16.mxu0 0
  %128 = vmatpush1.bf16.msra.mxu0 0
  %129 = vmatprep.subr.bf16.mxu0 0
  %130 = vmatpush1.bf16.msra.mxu0 0
  %131 = vmatprep.subr.bf16.mxu0 0
  %132 = vmatpush1.bf16.msra.mxu0 0
  %133 = vmatprep.subr.bf16.mxu0 0
  %134 = vmatpush1.bf16.msra.mxu0 0
  %135 = vmatprep.subr.bf16.mxu0 0
  %136 = vmatpush1.bf16.msra.mxu0 0
  %137 = vmatprep.subr.bf16.mxu0 0
  %138 = vmatpush1.bf16.msra.mxu0 0
  %139 = vmatprep.subr.bf16.mxu0 0
  %140 = vmatpush1.bf16.msra.mxu0 0
  %141 = vmatprep.subr.bf16.mxu0 0
  %142 = vmatpush1.bf16.msra.mxu0 0
  %143 = vmatprep.subr.bf16.mxu0 0
  %144 = vmatpush1.bf16.msra.mxu0 0
  %145 = vmatprep.subr.bf16.mxu0 0
  %146 = vmatpush1.bf16.msra.mxu0 0
  %147 = vmatprep.subr.bf16.mxu0 0
  %148 = vmatpush1.bf16.msra.mxu0 0
  %149 = vmatprep.subr.bf16.mxu0 0
  %150 = vmatpush1.bf16.msra.mxu0 0
  %151 = vmatprep.subr.bf16.mxu0 0
  %152 = vmatpush1.bf16.msra.mxu0 0
  %153 = vmatprep.subr.bf16.mxu0 0
  %154 = vmatpush1.bf16.msra.mxu0 0
  %155 = vmatprep.subr.bf16.mxu0 0
  %156 = vmatpush1.bf16.msra.mxu0 0
  %157 = vmatprep.mubr.bf16.mxu0 0
  %158 = vmatmul.mubr.bf16.gmra.mrb[0].mxu0 %v51
  %v159 = vpop.f32.mrb[0].mxu0
  %v160 = vadd.f32 0.0, %v159
  %v161 = vpop.f32.mrb[0].mxu0
  %v162 = vadd.f32 0.0, %v161
  %v163 = vpop.f32.mrb[0].mxu0
  %v164 = vadd.f32 0.0, %v163
  %v165 = vpop.f32.mrb[0].mxu0
  %v166 = vadd.f32 0.0, %v165
  %167 = vmatprep.mubr.bf16.mxu0 0
  %168 = vmatmul.mubr.bf16.gmra.mrb[0].mxu0 %v54
  %v169 = vpop.f32.mrb[0].mxu0
  %v170 = vadd.f32 0.0, %v169
  %v171 = vpop.f32.mrb[0].mxu0
  %v172 = vadd.f32 0.0, %v171
  %v173 = vpop.f32.mrb[0].mxu0
  %v174 = vadd.f32 0.0, %v173
  %v175 = vpop.f32.mrb[0].mxu0
  %v176 = vadd.f32 0.0, %v175
  %177 = vdwg.mxu0
  %s178 = scalar_lea.vmem %s1, 32
  %v179 = vld [vmem:[%s178] sm:$0xff]
  %v180 = vld [vmem:[%s178 + $0x8] sm:$0xff]
  %v181 = vld [vmem:[%s178 + $0x10] sm:$0x11]
  %v182 = vld [vmem:[%s178 + $0x18] sm:$0x11]
  %v187 = vunpack.c.l.b16 %v179
  %v188 = vunpack.c.h.b16 %v179
  %v189 = vunpack.c.l.b16 %v180
  %v190 = vunpack.c.h.b16 %v180
  %v191 = vunpack.c.l.b16 %v181
  %v192 = vunpack.c.h.b16 %v181
  %v193 = vunpack.c.l.b16 %v182
  %v194 = vunpack.c.h.b16 %v182
  %v195 = vpack.c.b16 %v191, %v187
  %v196 = vpack.c.b16 %v192, %v188
  %v197 = vpack.c.b16 %v193, %v189
  %v198 = vpack.c.b16 %v194, %v190
  %v200 = vand.u32 %v195, %v59
  %v203 = vand.u32 %v196, %v59
  %v206 = vand.u32 %v197, %v59
  %v209 = vand.u32 %v198, %v59
  %211 = vmatprep.subr.bf16.mxu0 %v203
  %212 = vmatpush1.bf16.msra.mxu0 %v200
  %213 = vmatprep.subr.bf16.mxu0 0
  %214 = vmatpush1.bf16.msra.mxu0 0
  %215 = vmatprep.subr.bf16.mxu0 0
  %216 = vmatpush1.bf16.msra.mxu0 0
  %217 = vmatprep.subr.bf16.mxu0 0
  %218 = vmatpush1.bf16.msra.mxu0 0
  %219 = vmatprep.subr.bf16.mxu0 0
  %220 = vmatpush1.bf16.msra.mxu0 0
  %221 = vmatprep.subr.bf16.mxu0 0
  %222 = vmatpush1.bf16.msra.mxu0 0
  %223 = vmatprep.subr.bf16.mxu0 0
  %224 = vmatpush1.bf16.msra.mxu0 0
  %225 = vmatprep.subr.bf16.mxu0 0
  %226 = vmatpush1.bf16.msra.mxu0 0
  %227 = vmatprep.subr.bf16.mxu0 0
  %228 = vmatpush1.bf16.msra.mxu0 0
  %229 = vmatprep.subr.bf16.mxu0 0
  %230 = vmatpush1.bf16.msra.mxu0 0
  %231 = vmatprep.subr.bf16.mxu0 0
  %232 = vmatpush1.bf16.msra.mxu0 0
  %233 = vmatprep.subr.bf16.mxu0 0
  %234 = vmatpush1.bf16.msra.mxu0 0
  %235 = vmatprep.subr.bf16.mxu0 0
  %236 = vmatpush1.bf16.msra.mxu0 0
  %237 = vmatprep.subr.bf16.mxu0 0
  %238 = vmatpush1.bf16.msra.mxu0 0
  %239 = vmatprep.subr.bf16.mxu0 0
  %240 = vmatpush1.bf16.msra.mxu0 0
  %241 = vmatprep.subr.bf16.mxu0 0
  %242 = vmatpush1.bf16.msra.mxu0 0
  %243 = vmatprep.mubr.bf16.mxu0 0
  %244 = vmatmul.mubr.bf16.gmra.mrb[0].mxu0 %v51
  %v245 = vpop.f32.mrb[0].mxu0
  %v246 = vadd.f32 0.0, %v245
  %v247 = vpop.f32.mrb[0].mxu0
  %v248 = vadd.f32 0.0, %v247
  %v249 = vpop.f32.mrb[0].mxu0
  %v250 = vadd.f32 0.0, %v249
  %v251 = vpop.f32.mrb[0].mxu0
  %v252 = vadd.f32 0.0, %v251
  %253 = vmatprep.mubr.bf16.mxu0 0
  %254 = vmatmul.mubr.bf16.gmra.mrb[0].mxu0 %v54
  %v255 = vpop.f32.mrb[0].mxu0
  %v256 = vadd.f32 0.0, %v255
  %v257 = vpop.f32.mrb[0].mxu0
  %v258 = vadd.f32 0.0, %v257
  %v259 = vpop.f32.mrb[0].mxu0
  %v260 = vadd.f32 0.0, %v259
  %v261 = vpop.f32.mrb[0].mxu0
  %v262 = vadd.f32 0.0, %v261
  %263 = vdwg.mxu0
  %264 = vmatprep.subr.bf16.mxu0 %v209
  %265 = vmatpush1.bf16.msra.mxu0 %v206
  %266 = vmatprep.subr.bf16.mxu0 0
  %267 = vmatpush1.bf16.msra.mxu0 0
  %268 = vmatprep.subr.bf16.mxu0 0
  %269 = vmatpush1.bf16.msra.mxu0 0
  %270 = vmatprep.subr.bf16.mxu0 0
  %271 = vmatpush1.bf16.msra.mxu0 0
  %272 = vmatprep.subr.bf16.mxu0 0
  %273 = vmatpush1.bf16.msra.mxu0 0
  %274 = vmatprep.subr.bf16.mxu0 0
  %275 = vmatpush1.bf16.msra.mxu0 0
  %276 = vmatprep.subr.bf16.mxu0 0
  %277 = vmatpush1.bf16.msra.mxu0 0
  %278 = vmatprep.subr.bf16.mxu0 0
  %279 = vmatpush1.bf16.msra.mxu0 0
  %280 = vmatprep.subr.bf16.mxu0 0
  %281 = vmatpush1.bf16.msra.mxu0 0
  %282 = vmatprep.subr.bf16.mxu0 0
  %283 = vmatpush1.bf16.msra.mxu0 0
  %284 = vmatprep.subr.bf16.mxu0 0
  %285 = vmatpush1.bf16.msra.mxu0 0
  %286 = vmatprep.subr.bf16.mxu0 0
  %287 = vmatpush1.bf16.msra.mxu0 0
  %288 = vmatprep.subr.bf16.mxu0 0
  %289 = vmatpush1.bf16.msra.mxu0 0
  %290 = vmatprep.subr.bf16.mxu0 0
  %291 = vmatpush1.bf16.msra.mxu0 0
  %292 = vmatprep.subr.bf16.mxu0 0
  %293 = vmatpush1.bf16.msra.mxu0 0
  %294 = vmatprep.subr.bf16.mxu0 0
  %295 = vmatpush1.bf16.msra.mxu0 0
  %296 = vmatprep.mubr.bf16.mxu0 0
  %297 = vmatmul.mubr.bf16.gmra.mrb[0].mxu0 %v51
  %v298 = vpop.f32.mrb[0].mxu0
  %v299 = vadd.f32 0.0, %v298
  %v300 = vpop.f32.mrb[0].mxu0
  %v301 = vadd.f32 0.0, %v300
  %v302 = vpop.f32.mrb[0].mxu0
  %v303 = vadd.f32 0.0, %v302
  %v304 = vpop.f32.mrb[0].mxu0
  %v305 = vadd.f32 0.0, %v304
  %306 = vmatprep.mubr.bf16.mxu0 0
  %307 = vmatmul.mubr.bf16.gmra.mrb[0].mxu0 %v54
  %v308 = vpop.f32.mrb[0].mxu0
  %v309 = vadd.f32 0.0, %v308
  %v310 = vpop.f32.mrb[0].mxu0
  %v311 = vadd.f32 0.0, %v310
  %v312 = vpop.f32.mrb[0].mxu0
  %v313 = vadd.f32 0.0, %v312
  %v314 = vpop.f32.mrb[0].mxu0
  %v315 = vadd.f32 0.0, %v314
  %316 = vdwg.mxu0
  %s317 = scalar_lea.vmem %s1, 64
  %v318 = vld [vmem:[%s317] sm:$0xff]
  %v319 = vld [vmem:[%s317 + $0x8] sm:$0xff]
  %v320 = vld [vmem:[%s317 + $0x10] sm:$0x11]
  %v321 = vld [vmem:[%s317 + $0x18] sm:$0x11]
  %v326 = vunpack.c.l.b16 %v318
  %v327 = vunpack.c.h.b16 %v318
  %v328 = vunpack.c.l.b16 %v319
  %v329 = vunpack.c.h.b16 %v319
  %v330 = vunpack.c.l.b16 %v320
  %v331 = vunpack.c.h.b16 %v320
  %v332 = vunpack.c.l.b16 %v321
  %v333 = vunpack.c.h.b16 %v321
  %v334 = vpack.c.b16 %v330, %v326
  %v335 = vpack.c.b16 %v331, %v327
  %v336 = vpack.c.b16 %v332, %v328
  %v337 = vpack.c.b16 %v333, %v329
  %v339 = vand.u32 %v334, %v59
  %v342 = vand.u32 %v335, %v59
  %v345 = vand.u32 %v336, %v59
  %v348 = vand.u32 %v337, %v59
  %350 = vmatprep.subr.bf16.mxu0 %v342
  %351 = vmatpush1.bf16.msra.mxu0 %v339
  %352 = vmatprep.subr.bf16.mxu0 0
  %353 = vmatpush1.bf16.msra.mxu0 0
  %354 = vmatprep.subr.bf16.mxu0 0
  %355 = vmatpush1.bf16.msra.mxu0 0
  %356 = vmatprep.subr.bf16.mxu0 0
  %357 = vmatpush1.bf16.msra.mxu0 0
  %358 = vmatprep.subr.bf16.mxu0 0
  %359 = vmatpush1.bf16.msra.mxu0 0
  %360 = vmatprep.subr.bf16.mxu0 0
  %361 = vmatpush1.bf16.msra.mxu0 0
  %362 = vmatprep.subr.bf16.mxu0 0
  %363 = vmatpush1.bf16.msra.mxu0 0
  %364 = vmatprep.subr.bf16.mxu0 0
  %365 = vmatpush1.bf16.msra.mxu0 0
  %366 = vmatprep.subr.bf16.mxu0 0
  %367 = vmatpush1.bf16.msra.mxu0 0
  %368 = vmatprep.subr.bf16.mxu0 0
  %369 = vmatpush1.bf16.msra.mxu0 0
  %370 = vmatprep.subr.bf16.mxu0 0
  %371 = vmatpush1.bf16.msra.mxu0 0
  %372 = vmatprep.subr.bf16.mxu0 0
  %373 = vmatpush1.bf16.msra.mxu0 0
  %374 = vmatprep.subr.bf16.mxu0 0
  %375 = vmatpush1.bf16.msra.mxu0 0
  %376 = vmatprep.subr.bf16.mxu0 0
  %377 = vmatpush1.bf16.msra.mxu0 0
  %378 = vmatprep.subr.bf16.mxu0 0
  %379 = vmatpush1.bf16.msra.mxu0 0
  %380 = vmatprep.subr.bf16.mxu0 0
  %381 = vmatpush1.bf16.msra.mxu0 0
  %382 = vmatprep.mubr.bf16.mxu0 0
  %383 = vmatmul.mubr.bf16.gmra.mrb[0].mxu0 %v51
  %v384 = vpop.f32.mrb[0].mxu0
  %v385 = vadd.f32 0.0, %v384
  %v386 = vpop.f32.mrb[0].mxu0
  %v387 = vadd.f32 0.0, %v386
  %v388 = vpop.f32.mrb[0].mxu0
  %v389 = vadd.f32 0.0, %v388
  %v390 = vpop.f32.mrb[0].mxu0
  %v391 = vadd.f32 0.0, %v390
  %392 = vmatprep.mubr.bf16.mxu0 0
  %393 = vmatmul.mubr.bf16.gmra.mrb[0].mxu0 %v54
  %v394 = vpop.f32.mrb[0].mxu0
  %v395 = vadd.f32 0.0, %v394
  %v396 = vpop.f32.mrb[0].mxu0
  %v397 = vadd.f32 0.0, %v396
  %v398 = vpop.f32.mrb[0].mxu0
  %v399 = vadd.f32 0.0, %v398
  %v400 = vpop.f32.mrb[0].mxu0
  %v401 = vadd.f32 0.0, %v400
  %402 = vdwg.mxu0
  %403 = vmatprep.subr.bf16.mxu0 %v348
  %404 = vmatpush1.bf16.msra.mxu0 %v345
  %405 = vmatprep.subr.bf16.mxu0 0
  %406 = vmatpush1.bf16.msra.mxu0 0
  %407 = vmatprep.subr.bf16.mxu0 0
  %408 = vmatpush1.bf16.msra.mxu0 0
  %409 = vmatprep.subr.bf16.mxu0 0
  %410 = vmatpush1.bf16.msra.mxu0 0
  %411 = vmatprep.subr.bf16.mxu0 0
  %412 = vmatpush1.bf16.msra.mxu0 0
  %413 = vmatprep.subr.bf16.mxu0 0
  %414 = vmatpush1.bf16.msra.mxu0 0
  %415 = vmatprep.subr.bf16.mxu0 0
  %416 = vmatpush1.bf16.msra.mxu0 0
  %417 = vmatprep.subr.bf16.mxu0 0
  %418 = vmatpush1.bf16.msra.mxu0 0
  %419 = vmatprep.subr.bf16.mxu0 0
  %420 = vmatpush1.bf16.msra.mxu0 0
  %421 = vmatprep.subr.bf16.mxu0 0
  %422 = vmatpush1.bf16.msra.mxu0 0
  %423 = vmatprep.subr.bf16.mxu0 0
  %424 = vmatpush1.bf16.msra.mxu0 0
  %425 = vmatprep.subr.bf16.mxu0 0
  %426 = vmatpush1.bf16.msra.mxu0 0
  %427 = vmatprep.subr.bf16.mxu0 0
  %428 = vmatpush1.bf16.msra.mxu0 0
  %429 = vmatprep.subr.bf16.mxu0 0
  %430 = vmatpush1.bf16.msra.mxu0 0
  %431 = vmatprep.subr.bf16.mxu0 0
  %432 = vmatpush1.bf16.msra.mxu0 0
  %433 = vmatprep.subr.bf16.mxu0 0
  %434 = vmatpush1.bf16.msra.mxu0 0
  %435 = vmatprep.mubr.bf16.mxu0 0
  %436 = vmatmul.mubr.bf16.gmra.mrb[0].mxu0 %v51
  %v437 = vpop.f32.mrb[0].mxu0
  %v438 = vadd.f32 0.0, %v437
  %v439 = vpop.f32.mrb[0].mxu0
  %v440 = vadd.f32 0.0, %v439
  %v441 = vpop.f32.mrb[0].mxu0
  %v442 = vadd.f32 0.0, %v441
  %v443 = vpop.f32.mrb[0].mxu0
  %v444 = vadd.f32 0.0, %v443
  %445 = vmatprep.mubr.bf16.mxu0 0
  %446 = vmatmul.mubr.bf16.gmra.mrb[0].mxu0 %v54
  %v447 = vpop.f32.mrb[0].mxu0
  %v448 = vadd.f32 0.0, %v447
  %v449 = vpop.f32.mrb[0].mxu0
  %v450 = vadd.f32 0.0, %v449
  %v451 = vpop.f32.mrb[0].mxu0
  %v452 = vadd.f32 0.0, %v451
  %v453 = vpop.f32.mrb[0].mxu0
  %v454 = vadd.f32 0.0, %v453
  %455 = vdwg.mxu0
  %s456 = scalar_lea.vmem %s1, 96
  %v457 = vld [vmem:[%s456] sm:$0xff]
  %v458 = vld [vmem:[%s456 + $0x8] sm:$0xff]
  %v459 = vld [vmem:[%s456 + $0x10] sm:$0x11]
  %v460 = vld [vmem:[%s456 + $0x18] sm:$0x11]
  %v465 = vunpack.c.l.b16 %v457
  %v466 = vunpack.c.h.b16 %v457
  %v467 = vunpack.c.l.b16 %v458
  %v468 = vunpack.c.h.b16 %v458
  %v469 = vunpack.c.l.b16 %v459
  %v470 = vunpack.c.h.b16 %v459
  %v471 = vunpack.c.l.b16 %v460
  %v472 = vunpack.c.h.b16 %v460
  %v473 = vpack.c.b16 %v469, %v465
  %v474 = vpack.c.b16 %v470, %v466
  %v475 = vpack.c.b16 %v471, %v467
  %v476 = vpack.c.b16 %v472, %v468
  %v478 = vand.u32 %v473, %v59
  %v481 = vand.u32 %v474, %v59
  %v484 = vand.u32 %v475, %v59
  %v487 = vand.u32 %v476, %v59
  %489 = vmatprep.subr.bf16.mxu0 %v481
  %490 = vmatpush1.bf16.msra.mxu0 %v478
  %491 = vmatprep.subr.bf16.mxu0 0
  %492 = vmatpush1.bf16.msra.mxu0 0
  %493 = vmatprep.subr.bf16.mxu0 0
  %494 = vmatpush1.bf16.msra.mxu0 0
  %495 = vmatprep.subr.bf16.mxu0 0
  %496 = vmatpush1.bf16.msra.mxu0 0
  %497 = vmatprep.subr.bf16.mxu0 0
  %498 = vmatpush1.bf16.msra.mxu0 0
  %499 = vmatprep.subr.bf16.mxu0 0
  %500 = vmatpush1.bf16.msra.mxu0 0
  %501 = vmatprep.subr.bf16.mxu0 0
  %502 = vmatpush1.bf16.msra.mxu0 0
  %503 = vmatprep.subr.bf16.mxu0 0
  %504 = vmatpush1.bf16.msra.mxu0 0
  %505 = vmatprep.subr.bf16.mxu0 0
  %506 = vmatpush1.bf16.msra.mxu0 0
  %507 = vmatprep.subr.bf16.mxu0 0
  %508 = vmatpush1.bf16.msra.mxu0 0
  %509 = vmatprep.subr.bf16.mxu0 0
  %510 = vmatpush1.bf16.msra.mxu0 0
  %511 = vmatprep.subr.bf16.mxu0 0
  %512 = vmatpush1.bf16.msra.mxu0 0
  %513 = vmatprep.subr.bf16.mxu0 0
  %514 = vmatpush1.bf16.msra.mxu0 0
  %515 = vmatprep.subr.bf16.mxu0 0
  %516 = vmatpush1.bf16.msra.mxu0 0
  %517 = vmatprep.subr.bf16.mxu0 0
  %518 = vmatpush1.bf16.msra.mxu0 0
  %519 = vmatprep.subr.bf16.mxu0 0
  %520 = vmatpush1.bf16.msra.mxu0 0
  %521 = vmatprep.mubr.bf16.mxu0 0
  %522 = vmatmul.mubr.bf16.gmra.mrb[0].mxu0 %v51
  %v523 = vpop.f32.mrb[0].mxu0
  %v524 = vadd.f32 0.0, %v523
  %v525 = vpop.f32.mrb[0].mxu0
  %v526 = vadd.f32 0.0, %v525
  %v527 = vpop.f32.mrb[0].mxu0
  %v528 = vadd.f32 0.0, %v527
  %v529 = vpop.f32.mrb[0].mxu0
  %v530 = vadd.f32 0.0, %v529
  %531 = vmatprep.mubr.bf16.mxu0 0
  %532 = vmatmul.mubr.bf16.gmra.mrb[0].mxu0 %v54
  %v533 = vpop.f32.mrb[0].mxu0
  %v534 = vadd.f32 0.0, %v533
  %v535 = vpop.f32.mrb[0].mxu0
  %v536 = vadd.f32 0.0, %v535
  %v537 = vpop.f32.mrb[0].mxu0
  %v538 = vadd.f32 0.0, %v537
  %v539 = vpop.f32.mrb[0].mxu0
  %v540 = vadd.f32 0.0, %v539
  %541 = vdwg.mxu0
  %542 = vmatprep.subr.bf16.mxu0 %v487
  %543 = vmatpush1.bf16.msra.mxu0 %v484
  %544 = vmatprep.subr.bf16.mxu0 0
  %545 = vmatpush1.bf16.msra.mxu0 0
  %546 = vmatprep.subr.bf16.mxu0 0
  %547 = vmatpush1.bf16.msra.mxu0 0
  %548 = vmatprep.subr.bf16.mxu0 0
  %549 = vmatpush1.bf16.msra.mxu0 0
  %550 = vmatprep.subr.bf16.mxu0 0
  %551 = vmatpush1.bf16.msra.mxu0 0
  %552 = vmatprep.subr.bf16.mxu0 0
  %553 = vmatpush1.bf16.msra.mxu0 0
  %554 = vmatprep.subr.bf16.mxu0 0
  %555 = vmatpush1.bf16.msra.mxu0 0
  %556 = vmatprep.subr.bf16.mxu0 0
  %557 = vmatpush1.bf16.msra.mxu0 0
  %558 = vmatprep.subr.bf16.mxu0 0
  %559 = vmatpush1.bf16.msra.mxu0 0
  %560 = vmatprep.subr.bf16.mxu0 0
  %561 = vmatpush1.bf16.msra.mxu0 0
  %562 = vmatprep.subr.bf16.mxu0 0
  %563 = vmatpush1.bf16.msra.mxu0 0
  %564 = vmatprep.subr.bf16.mxu0 0
  %565 = vmatpush1.bf16.msra.mxu0 0
  %566 = vmatprep.subr.bf16.mxu0 0
  %567 = vmatpush1.bf16.msra.mxu0 0
  %568 = vmatprep.subr.bf16.mxu0 0
  %569 = vmatpush1.bf16.msra.mxu0 0
  %570 = vmatprep.subr.bf16.mxu0 0
  %571 = vmatpush1.bf16.msra.mxu0 0
  %572 = vmatprep.subr.bf16.mxu0 0
  %573 = vmatpush1.bf16.msra.mxu0 0
  %574 = vmatprep.mubr.bf16.mxu0 0
  %575 = vmatmul.mubr.bf16.gmra.mrb[0].mxu0 %v51
  %v576 = vpop.f32.mrb[0].mxu0
  %v577 = vadd.f32 0.0, %v576
  %v578 = vpop.f32.mrb[0].mxu0
  %v579 = vadd.f32 0.0, %v578
  %v580 = vpop.f32.mrb[0].mxu0
  %v581 = vadd.f32 0.0, %v580
  %v582 = vpop.f32.mrb[0].mxu0
  %v583 = vadd.f32 0.0, %v582
  %584 = vmatprep.mubr.bf16.mxu0 0
  %585 = vmatmul.mubr.bf16.gmra.mrb[0].mxu0 %v54
  %v586 = vpop.f32.mrb[0].mxu0
  %v587 = vadd.f32 0.0, %v586
  %v588 = vpop.f32.mrb[0].mxu0
  %v589 = vadd.f32 0.0, %v588
  %v590 = vpop.f32.mrb[0].mxu0
  %v591 = vadd.f32 0.0, %v590
  %v592 = vpop.f32.mrb[0].mxu0
  %v593 = vadd.f32 0.0, %v592
  %594 = vdwg.mxu0
  %v595 = vmax.f32 %v107, %v246
  %v596 = vmax.f32 %v109, %v248
  %v597 = vmax.f32 %v160, %v299
  %v598 = vmax.f32 %v162, %v301
  %v599 = vmax.f32 %v111, %v250
  %v600 = vmax.f32 %v113, %v252
  %v601 = vmax.f32 %v164, %v303
  %v602 = vmax.f32 %v166, %v305
  %v603 = vmax.f32 %v117, %v256
  %v604 = vmax.f32 %v119, %v258
  %v605 = vmax.f32 %v170, %v309
  %v606 = vmax.f32 %v172, %v311
  %v607 = vmax.f32 %v121, %v260
  %v608 = vmax.f32 %v123, %v262
  %v609 = vmax.f32 %v174, %v313
  %v610 = vmax.f32 %v176, %v315
  %v611 = vmax.f32 %v385, %v524
  %v612 = vmax.f32 %v387, %v526
  %v613 = vmax.f32 %v438, %v577
  %v614 = vmax.f32 %v440, %v579
  %v615 = vmax.f32 %v389, %v528
  %v616 = vmax.f32 %v391, %v530
  %v617 = vmax.f32 %v442, %v581
  %v618 = vmax.f32 %v444, %v583
  %v619 = vmax.f32 %v395, %v534
  %v620 = vmax.f32 %v397, %v536
  %v621 = vmax.f32 %v448, %v587
  %v622 = vmax.f32 %v450, %v589
  %v623 = vmax.f32 %v399, %v538
  %v624 = vmax.f32 %v401, %v540
  %v625 = vmax.f32 %v452, %v591
  %v626 = vmax.f32 %v454, %v593
  %v627 = vmax.f32 %v595, %v611
  %v628 = vmax.f32 %v596, %v612
  %v629 = vmax.f32 %v597, %v613
  %v630 = vmax.f32 %v598, %v614
  %v631 = vmax.f32 %v599, %v615
  %v632 = vmax.f32 %v600, %v616
  %v633 = vmax.f32 %v601, %v617
  %v634 = vmax.f32 %v602, %v618
  %v635 = vmax.f32 %v603, %v619
  %v636 = vmax.f32 %v604, %v620
  %v637 = vmax.f32 %v605, %v621
  %v638 = vmax.f32 %v606, %v622
  %v639 = vmax.f32 %v607, %v623
  %v640 = vmax.f32 %v608, %v624
  %v641 = vmax.f32 %v609, %v625
  %v642 = vmax.f32 %v610, %v626
  %v643 = vld [vmem:[%s2] sm:$0xff]
  %v644 = vld [vmem:[%s2 + $0x8] sm:$0xff]
  %v645 = vld [vmem:[%s2 + $0x10] sm:$0xff]
  %v646 = vld [vmem:[%s2 + $0x18] sm:$0xff]
  %648 = vset.pattern.permute.xlu0 0
  %649 = vperm.xlu0 %648, %v643
  %v650 = vpop.permute.xlu0 %649
  %653 = vset.pattern.permute.xlu0 0
  %654 = vperm.xlu0 %653, %v644
  %v655 = vpop.permute.xlu0 %654
  %658 = vset.pattern.permute.xlu0 0
  %659 = vperm.xlu0 %658, %v645
  %v660 = vpop.permute.xlu0 %659
  %663 = vset.pattern.permute.xlu0 0
  %664 = vperm.xlu0 %663, %v646
  %v665 = vpop.permute.xlu0 %664
  %v667 = vadd.f32 %v627, %v650
  %v668 = vadd.f32 %v628, %v650
  %v669 = vadd.f32 %v629, %v650
  %v670 = vadd.f32 %v630, %v650
  %v671 = vadd.f32 %v631, %v655
  %v672 = vadd.f32 %v632, %v655
  %v673 = vadd.f32 %v633, %v655
  %v674 = vadd.f32 %v634, %v655
  %v675 = vadd.f32 %v635, %v660
  %v676 = vadd.f32 %v636, %v660
  %v677 = vadd.f32 %v637, %v660
  %v678 = vadd.f32 %v638, %v660
  %v679 = vadd.f32 %v639, %v665
  %v680 = vadd.f32 %v640, %v665
  %v681 = vadd.f32 %v641, %v665
  %v682 = vadd.f32 %v642, %v665
  %v683 = vmax.f32 %v667, 0.0
  %v684 = vmax.f32 %v668, 0.0
  %v685 = vmax.f32 %v669, 0.0
  %v686 = vmax.f32 %v670, 0.0
  %v687 = vmax.f32 %v671, 0.0
  %v688 = vmax.f32 %v672, 0.0
  %v689 = vmax.f32 %v673, 0.0
  %v690 = vmax.f32 %v674, 0.0
  %v691 = vmax.f32 %v675, 0.0
  %v692 = vmax.f32 %v676, 0.0
  %v693 = vmax.f32 %v677, 0.0
  %v694 = vmax.f32 %v678, 0.0
  %v695 = vmax.f32 %v679, 0.0
  %v696 = vmax.f32 %v680, 0.0
  %v697 = vmax.f32 %v681, 0.0
  %v698 = vmax.f32 %v682, 0.0
  %699 = vst [vmem:[%s3] sm:$0xff] %v683
  %700 = vst [vmem:[%s3 + $0x8] sm:$0xff] %v684
  %701 = vst [vmem:[%s3 + $0x10] sm:$0xff] %v685
  %vm702 = vcmask 64512
  %703 = vst.msk [vmem:[%s3 + $0x18] sm:$0xff] %vm702, %v686
  %704 = vst [vmem:[%s3 + $0x20] sm:$0xff] %v687
  %705 = vst [vmem:[%s3 + $0x28] sm:$0xff] %v688
  %706 = vst [vmem:[%s3 + $0x30] sm:$0xff] %v689
  %707 = vst.msk [vmem:[%s3 + $0x38] sm:$0xff] %vm702, %v690
  %708 = vst [vmem:[%s3 + $0x40] sm:$0xff] %v691
  %709 = vst [vmem:[%s3 + $0x48] sm:$0xff] %v692
  %710 = vst [vmem:[%s3 + $0x50] sm:$0xff] %v693
  %711 = vst.msk [vmem:[%s3 + $0x58] sm:$0xff] %vm702, %v694
  %712 = vst [vmem:[%s3 + $0x60] sm:$0xff] %v695
  %713 = vst [vmem:[%s3 + $0x68] sm:$0xff] %v696
  %714 = vst [vmem:[%s3 + $0x70] sm:$0xff] %v697
  %715 = vst.msk [vmem:[%s3 + $0x78] sm:$0xff] %vm702, %v698
  // Predicated region
  $region14: #{conv_denoiser_forward.7} parent=0 // pred_check
    _
  $region15: #{conv_denoiser_forward.7} parent=0 // pred_check_branch
    %717 = sbr.rel (0) target = $region17
  $region16: #{conv_denoiser_forward.7} parent=0 // pred_region
    _
  $region17: #{conv_denoiser_forward.7} parent=0 // pred_fallthru
    _
  // Predicated region
  $region18: #{conv_denoiser_forward.7} parent=0 // pred_check
    _
  $region19: #{conv_denoiser_forward.7} parent=0 // pred_check_branch
    %719 = sbr.rel (0) target = $region21
  $region20: #{conv_denoiser_forward.7} parent=0 // pred_region
    _
  $region21: #{conv_denoiser_forward.7} parent=0 // pred_fallthru
    _

// kernel: conv_denoiser_forward.8
$region0: #{conv_denoiser_forward.8}
  #allocation0 [shape = 'u32[]', space=smem, size = 0x4, offset = 0x4, fixed_abs, tag = 'smem constant byte address 0x4 - core index']
  #allocation1 [shape = 'u32[144,128]{1,0:T(1,128)}', space=vmem, size = 0x12000, scoped, tag = 'internal scratch']
  %s0 = inlined_call_operand.vmem [shape: bf16[16,288], index: 0, kind: input, shape index: {}]
  %s1 = inlined_call_operand.vmem [shape: bf16[4,288,98], index: 1, kind: input, shape index: {}]
  %s2 = inlined_call_operand.vmem [shape: f32[16,1], index: 2, kind: input, shape index: {}]
  %s3 = inlined_call_operand.vmem [shape: f32[16,98], index: 3, kind: output, shape index: {}]
  %s4 = sld [smem:[#allocation0]]
  $region22: #{conv_denoiser_forward.8} parent=0
    _
  %s6 = ssub.s32 1, %s4
  %s7 = scalar_select 0, %s6, %s4
  // Predicated region
  $region2: #{conv_denoiser_forward.8} parent=0 // pred_check
    _
  $region3: #{conv_denoiser_forward.8} parent=0 // pred_check_branch
    %9 = sbr.rel (0) target = $region5
  $region4: #{conv_denoiser_forward.8} parent=0 // pred_region
    _
  $region5: #{conv_denoiser_forward.8} parent=0 // pred_fallthru
    _
  // Predicated region
  $region6: #{conv_denoiser_forward.8} parent=0 // pred_check
    _
  $region7: #{conv_denoiser_forward.8} parent=0 // pred_check_branch
    %11 = sbr.rel (0) target = $region9
  $region8: #{conv_denoiser_forward.8} parent=0 // pred_region
    _
  $region9: #{conv_denoiser_forward.8} parent=0 // pred_fallthru
    _
  // Predicated region
  $region10: #{conv_denoiser_forward.8} parent=0 // pred_check
    _
  $region11: #{conv_denoiser_forward.8} parent=0 // pred_check_branch
    %13 = sbr.rel (0) target = $region13
  $region12: #{conv_denoiser_forward.8} parent=0 // pred_region
    _
  $region13: #{conv_denoiser_forward.8} parent=0 // pred_fallthru
    _
  %v15 = vld [vmem:[%s0] sm:$0xff]
  %v16 = vld [vmem:[%s0 + $0x8] sm:$0xf]
  %v17 = vld [vmem:[%s0 + $0xc] sm:$0xff]
  %v18 = vld [vmem:[%s0 + $0x14] sm:$0xf]
  %v19 = vld [vmem:[%s1] sm:$0xf]
  %v20 = vld [vmem:[%s1 + $0x4] sm:$0xf]
  %v21 = vld [vmem:[%s1 + $0x8] sm:$0xf]
  %v22 = vld [vmem:[%s1 + $0xc] sm:$0xf]
  %v23 = vld [vmem:[%s1 + $0x10] sm:$0xf]
  %v24 = vld [vmem:[%s1 + $0x14] sm:$0xf]
  %v25 = vld [vmem:[%s1 + $0x18] sm:$0xf]
  %v26 = vld [vmem:[%s1 + $0x1c] sm:$0xf]
  %v27 = vld [vmem:[%s1 + $0x20] sm:$0xf]
  %v28 = vld [vmem:[%s1 + $0x24] sm:$0xf]
  %v29 = vld [vmem:[%s1 + $0x28] sm:$0xf]
  %v30 = vld [vmem:[%s1 + $0x2c] sm:$0xf]
  %v31 = vld [vmem:[%s1 + $0x30] sm:$0xf]
  %v32 = vld [vmem:[%s1 + $0x34] sm:$0xf]
  %v33 = vld [vmem:[%s1 + $0x38] sm:$0xf]
  %v34 = vld [vmem:[%s1 + $0x3c] sm:$0xf]
  %v35 = vld [vmem:[%s1 + $0x40] sm:$0xf]
  %v36 = vld [vmem:[%s1 + $0x44] sm:$0xf]
  %v37 = vld [vmem:[%s1 + $0x48] sm:$0xf]
  %v38 = vld [vmem:[%s1 + $0x4c] sm:$0xf]
  %v39 = vld [vmem:[%s1 + $0x50] sm:$0xf]
  %v40 = vld [vmem:[%s1 + $0x54] sm:$0xf]
  %v41 = vld [vmem:[%s1 + $0x58] sm:$0xf]
  %v42 = vld [vmem:[%s1 + $0x5c] sm:$0xf]
  %v43 = vld [vmem:[%s1 + $0x60] sm:$0xf]
  %v44 = vld [vmem:[%s1 + $0x64] sm:$0xf]
  %v45 = vld [vmem:[%s1 + $0x68] sm:$0xf]
  %v46 = vld [vmem:[%s1 + $0x6c] sm:$0xf]
  %v47 = vld [vmem:[%s1 + $0x70] sm:$0xf]
  %v48 = vld [vmem:[%s1 + $0x74] sm:$0xf]
  %v49 = vld [vmem:[%s1 + $0x78] sm:$0xf]
  %v50 = vld [vmem:[%s1 + $0x7c] sm:$0xf]
  %v51 = vld [vmem:[%s1 + $0x80] sm:$0xf]
  %v52 = vld [vmem:[%s1 + $0x84] sm:$0xf]
  %v53 = vld [vmem:[%s1 + $0x88] sm:$0xf]
  %v54 = vld [vmem:[%s1 + $0x8c] sm:$0xf]
  %v59 = vunpack.c.l.b16 %v15
  %v60 = vunpack.c.h.b16 %v15
  %v61 = vunpack.c.l.b16 %v16
  %v62 = vunpack.c.l.b16 %v17
  %v63 = vunpack.c.h.b16 %v17
  %v64 = vunpack.c.l.b16 %v18
  %v65 = vpack.c.b16 %v62, %v59
  %v66 = vpack.c.b16 %v63, %v60
  %v67 = vpack.c.b16 %v64, %v61
  %v106 = vunpack.c.l.b16 %v19
  %v107 = vunpack.c.l.b16 %v20
  %v108 = vunpack.c.l.b16 %v21
  %v109 = vunpack.c.l.b16 %v22
  %v110 = vunpack.c.l.b16 %v23
  %v111 = vunpack.c.l.b16 %v24
  %v112 = vunpack.c.l.b16 %v25
  %v113 = vunpack.c.l.b16 %v26
  %v114 = vunpack.c.l.b16 %v27
  %v115 = vunpack.c.l.b16 %v28
  %v116 = vunpack.c.l.b16 %v29
  %v117 = vunpack.c.l.b16 %v30
  %v118 = vunpack.c.l.b16 %v31
  %v119 = vunpack.c.l.b16 %v32
  %v120 = vunpack.c.l.b16 %v33
  %v121 = vunpack.c.l.b16 %v34
  %v122 = vunpack.c.l.b16 %v35
  %v123 = vunpack.c.l.b16 %v36
  %v124 = vunpack.c.l.b16 %v37
  %v125 = vunpack.c.l.b16 %v38
  %v126 = vunpack.c.l.b16 %v39
  %v127 = vunpack.c.l.b16 %v40
  %v128 = vunpack.c.l.b16 %v41
  %v129 = vunpack.c.l.b16 %v42
  %v130 = vunpack.c.l.b16 %v43
  %v131 = vunpack.c.l.b16 %v44
  %v132 = vunpack.c.l.b16 %v45
  %v133 = vunpack.c.l.b16 %v46
  %v134 = vunpack.c.l.b16 %v47
  %v135 = vunpack.c.l.b16 %v48
  %v136 = vunpack.c.l.b16 %v49
  %v137 = vunpack.c.l.b16 %v50
  %v138 = vunpack.c.l.b16 %v51
  %v139 = vunpack.c.l.b16 %v52
  %v140 = vunpack.c.l.b16 %v53
  %v141 = vunpack.c.l.b16 %v54
  %v142 = vpack.c.b16 %v107, %v106
  %v143 = vpack.c.b16 %v109, %v108
  %v144 = vpack.c.b16 %v111, %v110
  %v145 = vpack.c.b16 %v113, %v112
  %v146 = vpack.c.b16 %v115, %v114
  %v147 = vpack.c.b16 %v117, %v116
  %v148 = vpack.c.b16 %v119, %v118
  %v149 = vpack.c.b16 %v121, %v120
  %v150 = vpack.c.b16 %v123, %v122
  %v151 = vpack.c.b16 %v125, %v124
  %v152 = vpack.c.b16 %v127, %v126
  %v153 = vpack.c.b16 %v129, %v128
  %v154 = vpack.c.b16 %v131, %v130
  %v155 = vpack.c.b16 %v133, %v132
  %v156 = vpack.c.b16 %v135, %v134
  %v157 = vpack.c.b16 %v137, %v136
  %v158 = vpack.c.b16 %v139, %v138
  %v159 = vpack.c.b16 %v141, %v140
  %vm178 = vcmask 261120
  %v180 = vsel %vm178, %v67, 0
  %182 = vmatprep.subr.bf16.mxu0 0
  %183 = vmatpush1.bf16.msra.mxu0 %v142
  %184 = vmatprep.subr.bf16.mxu0 0
  %185 = vmatpush1.bf16.msra.mxu0 %v143
  %186 = vmatprep.subr.bf16.mxu0 0
  %187 = vmatpush1.bf16.msra.mxu0 %v144
  %188 = vmatprep.subr.bf16.mxu0 0
  %189 = vmatpush1.bf16.msra.mxu0 %v145
  %190 = vmatprep.subr.bf16.mxu0 0
  %191 = vmatpush1.bf16.msra.mxu0 %v146
  %192 = vmatprep.subr.bf16.mxu0 0
  %193 = vmatpush1.bf16.msra.mxu0 %v147
  %194 = vmatprep.subr.bf16.mxu0 0
  %195 = vmatpush1.bf16.msra.mxu0 %v148
  %196 = vmatprep.subr.bf16.mxu0 0
  %197 = vmatpush1.bf16.msra.mxu0 %v149
  %198 = vmatprep.subr.bf16.mxu0 0
  %199 = vmatpush1.bf16.msra.mxu0 %v150
  %200 = vmatprep.subr.bf16.mxu0 0
  %201 = vmatpush1.bf16.msra.mxu0 %v151
  %202 = vmatprep.subr.bf16.mxu0 0
  %203 = vmatpush1.bf16.msra.mxu0 %v152
  %204 = vmatprep.subr.bf16.mxu0 0
  %205 = vmatpush1.bf16.msra.mxu0 %v153
  %206 = vmatprep.subr.bf16.mxu0 0
  %207 = vmatpush1.bf16.msra.mxu0 %v154
  %208 = vmatprep.subr.bf16.mxu0 0
  %209 = vmatpush1.bf16.msra.mxu0 %v155
  %210 = vmatprep.subr.bf16.mxu0 0
  %211 = vmatpush1.bf16.msra.mxu0 %v156
  %212 = vmatprep.subr.bf16.mxu0 0
  %213 = vmatpush1.bf16.msra.mxu0 %v157
  %214 = vmatprep.mubr.bf16.mxu0 %v66
  %215 = vmatmul.mubr.bf16.gmra.mrb[0].mxu0 %v65
  %v216 = vpop.f32.mrb[0].mxu0
  %v217 = vadd.f32 0.0, %v216
  %v218 = vpop.f32.mrb[0].mxu0
  %v219 = vpop.f32.mrb[0].mxu0
  %v220 = vadd.f32 0.0, %v219
  %v221 = vpop.f32.mrb[0].mxu0
  %222 = vdwg.mxu0
  %223 = vmatprep.subr.bf16.mxu0 0
  %224 = vmatpush1.bf16.msra.mxu0 %v158
  %225 = vmatprep.subr.bf16.mxu0 0
  %226 = vmatpush1.bf16.msra.mxu0 %v159
  %227 = vmatprep.subr.bf16.mxu0 0
  %228 = vmatpush1.bf16.msra.mxu0 0
  %229 = vmatprep.subr.bf16.mxu0 0
  %230 = vmatpush1.bf16.msra.mxu0 0
  %231 = vmatprep.subr.bf16.mxu0 0
  %232 = vmatpush1.bf16.msra.mxu0 0
  %233 = vmatprep.subr.bf16.mxu0 0
  %234 = vmatpush1.bf16.msra.mxu0 0
  %235 = vmatprep.subr.bf16.mxu0 0
  %236 = vmatpush1.bf16.msra.mxu0 0
  %237 = vmatprep.subr.bf16.mxu0 0
  %238 = vmatpush1.bf16.msra.mxu0 0
  %239 = vmatprep.subr.bf16.mxu0 0
  %240 = vmatpush1.bf16.msra.mxu0 0
  %241 = vmatprep.subr.bf16.mxu0 0
  %242 = vmatpush1.bf16.msra.mxu0 0
  %243 = vmatprep.subr.bf16.mxu0 0
  %244 = vmatpush1.bf16.msra.mxu0 0
  %245 = vmatprep.subr.bf16.mxu0 0
  %246 = vmatpush1.bf16.msra.mxu0 0
  %247 = vmatprep.subr.bf16.mxu0 0
  %248 = vmatpush1.bf16.msra.mxu0 0
  %249 = vmatprep.subr.bf16.mxu0 0
  %250 = vmatpush1.bf16.msra.mxu0 0
  %251 = vmatprep.subr.bf16.mxu0 0
  %252 = vmatpush1.bf16.msra.mxu0 0
  %253 = vmatprep.subr.bf16.mxu0 0
  %254 = vmatpush1.bf16.msra.mxu0 0
  %255 = vmatprep.mubr.bf16.mxu0 0
  %256 = vmatmul.mubr.bf16.gmra.mrb[0].mxu0 %v180
  %v257 = vpop.f32.mrb[0].mxu0
  %v258 = vadd.f32 %v217, %v257
  %v259 = vpop.f32.mrb[0].mxu0
  %v260 = vpop.f32.mrb[0].mxu0
  %v261 = vadd.f32 %v220, %v260
  %v262 = vpop.f32.mrb[0].mxu0
  %263 = vdwg.mxu0
  %s264 = scalar_lea.vmem %s1, 144
  %v265 = vld [vmem:[%s264] sm:$0xf]
  %v266 = vld [vmem:[%s264 + $0x4] sm:$0xf]
  %v267 = vld [vmem:[%s264 + $0x8] sm:$0xf]
  %v268 = vld [vmem:[%s264 + $0xc] sm:$0xf]
  %v269 = vld [vmem:[%s264 + $0x10] sm:$0xf]
  %v270 = vld [vmem:[%s264 + $0x14] sm:$0xf]
  %v271 = vld [vmem:[%s264 + $0x18] sm:$0xf]
  %v272 = vld [vmem:[%s264 + $0x1c] sm:$0xf]
  %v273 = vld [vmem:[%s264 + $0x20] sm:$0xf]
  %v274 = vld [vmem:[%s264 + $0x24] sm:$0xf]
  %v275 = vld [vmem:[%s264 + $0x28] sm:$0xf]
  %v276 = vld [vmem:[%s264 + $0x2c] sm:$0xf]
  %v277 = vld [vmem:[%s264 + $0x30] sm:$0xf]
  %v278 = vld [vmem:[%s264 + $0x34] sm:$0xf]
  %v279 = vld [vmem:[%s264 + $0x38] sm:$0xf]
  %v280 = vld [vmem:[%s264 + $0x3c] sm:$0xf]
  %v281 = vld [vmem:[%s264 + $0x40] sm:$0xf]
  %v282 = vld [vmem:[%s264 + $0x44] sm:$0xf]
  %v283 = vld [vmem:[%s264 + $0x48] sm:$0xf]
  %v284 = vld [vmem:[%s264 + $0x4c] sm:$0xf]
  %v285 = vld [vmem:[%s264 + $0x50] sm:$0xf]
  %v286 = vld [vmem:[%s264 + $0x54] sm:$0xf]
  %v287 = vld [vmem:[%s264 + $0x58] sm:$0xf]
  %v288 = vld [vmem:[%s264 + $0x5c] sm:$0xf]
  %v289 = vld [vmem:[%s264 + $0x60] sm:$0xf]
  %v290 = vld [vmem:[%s264 + $0x64] sm:$0xf]
  %v291 = vld [vmem:[%s264 + $0x68] sm:$0xf]
  %v292 = vld [vmem:[%s264 + $0x6c] sm:$0xf]
  %v293 = vld [vmem:[%s264 + $0x70] sm:$0xf]
  %v294 = vld [vmem:[%s264 + $0x74] sm:$0xf]
  %v295 = vld [vmem:[%s264 + $0x78] sm:$0xf]
  %v296 = vld [vmem:[%s264 + $0x7c] sm:$0xf]
  %v297 = vld [vmem:[%s264 + $0x80] sm:$0xf]
  %v298 = vld [vmem:[%s264 + $0x84] sm:$0xf]
  %v299 = vld [vmem:[%s264 + $0x88] sm:$0xf]
  %v300 = vld [vmem:[%s264 + $0x8c] sm:$0xf]
  %v337 = vunpack.c.l.b16 %v265
  %v338 = vunpack.c.l.b16 %v266
  %v339 = vunpack.c.l.b16 %v267
  %v340 = vunpack.c.l.b16 %v268
  %v341 = vunpack.c.l.b16 %v269
  %v342 = vunpack.c.l.b16 %v270
  %v343 = vunpack.c.l.b16 %v271
  %v344 = vunpack.c.l.b16 %v272
  %v345 = vunpack.c.l.b16 %v273
  %v346 = vunpack.c.l.b16 %v274
  %v347 = vunpack.c.l.b16 %v275
  %v348 = vunpack.c.l.b16 %v276
  %v349 = vunpack.c.l.b16 %v277
  %v350 = vunpack.c.l.b16 %v278
  %v351 = vunpack.c.l.b16 %v279
  %v352 = vunpack.c.l.b16 %v280
  %v353 = vunpack.c.l.b16 %v281
  %v354 = vunpack.c.l.b16 %v282
  %v355 = vunpack.c.l.b16 %v283
  %v356 = vunpack.c.l.b16 %v284
  %v357 = vunpack.c.l.b16 %v285
  %v358 = vunpack.c.l.b16 %v286
  %v359 = vunpack.c.l.b16 %v287
  %v360 = vunpack.c.l.b16 %v288
  %v361 = vunpack.c.l.b16 %v289
  %v362 = vunpack.c.l.b16 %v290
  %v363 = vunpack.c.l.b16 %v291
  %v364 = vunpack.c.l.b16 %v292
  %v365 = vunpack.c.l.b16 %v293
  %v366 = vunpack.c.l.b16 %v294
  %v367 = vunpack.c.l.b16 %v295
  %v368 = vunpack.c.l.b16 %v296
  %v369 = vunpack.c.l.b16 %v297
  %v370 = vunpack.c.l.b16 %v298
  %v371 = vunpack.c.l.b16 %v299
  %v372 = vunpack.c.l.b16 %v300
  %v373 = vpack.c.b16 %v338, %v337
  %v374 = vpack.c.b16 %v340, %v339
  %v375 = vpack.c.b16 %v342, %v341
  %v376 = vpack.c.b16 %v344, %v343
  %v377 = vpack.c.b16 %v346, %v345
  %v378 = vpack.c.b16 %v348, %v347
  %v379 = vpack.c.b16 %v350, %v349
  %v380 = vpack.c.b16 %v352, %v351
  %v381 = vpack.c.b16 %v354, %v353
  %v382 = vpack.c.b16 %v356, %v355
  %v383 = vpack.c.b16 %v358, %v357
  %v384 = vpack.c.b16 %v360, %v359
  %v385 = vpack.c.b16 %v362, %v361
  %v386 = vpack.c.b16 %v364, %v363
  %v387 = vpack.c.b16 %v366, %v365
  %v388 = vpack.c.b16 %v368, %v367
  %v389 = vpack.c.b16 %v370, %v369
  %v390 = vpack.c.b16 %v372, %v371
  %409 = vmatprep.subr.bf16.mxu0 0
  %410 = vmatpush1.bf16.msra.mxu0 %v373
  %411 = vmatprep.subr.bf16.mxu0 0
  %412 = vmatpush1.bf16.msra.mxu0 %v374
  %413 = vmatprep.subr.bf16.mxu0 0
  %414 = vmatpush1.bf16.msra.mxu0 %v375
  %415 = vmatprep.subr.bf16.mxu0 0
  %416 = vmatpush1.bf16.msra.mxu0 %v376
  %417 = vmatprep.subr.bf16.mxu0 0
  %418 = vmatpush1.bf16.msra.mxu0 %v377
  %419 = vmatprep.subr.bf16.mxu0 0
  %420 = vmatpush1.bf16.msra.mxu0 %v378
  %421 = vmatprep.subr.bf16.mxu0 0
  %422 = vmatpush1.bf16.msra.mxu0 %v379
  %423 = vmatprep.subr.bf16.mxu0 0
  %424 = vmatpush1.bf16.msra.mxu0 %v380
  %425 = vmatprep.subr.bf16.mxu0 0
  %426 = vmatpush1.bf16.msra.mxu0 %v381
  %427 = vmatprep.subr.bf16.mxu0 0
  %428 = vmatpush1.bf16.msra.mxu0 %v382
  %429 = vmatprep.subr.bf16.mxu0 0
  %430 = vmatpush1.bf16.msra.mxu0 %v383
  %431 = vmatprep.subr.bf16.mxu0 0
  %432 = vmatpush1.bf16.msra.mxu0 %v384
  %433 = vmatprep.subr.bf16.mxu0 0
  %434 = vmatpush1.bf16.msra.mxu0 %v385
  %435 = vmatprep.subr.bf16.mxu0 0
  %436 = vmatpush1.bf16.msra.mxu0 %v386
  %437 = vmatprep.subr.bf16.mxu0 0
  %438 = vmatpush1.bf16.msra.mxu0 %v387
  %439 = vmatprep.subr.bf16.mxu0 0
  %440 = vmatpush1.bf16.msra.mxu0 %v388
  %441 = vmatprep.mubr.bf16.mxu0 %v66
  %442 = vmatmul.mubr.bf16.gmra.mrb[0].mxu0 %v65
  %v443 = vpop.f32.mrb[0].mxu0
  %v444 = vadd.f32 0.0, %v443
  %v445 = vpop.f32.mrb[0].mxu0
  %v446 = vpop.f32.mrb[0].mxu0
  %v447 = vadd.f32 0.0, %v446
  %v448 = vpop.f32.mrb[0].mxu0
  %449 = vdwg.mxu0
  %450 = vmatprep.subr.bf16.mxu0 0
  %451 = vmatpush1.bf16.msra.mxu0 %v389
  %452 = vmatprep.subr.bf16.mxu0 0
  %453 = vmatpush1.bf16.msra.mxu0 %v390
  %454 = vmatprep.subr.bf16.mxu0 0
  %455 = vmatpush1.bf16.msra.mxu0 0
  %456 = vmatprep.subr.bf16.mxu0 0
  %457 = vmatpush1.bf16.msra.mxu0 0
  %458 = vmatprep.subr.bf16.mxu0 0
  %459 = vmatpush1.bf16.msra.mxu0 0
  %460 = vmatprep.subr.bf16.mxu0 0
  %461 = vmatpush1.bf16.msra.mxu0 0
  %462 = vmatprep.subr.bf16.mxu0 0
  %463 = vmatpush1.bf16.msra.mxu0 0
  %464 = vmatprep.subr.bf16.mxu0 0
  %465 = vmatpush1.bf16.msra.mxu0 0
  %466 = vmatprep.subr.bf16.mxu0 0
  %467 = vmatpush1.bf16.msra.mxu0 0
  %468 = vmatprep.subr.bf16.mxu0 0
  %469 = vmatpush1.bf16.msra.mxu0 0
  %470 = vmatprep.subr.bf16.mxu0 0
  %471 = vmatpush1.bf16.msra.mxu0 0
  %472 = vmatprep.subr.bf16.mxu0 0
  %473 = vmatpush1.bf16.msra.mxu0 0
  %474 = vmatprep.subr.bf16.mxu0 0
  %475 = vmatpush1.bf16.msra.mxu0 0
  %476 = vmatprep.subr.bf16.mxu0 0
  %477 = vmatpush1.bf16.msra.mxu0 0
  %478 = vmatprep.subr.bf16.mxu0 0
  %479 = vmatpush1.bf16.msra.mxu0 0
  %480 = vmatprep.subr.bf16.mxu0 0
  %481 = vmatpush1.bf16.msra.mxu0 0
  %482 = vmatprep.mubr.bf16.mxu0 0
  %483 = vmatmul.mubr.bf16.gmra.mrb[0].mxu0 %v180
  %v484 = vpop.f32.mrb[0].mxu0
  %v485 = vadd.f32 %v444, %v484
  %v486 = vpop.f32.mrb[0].mxu0
  %v487 = vpop.f32.mrb[0].mxu0
  %v488 = vadd.f32 %v447, %v487
  %v489 = vpop.f32.mrb[0].mxu0
  %490 = vdwg.mxu0
  %s491 = scalar_lea.vmem %s1, 288
  %v492 = vld [vmem:[%s491] sm:$0xf]
  %v493 = vld [vmem:[%s491 + $0x4] sm:$0xf]
  %v494 = vld [vmem:[%s491 + $0x8] sm:$0xf]
  %v495 = vld [vmem:[%s491 + $0xc] sm:$0xf]
  %v496 = vld [vmem:[%s491 + $0x10] sm:$0xf]
  %v497 = vld [vmem:[%s491 + $0x14] sm:$0xf]
  %v498 = vld [vmem:[%s491 + $0x18] sm:$0xf]
  %v499 = vld [vmem:[%s491 + $0x1c] sm:$0xf]
  %v500 = vld [vmem:[%s491 + $0x20] sm:$0xf]
  %v501 = vld [vmem:[%s491 + $0x24] sm:$0xf]
  %v502 = vld [vmem:[%s491 + $0x28] sm:$0xf]
  %v503 = vld [vmem:[%s491 + $0x2c] sm:$0xf]
  %v504 = vld [vmem:[%s491 + $0x30] sm:$0xf]
  %v505 = vld [vmem:[%s491 + $0x34] sm:$0xf]
  %v506 = vld [vmem:[%s491 + $0x38] sm:$0xf]
  %v507 = vld [vmem:[%s491 + $0x3c] sm:$0xf]
  %v508 = vld [vmem:[%s491 + $0x40] sm:$0xf]
  %v509 = vld [vmem:[%s491 + $0x44] sm:$0xf]
  %v510 = vld [vmem:[%s491 + $0x48] sm:$0xf]
  %v511 = vld [vmem:[%s491 + $0x4c] sm:$0xf]
  %v512 = vld [vmem:[%s491 + $0x50] sm:$0xf]
  %v513 = vld [vmem:[%s491 + $0x54] sm:$0xf]
  %v514 = vld [vmem:[%s491 + $0x58] sm:$0xf]
  %v515 = vld [vmem:[%s491 + $0x5c] sm:$0xf]
  %v516 = vld [vmem:[%s491 + $0x60] sm:$0xf]
  %v517 = vld [vmem:[%s491 + $0x64] sm:$0xf]
  %v518 = vld [vmem:[%s491 + $0x68] sm:$0xf]
  %v519 = vld [vmem:[%s491 + $0x6c] sm:$0xf]
  %v520 = vld [vmem:[%s491 + $0x70] sm:$0xf]
  %v521 = vld [vmem:[%s491 + $0x74] sm:$0xf]
  %v522 = vld [vmem:[%s491 + $0x78] sm:$0xf]
  %v523 = vld [vmem:[%s491 + $0x7c] sm:$0xf]
  %v524 = vld [vmem:[%s491 + $0x80] sm:$0xf]
  %v525 = vld [vmem:[%s491 + $0x84] sm:$0xf]
  %v526 = vld [vmem:[%s491 + $0x88] sm:$0xf]
  %v527 = vld [vmem:[%s491 + $0x8c] sm:$0xf]
  %v564 = vunpack.c.l.b16 %v492
  %v565 = vunpack.c.l.b16 %v493
  %v566 = vunpack.c.l.b16 %v494
  %v567 = vunpack.c.l.b16 %v495
  %v568 = vunpack.c.l.b16 %v496
  %v569 = vunpack.c.l.b16 %v497
  %v570 = vunpack.c.l.b16 %v498
  %v571 = vunpack.c.l.b16 %v499
  %v572 = vunpack.c.l.b16 %v500
  %v573 = vunpack.c.l.b16 %v501
  %v574 = vunpack.c.l.b16 %v502
  %v575 = vunpack.c.l.b16 %v503
  %v576 = vunpack.c.l.b16 %v504
  %v577 = vunpack.c.l.b16 %v505
  %v578 = vunpack.c.l.b16 %v506
  %v579 = vunpack.c.l.b16 %v507
  %v580 = vunpack.c.l.b16 %v508
  %v581 = vunpack.c.l.b16 %v509
  %v582 = vunpack.c.l.b16 %v510
  %v583 = vunpack.c.l.b16 %v511
  %v584 = vunpack.c.l.b16 %v512
  %v585 = vunpack.c.l.b16 %v513
  %v586 = vunpack.c.l.b16 %v514
  %v587 = vunpack.c.l.b16 %v515
  %v588 = vunpack.c.l.b16 %v516
  %v589 = vunpack.c.l.b16 %v517
  %v590 = vunpack.c.l.b16 %v518
  %v591 = vunpack.c.l.b16 %v519
  %v592 = vunpack.c.l.b16 %v520
  %v593 = vunpack.c.l.b16 %v521
  %v594 = vunpack.c.l.b16 %v522
  %v595 = vunpack.c.l.b16 %v523
  %v596 = vunpack.c.l.b16 %v524
  %v597 = vunpack.c.l.b16 %v525
  %v598 = vunpack.c.l.b16 %v526
  %v599 = vunpack.c.l.b16 %v527
  %v600 = vpack.c.b16 %v565, %v564
  %v601 = vpack.c.b16 %v567, %v566
  %v602 = vpack.c.b16 %v569, %v568
  %v603 = vpack.c.b16 %v571, %v570
  %v604 = vpack.c.b16 %v573, %v572
  %v605 = vpack.c.b16 %v575, %v574
  %v606 = vpack.c.b16 %v577, %v576
  %v607 = vpack.c.b16 %v579, %v578
  %v608 = vpack.c.b16 %v581, %v580
  %v609 = vpack.c.b16 %v583, %v582
  %v610 = vpack.c.b16 %v585, %v584
  %v611 = vpack.c.b16 %v587, %v586
  %v612 = vpack.c.b16 %v589, %v588
  %v613 = vpack.c.b16 %v591, %v590
  %v614 = vpack.c.b16 %v593, %v592
  %v615 = vpack.c.b16 %v595, %v594
  %v616 = vpack.c.b16 %v597, %v596
  %v617 = vpack.c.b16 %v599, %v598
  %636 = vmatprep.subr.bf16.mxu0 0
  %637 = vmatpush1.bf16.msra.mxu0 %v600
  %638 = vmatprep.subr.bf16.mxu0 0
  %639 = vmatpush1.bf16.msra.mxu0 %v601
  %640 = vmatprep.subr.bf16.mxu0 0
  %641 = vmatpush1.bf16.msra.mxu0 %v602
  %642 = vmatprep.subr.bf16.mxu0 0
  %643 = vmatpush1.bf16.msra.mxu0 %v603
  %644 = vmatprep.subr.bf16.mxu0 0
  %645 = vmatpush1.bf16.msra.mxu0 %v604
  %646 = vmatprep.subr.bf16.mxu0 0
  %647 = vmatpush1.bf16.msra.mxu0 %v605
  %648 = vmatprep.subr.bf16.mxu0 0
  %649 = vmatpush1.bf16.msra.mxu0 %v606
  %650 = vmatprep.subr.bf16.mxu0 0
  %651 = vmatpush1.bf16.msra.mxu0 %v607
  %652 = vmatprep.subr.bf16.mxu0 0
  %653 = vmatpush1.bf16.msra.mxu0 %v608
  %654 = vmatprep.subr.bf16.mxu0 0
  %655 = vmatpush1.bf16.msra.mxu0 %v609
  %656 = vmatprep.subr.bf16.mxu0 0
  %657 = vmatpush1.bf16.msra.mxu0 %v610
  %658 = vmatprep.subr.bf16.mxu0 0
  %659 = vmatpush1.bf16.msra.mxu0 %v611
  %660 = vmatprep.subr.bf16.mxu0 0
  %661 = vmatpush1.bf16.msra.mxu0 %v612
  %662 = vmatprep.subr.bf16.mxu0 0
  %663 = vmatpush1.bf16.msra.mxu0 %v613
  %664 = vmatprep.subr.bf16.mxu0 0
  %665 = vmatpush1.bf16.msra.mxu0 %v614
  %666 = vmatprep.subr.bf16.mxu0 0
  %667 = vmatpush1.bf16.msra.mxu0 %v615
  %668 = vmatprep.mubr.bf16.mxu0 %v66
  %669 = vmatmul.mubr.bf16.gmra.mrb[0].mxu0 %v65
  %v670 = vpop.f32.mrb[0].mxu0
  %v671 = vadd.f32 0.0, %v670
  %v672 = vpop.f32.mrb[0].mxu0
  %v673 = vpop.f32.mrb[0].mxu0
  %v674 = vadd.f32 0.0, %v673
  %v675 = vpop.f32.mrb[0].mxu0
  %676 = vdwg.mxu0
  %677 = vmatprep.subr.bf16.mxu0 0
  %678 = vmatpush1.bf16.msra.mxu0 %v616
  %679 = vmatprep.subr.bf16.mxu0 0
  %680 = vmatpush1.bf16.msra.mxu0 %v617
  %681 = vmatprep.subr.bf16.mxu0 0
  %682 = vmatpush1.bf16.msra.mxu0 0
  %683 = vmatprep.subr.bf16.mxu0 0
  %684 = vmatpush1.bf16.msra.mxu0 0
  %685 = vmatprep.subr.bf16.mxu0 0
  %686 = vmatpush1.bf16.msra.mxu0 0
  %687 = vmatprep.subr.bf16.mxu0 0
  %688 = vmatpush1.bf16.msra.mxu0 0
  %689 = vmatprep.subr.bf16.mxu0 0
  %690 = vmatpush1.bf16.msra.mxu0 0
  %691 = vmatprep.subr.bf16.mxu0 0
  %692 = vmatpush1.bf16.msra.mxu0 0
  %693 = vmatprep.subr.bf16.mxu0 0
  %694 = vmatpush1.bf16.msra.mxu0 0
  %695 = vmatprep.subr.bf16.mxu0 0
  %696 = vmatpush1.bf16.msra.mxu0 0
  %697 = vmatprep.subr.bf16.mxu0 0
  %698 = vmatpush1.bf16.msra.mxu0 0
  %699 = vmatprep.subr.bf16.mxu0 0
  %700 = vmatpush1.bf16.msra.mxu0 0
  %701 = vmatprep.subr.bf16.mxu0 0
  %702 = vmatpush1.bf16.msra.mxu0 0
  %703 = vmatprep.subr.bf16.mxu0 0
  %704 = vmatpush1.bf16.msra.mxu0 0
  %705 = vmatprep.subr.bf16.mxu0 0
  %706 = vmatpush1.bf16.msra.mxu0 0
  %707 = vmatprep.subr.bf16.mxu0 0
  %708 = vmatpush1.bf16.msra.mxu0 0
  %709 = vmatprep.mubr.bf16.mxu0 0
  %710 = vmatmul.mubr.bf16.gmra.mrb[0].mxu0 %v180
  %v711 = vpop.f32.mrb[0].mxu0
  %v712 = vadd.f32 %v671, %v711
  %v713 = vpop.f32.mrb[0].mxu0
  %v714 = vpop.f32.mrb[0].mxu0
  %v715 = vadd.f32 %v674, %v714
  %v716 = vpop.f32.mrb[0].mxu0
  %717 = vdwg.mxu0
  %s718 = scalar_lea.vmem %s1, 432
  %v719 = vld [vmem:[%s718] sm:$0xf]
  %v720 = vld [vmem:[%s718 + $0x4] sm:$0xf]
  %v721 = vld [vmem:[%s718 + $0x8] sm:$0xf]
  %v722 = vld [vmem:[%s718 + $0xc] sm:$0xf]
  %v723 = vld [vmem:[%s718 + $0x10] sm:$0xf]
  %v724 = vld [vmem:[%s718 + $0x14] sm:$0xf]
  %v725 = vld [vmem:[%s718 + $0x18] sm:$0xf]
  %v726 = vld [vmem:[%s718 + $0x1c] sm:$0xf]
  %v727 = vld [vmem:[%s718 + $0x20] sm:$0xf]
  %v728 = vld [vmem:[%s718 + $0x24] sm:$0xf]
  %v729 = vld [vmem:[%s718 + $0x28] sm:$0xf]
  %v730 = vld [vmem:[%s718 + $0x2c] sm:$0xf]
  %v731 = vld [vmem:[%s718 + $0x30] sm:$0xf]
  %v732 = vld [vmem:[%s718 + $0x34] sm:$0xf]
  %v733 = vld [vmem:[%s718 + $0x38] sm:$0xf]
  %v734 = vld [vmem:[%s718 + $0x3c] sm:$0xf]
  %v735 = vld [vmem:[%s718 + $0x40] sm:$0xf]
  %v736 = vld [vmem:[%s718 + $0x44] sm:$0xf]
  %v737 = vld [vmem:[%s718 + $0x48] sm:$0xf]
  %v738 = vld [vmem:[%s718 + $0x4c] sm:$0xf]
  %v739 = vld [vmem:[%s718 + $0x50] sm:$0xf]
  %v740 = vld [vmem:[%s718 + $0x54] sm:$0xf]
  %v741 = vld [vmem:[%s718 + $0x58] sm:$0xf]
  %v742 = vld [vmem:[%s718 + $0x5c] sm:$0xf]
  %v743 = vld [vmem:[%s718 + $0x60] sm:$0xf]
  %v744 = vld [vmem:[%s718 + $0x64] sm:$0xf]
  %v745 = vld [vmem:[%s718 + $0x68] sm:$0xf]
  %v746 = vld [vmem:[%s718 + $0x6c] sm:$0xf]
  %v747 = vld [vmem:[%s718 + $0x70] sm:$0xf]
  %v748 = vld [vmem:[%s718 + $0x74] sm:$0xf]
  %v749 = vld [vmem:[%s718 + $0x78] sm:$0xf]
  %v750 = vld [vmem:[%s718 + $0x7c] sm:$0xf]
  %v751 = vld [vmem:[%s718 + $0x80] sm:$0xf]
  %v752 = vld [vmem:[%s718 + $0x84] sm:$0xf]
  %v753 = vld [vmem:[%s718 + $0x88] sm:$0xf]
  %v754 = vld [vmem:[%s718 + $0x8c] sm:$0xf]
  %v791 = vunpack.c.l.b16 %v719
  %v792 = vunpack.c.l.b16 %v720
  %v793 = vunpack.c.l.b16 %v721
  %v794 = vunpack.c.l.b16 %v722
  %v795 = vunpack.c.l.b16 %v723
  %v796 = vunpack.c.l.b16 %v724
  %v797 = vunpack.c.l.b16 %v725
  %v798 = vunpack.c.l.b16 %v726
  %v799 = vunpack.c.l.b16 %v727
  %v800 = vunpack.c.l.b16 %v728
  %v801 = vunpack.c.l.b16 %v729
  %v802 = vunpack.c.l.b16 %v730
  %v803 = vunpack.c.l.b16 %v731
  %v804 = vunpack.c.l.b16 %v732
  %v805 = vunpack.c.l.b16 %v733
  %v806 = vunpack.c.l.b16 %v734
  %v807 = vunpack.c.l.b16 %v735
  %v808 = vunpack.c.l.b16 %v736
  %v809 = vunpack.c.l.b16 %v737
  %v810 = vunpack.c.l.b16 %v738
  %v811 = vunpack.c.l.b16 %v739
  %v812 = vunpack.c.l.b16 %v740
  %v813 = vunpack.c.l.b16 %v741
  %v814 = vunpack.c.l.b16 %v742
  %v815 = vunpack.c.l.b16 %v743
  %v816 = vunpack.c.l.b16 %v744
  %v817 = vunpack.c.l.b16 %v745
  %v818 = vunpack.c.l.b16 %v746
  %v819 = vunpack.c.l.b16 %v747
  %v820 = vunpack.c.l.b16 %v748
  %v821 = vunpack.c.l.b16 %v749
  %v822 = vunpack.c.l.b16 %v750
  %v823 = vunpack.c.l.b16 %v751
  %v824 = vunpack.c.l.b16 %v752
  %v825 = vunpack.c.l.b16 %v753
  %v826 = vunpack.c.l.b16 %v754
  %v827 = vpack.c.b16 %v792, %v791
  %v828 = vpack.c.b16 %v794, %v793
  %v829 = vpack.c.b16 %v796, %v795
  %v830 = vpack.c.b16 %v798, %v797
  %v831 = vpack.c.b16 %v800, %v799
  %v832 = vpack.c.b16 %v802, %v801
  %v833 = vpack.c.b16 %v804, %v803
  %v834 = vpack.c.b16 %v806, %v805
  %v835 = vpack.c.b16 %v808, %v807
  %v836 = vpack.c.b16 %v810, %v809
  %v837 = vpack.c.b16 %v812, %v811
  %v838 = vpack.c.b16 %v814, %v813
  %v839 = vpack.c.b16 %v816, %v815
  %v840 = vpack.c.b16 %v818, %v817
  %v841 = vpack.c.b16 %v820, %v819
  %v842 = vpack.c.b16 %v822, %v821
  %v843 = vpack.c.b16 %v824, %v823
  %v844 = vpack.c.b16 %v826, %v825
  %863 = vmatprep.subr.bf16.mxu0 0
  %864 = vmatpush1.bf16.msra.mxu0 %v827
  %865 = vmatprep.subr.bf16.mxu0 0
  %866 = vmatpush1.bf16.msra.mxu0 %v828
  %867 = vmatprep.subr.bf16.mxu0 0
  %868 = vmatpush1.bf16.msra.mxu0 %v829
  %869 = vmatprep.subr.bf16.mxu0 0
  %870 = vmatpush1.bf16.msra.mxu0 %v830
  %871 = vmatprep.subr.bf16.mxu0 0
  %872 = vmatpush1.bf16.msra.mxu0 %v831
  %873 = vmatprep.subr.bf16.mxu0 0
  %874 = vmatpush1.bf16.msra.mxu0 %v832
  %875 = vmatprep.subr.bf16.mxu0 0
  %876 = vmatpush1.bf16.msra.mxu0 %v833
  %877 = vmatprep.subr.bf16.mxu0 0
  %878 = vmatpush1.bf16.msra.mxu0 %v834
  %879 = vmatprep.subr.bf16.mxu0 0
  %880 = vmatpush1.bf16.msra.mxu0 %v835
  %881 = vmatprep.subr.bf16.mxu0 0
  %882 = vmatpush1.bf16.msra.mxu0 %v836
  %883 = vmatprep.subr.bf16.mxu0 0
  %884 = vmatpush1.bf16.msra.mxu0 %v837
  %885 = vmatprep.subr.bf16.mxu0 0
  %886 = vmatpush1.bf16.msra.mxu0 %v838
  %887 = vmatprep.subr.bf16.mxu0 0
  %888 = vmatpush1.bf16.msra.mxu0 %v839
  %889 = vmatprep.subr.bf16.mxu0 0
  %890 = vmatpush1.bf16.msra.mxu0 %v840
  %891 = vmatprep.subr.bf16.mxu0 0
  %892 = vmatpush1.bf16.msra.mxu0 %v841
  %893 = vmatprep.subr.bf16.mxu0 0
  %894 = vmatpush1.bf16.msra.mxu0 %v842
  %895 = vmatprep.mubr.bf16.mxu0 %v66
  %896 = vmatmul.mubr.bf16.gmra.mrb[0].mxu0 %v65
  %v897 = vpop.f32.mrb[0].mxu0
  %v898 = vadd.f32 0.0, %v897
  %v899 = vpop.f32.mrb[0].mxu0
  %v900 = vpop.f32.mrb[0].mxu0
  %v901 = vadd.f32 0.0, %v900
  %v902 = vpop.f32.mrb[0].mxu0
  %903 = vdwg.mxu0
  %904 = vmatprep.subr.bf16.mxu0 0
  %905 = vmatpush1.bf16.msra.mxu0 %v843
  %906 = vmatprep.subr.bf16.mxu0 0
  %907 = vmatpush1.bf16.msra.mxu0 %v844
  %908 = vmatprep.subr.bf16.mxu0 0
  %909 = vmatpush1.bf16.msra.mxu0 0
  %910 = vmatprep.subr.bf16.mxu0 0
  %911 = vmatpush1.bf16.msra.mxu0 0
  %912 = vmatprep.subr.bf16.mxu0 0
  %913 = vmatpush1.bf16.msra.mxu0 0
  %914 = vmatprep.subr.bf16.mxu0 0
  %915 = vmatpush1.bf16.msra.mxu0 0
  %916 = vmatprep.subr.bf16.mxu0 0
  %917 = vmatpush1.bf16.msra.mxu0 0
  %918 = vmatprep.subr.bf16.mxu0 0
  %919 = vmatpush1.bf16.msra.mxu0 0
  %920 = vmatprep.subr.bf16.mxu0 0
  %921 = vmatpush1.bf16.msra.mxu0 0
  %922 = vmatprep.subr.bf16.mxu0 0
  %923 = vmatpush1.bf16.msra.mxu0 0
  %924 = vmatprep.subr.bf16.mxu0 0
  %925 = vmatpush1.bf16.msra.mxu0 0
  %926 = vmatprep.subr.bf16.mxu0 0
  %927 = vmatpush1.bf16.msra.mxu0 0
  %928 = vmatprep.subr.bf16.mxu0 0
  %929 = vmatpush1.bf16.msra.mxu0 0
  %930 = vmatprep.subr.bf16.mxu0 0
  %931 = vmatpush1.bf16.msra.mxu0 0
  %932 = vmatprep.subr.bf16.mxu0 0
  %933 = vmatpush1.bf16.msra.mxu0 0
  %934 = vmatprep.subr.bf16.mxu0 0
  %935 = vmatpush1.bf16.msra.mxu0 0
  %936 = vmatprep.mubr.bf16.mxu0 0
  %937 = vmatmul.mubr.bf16.gmra.mrb[0].mxu0 %v180
  %v938 = vpop.f32.mrb[0].mxu0
  %v939 = vadd.f32 %v898, %v938
  %v940 = vpop.f32.mrb[0].mxu0
  %v941 = vpop.f32.mrb[0].mxu0
  %v942 = vadd.f32 %v901, %v941
  %v943 = vpop.f32.mrb[0].mxu0
  %944 = vdwg.mxu0
  %v945 = vmax.f32 %v258, %v485
  %v946 = vmax.f32 %v261, %v488
  %v947 = vmax.f32 %v712, %v939
  %v948 = vmax.f32 %v715, %v942
  %v949 = vmax.f32 %v945, %v947
  %v950 = vmax.f32 %v946, %v948
  %v951 = vld [vmem:[%s2] sm:$0xff]
  %v952 = vld [vmem:[%s2 + $0x8] sm:$0xff]
  %954 = vset.pattern.permute.xlu0 0
  %955 = vperm.xlu0 %954, %v951
  %v956 = vpop.permute.xlu0 %955
  %959 = vset.pattern.permute.xlu0 0
  %960 = vperm.xlu0 %959, %v952
  %v961 = vpop.permute.xlu0 %960
  %v963 = vadd.f32 %v949, %v956
  %v964 = vadd.f32 %v950, %v961
  %v965 = vmax.f32 %v963, 0.0
  %v966 = vmax.f32 %v964, 0.0
  %vm967 = vcmask 801792
  %968 = vst.msk [vmem:[%s3] sm:$0xff] %vm967, %v965
  %969 = vst.msk [vmem:[%s3 + $0x8] sm:$0xff] %vm967, %v966
  // Predicated region
  $region14: #{conv_denoiser_forward.8} parent=0 // pred_check
    _
  $region15: #{conv_denoiser_forward.8} parent=0 // pred_check_branch
    %971 = sbr.rel (0) target = $region17
  $region16: #{conv_denoiser_forward.8} parent=0 // pred_region
    _
  $region17: #{conv_denoiser_forward.8} parent=0 // pred_fallthru
    _
  // Predicated region
  $region18: #{conv_denoiser_forward.8} parent=0 // pred_check
    _
  $region19: #{conv_denoiser_forward.8} parent=0 // pred_check_branch
    %973 = sbr.rel (0) target = $region21
  $region20: #{conv_denoiser_forward.8} parent=0 // pred_region
    _
  $region21: #{conv_denoiser_forward.8} parent=0 // pred_fallthru
    _

// kernel: conv_denoiser_forward.10
$region0: #{conv_denoiser_forward.10}
  #allocation0 [shape = 'u32[]', space=smem, size = 0x4, offset = 0x4, fixed_abs, tag = 'smem constant byte address 0x4 - core index']
  #allocation1 [shape = 'u32[144,128]{1,0:T(1,128)}', space=vmem, size = 0x12000, scoped, tag = 'internal scratch']
  %s0 = inlined_call_operand.vmem [shape: bf16[72,8], index: 0, kind: input, shape index: {}]
  %s1 = inlined_call_operand.vmem [shape: bf16[8,18], index: 1, kind: input, shape index: {}]
  %s2 = inlined_call_operand.vmem [shape: f32[72,1], index: 2, kind: input, shape index: {}]
  %s3 = inlined_call_operand.vmem [shape: f32[72,18], index: 3, kind: output, shape index: {}]
  %s4 = sld [smem:[#allocation0]]
  $region22: #{conv_denoiser_forward.10} parent=0
    _
  %s6 = ssub.s32 1, %s4
  %s7 = scalar_select 0, %s6, %s4
  // Predicated region
  $region2: #{conv_denoiser_forward.10} parent=0 // pred_check
    _
  $region3: #{conv_denoiser_forward.10} parent=0 // pred_check_branch
    %9 = sbr.rel (0) target = $region5
  $region4: #{conv_denoiser_forward.10} parent=0 // pred_region
    _
  $region5: #{conv_denoiser_forward.10} parent=0 // pred_fallthru
    _
  // Predicated region
  $region6: #{conv_denoiser_forward.10} parent=0 // pred_check
    _
  $region7: #{conv_denoiser_forward.10} parent=0 // pred_check_branch
    %11 = sbr.rel (0) target = $region9
  $region8: #{conv_denoiser_forward.10} parent=0 // pred_region
    _
  $region9: #{conv_denoiser_forward.10} parent=0 // pred_fallthru
    _
  // Predicated region
  $region10: #{conv_denoiser_forward.10} parent=0 // pred_check
    _
  $region11: #{conv_denoiser_forward.10} parent=0 // pred_check_branch
    %13 = sbr.rel (0) target = $region13
  $region12: #{conv_denoiser_forward.10} parent=0 // pred_region
    _
  $region13: #{conv_denoiser_forward.10} parent=0 // pred_fallthru
    _
  %v15 = vld [vmem:[%s0] sm:$0xf]
  %v16 = vld [vmem:[%s0 + $0x4] sm:$0xf]
  %v17 = vld [vmem:[%s0 + $0x8] sm:$0xf]
  %v18 = vld [vmem:[%s0 + $0xc] sm:$0xf]
  %v19 = vld [vmem:[%s0 + $0x10] sm:$0xf]
  %v20 = vld [vmem:[%s0 + $0x14] sm:$0xf]
  %v21 = vld [vmem:[%s0 + $0x18] sm:$0xf]
  %v22 = vld [vmem:[%s0 + $0x1c] sm:$0xf]
  %v23 = vld [vmem:[%s0 + $0x20] sm:$0xf]
  %v24 = vld [vmem:[%s1] sm:$0xf]
  %v25 = vld [vmem:[%s2] sm:$0xff]
  %v26 = vld [vmem:[%s2 + $0x8] sm:$0xff]
  %v27 = vld [vmem:[%s2 + $0x10] sm:$0xff]
  %v28 = vld [vmem:[%s2 + $0x18] sm:$0xff]
  %v29 = vld [vmem:[%s2 + $0x20] sm:$0xff]
  %v30 = vld [vmem:[%s2 + $0x28] sm:$0xff]
  %v31 = vld [vmem:[%s2 + $0x30] sm:$0xff]
  %v32 = vld [vmem:[%s2 + $0x38] sm:$0xff]
  %v33 = vld [vmem:[%s2 + $0x40] sm:$0xff]
  %35 = vset.pattern.permute.xlu0 0
  %36 = vperm.xlu0 %35, %v25
  %v37 = vpop.permute.xlu0 %36
  %40 = vset.pattern.permute.xlu0 0
  %41 = vperm.xlu0 %40, %v26
  %v42 = vpop.permute.xlu0 %41
  %45 = vset.pattern.permute.xlu0 0
  %46 = vperm.xlu0 %45, %v27
  %v47 = vpop.permute.xlu0 %46
  %50 = vset.pattern.permute.xlu0 0
  %51 = vperm.xlu0 %50, %v28
  %v52 = vpop.permute.xlu0 %51
  %55 = vset.pattern.permute.xlu0 0
  %56 = vperm.xlu0 %55, %v29
  %v57 = vpop.permute.xlu0 %56
  %60 = vset.pattern.permute.xlu0 0
  %61 = vperm.xlu0 %60, %v30
  %v62 = vpop.permute.xlu0 %61
  %65 = vset.pattern.permute.xlu0 0
  %66 = vperm.xlu0 %65, %v31
  %v67 = vpop.permute.xlu0 %66
  %70 = vset.pattern.permute.xlu0 0
  %71 = vperm.xlu0 %70, %v32
  %v72 = vpop.permute.xlu0 %71
  %75 = vset.pattern.permute.xlu0 0
  %76 = vperm.xlu0 %75, %v33
  %v77 = vpop.permute.xlu0 %76
  %v88 = vunpack.c.l.b16 %v15
  %v89 = vunpack.c.l.b16 %v16
  %v90 = vunpack.c.l.b16 %v17
  %v91 = vunpack.c.l.b16 %v18
  %v92 = vunpack.c.l.b16 %v19
  %v93 = vunpack.c.l.b16 %v20
  %v94 = vunpack.c.l.b16 %v21
  %v95 = vunpack.c.l.b16 %v22
  %v96 = vunpack.c.l.b16 %v23
  %v97 = vpack.c.b16 %v89, %v88
  %v98 = vpack.c.b16 %v91, %v90
  %v99 = vpack.c.b16 %v93, %v92
  %v100 = vpack.c.b16 %v95, %v94
  %v101 = vpack.c.b16 %v96, %v96
  %vm102 = vcmask 64512
  %v104 = vsel %vm102, %v97, 0
  %v107 = vsel %vm102, %v98, 0
  %v110 = vsel %vm102, %v99, 0
  %v113 = vsel %vm102, %v100, 0
  %v116 = vsel %vm102, %v101, 0
  %vm118 = vcmask 1043456
  %v120 = vsel %vm118, %v24, 0
  %122 = vmatprep.subr.bf16.mxu0 0
  %123 = vmatpush1.bf16.msra.mxu0 %v120
  %124 = vmatprep.subr.bf16.mxu0 0
  %125 = vmatpush1.bf16.msra.mxu0 0
  %126 = vmatprep.subr.bf16.mxu0 0
  %127 = vmatpush1.bf16.msra.mxu0 0
  %128 = vmatprep.subr.bf16.mxu0 0
  %129 = vmatpush1.bf16.msra.mxu0 0
  %130 = vmatprep.subr.bf16.mxu0 0
  %131 = vmatpush1.bf16.msra.mxu0 0
  %132 = vmatprep.subr.bf16.mxu0 0
  %133 = vmatpush1.bf16.msra.mxu0 0
  %134 = vmatprep.subr.bf16.mxu0 0
  %135 = vmatpush1.bf16.msra.mxu0 0
  %136 = vmatprep.subr.bf16.mxu0 0
  %137 = vmatpush1.bf16.msra.mxu0 0
  %138 = vmatprep.subr.bf16.mxu0 0
  %139 = vmatpush1.bf16.msra.mxu0 0
  %140 = vmatprep.subr.bf16.mxu0 0
  %141 = vmatpush1.bf16.msra.mxu0 0
  %142 = vmatprep.subr.bf16.mxu0 0
  %143 = vmatpush1.bf16.msra.mxu0 0
  %144 = vmatprep.subr.bf16.mxu0 0
  %145 = vmatpush1.bf16.msra.mxu0 0
  %146 = vmatprep.subr.bf16.mxu0 0
  %147 = vmatpush1.bf16.msra.mxu0 0
  %148 = vmatprep.subr.bf16.mxu0 0
  %149 = vmatpush1.bf16.msra.mxu0 0
  %150 = vmatprep.subr.bf16.mxu0 0
  %151 = vmatpush1.bf16.msra.mxu0 0
  %152 = vmatprep.subr.bf16.mxu0 0
  %153 = vmatpush1.bf16.msra.mxu0 0
  %154 = vmatprep.mubr.bf16.mxu0 0
  %155 = vmatmul.mubr.bf16.gmra.mrb[0].mxu0 %v104
  %v156 = vpop.f32.mrb[0].mxu0
  %v157 = vadd.f32 %v37, %v156
  %v158 = vpop.f32.mrb[0].mxu0
  %v159 = vpop.f32.mrb[0].mxu0
  %v160 = vadd.f32 %v42, %v159
  %v161 = vpop.f32.mrb[0].mxu0
  %162 = vmatprep.mubr.bf16.mxu0 0
  %163 = vmatmul.mubr.bf16.gmra.mrb[0].mxu0 %v107
  %v164 = vpop.f32.mrb[0].mxu0
  %v165 = vadd.f32 %v47, %v164
  %v166 = vpop.f32.mrb[0].mxu0
  %v167 = vpop.f32.mrb[0].mxu0
  %v168 = vadd.f32 %v52, %v167
  %v169 = vpop.f32.mrb[0].mxu0
  %170 = vmatprep.mubr.bf16.mxu0 0
  %171 = vmatmul.mubr.bf16.gmra.mrb[0].mxu0 %v110
  %v172 = vpop.f32.mrb[0].mxu0
  %v173 = vadd.f32 %v57, %v172
  %v174 = vpop.f32.mrb[0].mxu0
  %v175 = vpop.f32.mrb[0].mxu0
  %v176 = vadd.f32 %v62, %v175
  %v177 = vpop.f32.mrb[0].mxu0
  %178 = vmatprep.mubr.bf16.mxu0 0
  %179 = vmatmul.mubr.bf16.gmra.mrb[0].mxu0 %v113
  %v180 = vpop.f32.mrb[0].mxu0
  %v181 = vadd.f32 %v67, %v180
  %v182 = vpop.f32.mrb[0].mxu0
  %v183 = vpop.f32.mrb[0].mxu0
  %v184 = vadd.f32 %v72, %v183
  %v185 = vpop.f32.mrb[0].mxu0
  %186 = vmatprep.mubr.bf16.mxu0 0
  %187 = vmatmul.mubr.bf16.gmra.mrb[0].mxu0 %v116
  %v188 = vpop.f32.mrb[0].mxu0
  %v189 = vadd.f32 %v77, %v188
  %v190 = vpop.f32.mrb[0].mxu0
  %v191 = vpop.f32.mrb[0].mxu0
  %v192 = vpop.f32.mrb[0].mxu0
  %193 = vdwg.mxu0
  %vm194 = vcmask 146432
  %195 = vst.msk [vmem:[%s3] sm:$0xff] %vm194, %v157
  %196 = vst.msk [vmem:[%s3 + $0x8] sm:$0xff] %vm194, %v160
  %197 = vst.msk [vmem:[%s3 + $0x10] sm:$0xff] %vm194, %v165
  %198 = vst.msk [vmem:[%s3 + $0x18] sm:$0xff] %vm194, %v168
  %199 = vst.msk [vmem:[%s3 + $0x20] sm:$0xff] %vm194, %v173
  %200 = vst.msk [vmem:[%s3 + $0x28] sm:$0xff] %vm194, %v176
  %201 = vst.msk [vmem:[%s3 + $0x30] sm:$0xff] %vm194, %v181
  %202 = vst.msk [vmem:[%s3 + $0x38] sm:$0xff] %vm194, %v184
  %203 = vst.msk [vmem:[%s3 + $0x40] sm:$0xff] %vm194, %v189
  // Predicated region
  $region14: #{conv_denoiser_forward.10} parent=0 // pred_check
    _
  $region15: #{conv_denoiser_forward.10} parent=0 // pred_check_branch
    %205 = sbr.rel (0) target = $region17
  $region16: #{conv_denoiser_forward.10} parent=0 // pred_region
    _
  $region17: #{conv_denoiser_forward.10} parent=0 // pred_fallthru
    _
  // Predicated region
  $region18: #{conv_denoiser_forward.10} parent=0 // pred_check
    _
  $region19: #{conv_denoiser_forward.10} parent=0 // pred_check_branch
    %207 = sbr.rel (0) target = $region21
  $region20: #{conv_denoiser_forward.10} parent=0 // pred_region
    _
  $region21: #{conv_denoiser_forward.10} parent=0 // pred_fallthru
    _

// kernel: conv_denoiser_forward.9
$region0: #{conv_denoiser_forward.9}
  #allocation0 [shape = 'u32[]', space=smem, size = 0x4, offset = 0x4, fixed_abs, tag = 'smem constant byte address 0x4 - core index']
  #allocation1 [shape = 'u32[144,128]{1,0:T(1,128)}', space=vmem, size = 0x12000, scoped, tag = 'internal scratch']
  %s0 = inlined_call_operand.vmem [shape: bf16[8,144], index: 0, kind: input, shape index: {}]
  %s1 = inlined_call_operand.vmem [shape: bf16[4,144,18], index: 1, kind: input, shape index: {}]
  %s2 = inlined_call_operand.vmem [shape: f32[8,1], index: 2, kind: input, shape index: {}]
  %s3 = inlined_call_operand.vmem [shape: f32[8,18], index: 3, kind: output, shape index: {}]
  %s4 = sld [smem:[#allocation0]]
  $region22: #{conv_denoiser_forward.9} parent=0
    _
  %s6 = ssub.s32 1, %s4
  %s7 = scalar_select 0, %s6, %s4
  // Predicated region
  $region2: #{conv_denoiser_forward.9} parent=0 // pred_check
    _
  $region3: #{conv_denoiser_forward.9} parent=0 // pred_check_branch
    %9 = sbr.rel (0) target = $region5
  $region4: #{conv_denoiser_forward.9} parent=0 // pred_region
    _
  $region5: #{conv_denoiser_forward.9} parent=0 // pred_fallthru
    _
  // Predicated region
  $region6: #{conv_denoiser_forward.9} parent=0 // pred_check
    _
  $region7: #{conv_denoiser_forward.9} parent=0 // pred_check_branch
    %11 = sbr.rel (0) target = $region9
  $region8: #{conv_denoiser_forward.9} parent=0 // pred_region
    _
  $region9: #{conv_denoiser_forward.9} parent=0 // pred_fallthru
    _
  // Predicated region
  $region10: #{conv_denoiser_forward.9} parent=0 // pred_check
    _
  $region11: #{conv_denoiser_forward.9} parent=0 // pred_check_branch
    %13 = sbr.rel (0) target = $region13
  $region12: #{conv_denoiser_forward.9} parent=0 // pred_region
    _
  $region13: #{conv_denoiser_forward.9} parent=0 // pred_fallthru
    _
  %v15 = vld [vmem:[%s0] sm:$0xff]
  %v16 = vld [vmem:[%s1] sm:$0xf]
  %v17 = vld [vmem:[%s1 + $0x4] sm:$0xf]
  %v18 = vld [vmem:[%s1 + $0x8] sm:$0xf]
  %v19 = vld [vmem:[%s1 + $0xc] sm:$0xf]
  %v20 = vld [vmem:[%s1 + $0x10] sm:$0xf]
  %v21 = vld [vmem:[%s1 + $0x14] sm:$0xf]
  %v22 = vld [vmem:[%s1 + $0x18] sm:$0xf]
  %v23 = vld [vmem:[%s1 + $0x1c] sm:$0xf]
  %v24 = vld [vmem:[%s1 + $0x20] sm:$0xf]
  %v25 = vld [vmem:[%s1 + $0x24] sm:$0xf]
  %v26 = vld [vmem:[%s1 + $0x28] sm:$0xf]
  %v27 = vld [vmem:[%s1 + $0x2c] sm:$0xf]
  %v28 = vld [vmem:[%s1 + $0x30] sm:$0xf]
  %v29 = vld [vmem:[%s1 + $0x34] sm:$0xf]
  %v30 = vld [vmem:[%s1 + $0x38] sm:$0xf]
  %v31 = vld [vmem:[%s1 + $0x3c] sm:$0xf]
  %v32 = vld [vmem:[%s1 + $0x40] sm:$0xf]
  %v33 = vld [vmem:[%s1 + $0x44] sm:$0xf]
  %v35 = vunpack.c.l.b16 %v15
  %v36 = vunpack.c.h.b16 %v15
  %v37 = vpack.c.b16 %v35, %v35
  %v38 = vpack.c.b16 %v36, %v36
  %v58 = vunpack.c.l.b16 %v16
  %v59 = vunpack.c.l.b16 %v17
  %v60 = vunpack.c.l.b16 %v18
  %v61 = vunpack.c.l.b16 %v19
  %v62 = vunpack.c.l.b16 %v20
  %v63 = vunpack.c.l.b16 %v21
  %v64 = vunpack.c.l.b16 %v22
  %v65 = vunpack.c.l.b16 %v23
  %v66 = vunpack.c.l.b16 %v24
  %v67 = vunpack.c.l.b16 %v25
  %v68 = vunpack.c.l.b16 %v26
  %v69 = vunpack.c.l.b16 %v27
  %v70 = vunpack.c.l.b16 %v28
  %v71 = vunpack.c.l.b16 %v29
  %v72 = vunpack.c.l.b16 %v30
  %v73 = vunpack.c.l.b16 %v31
  %v74 = vunpack.c.l.b16 %v32
  %v75 = vunpack.c.l.b16 %v33
  %v76 = vpack.c.b16 %v59, %v58
  %v77 = vpack.c.b16 %v61, %v60
  %v78 = vpack.c.b16 %v63, %v62
  %v79 = vpack.c.b16 %v65, %v64
  %v80 = vpack.c.b16 %v67, %v66
  %v81 = vpack.c.b16 %v69, %v68
  %v82 = vpack.c.b16 %v71, %v70
  %v83 = vpack.c.b16 %v73, %v72
  %v84 = vpack.c.b16 %v75, %v74
  %vm94 = vcmask 130048
  %v96 = vsel %vm94, %v38, 0
  %98 = vmatprep.subr.bf16.mxu0 0
  %99 = vmatpush1.bf16.msra.mxu0 %v76
  %100 = vmatprep.subr.bf16.mxu0 0
  %101 = vmatpush1.bf16.msra.mxu0 %v77
  %102 = vmatprep.subr.bf16.mxu0 0
  %103 = vmatpush1.bf16.msra.mxu0 %v78
  %104 = vmatprep.subr.bf16.mxu0 0
  %105 = vmatpush1.bf16.msra.mxu0 %v79
  %106 = vmatprep.subr.bf16.mxu0 0
  %107 = vmatpush1.bf16.msra.mxu0 %v80
  %108 = vmatprep.subr.bf16.mxu0 0
  %109 = vmatpush1.bf16.msra.mxu0 %v81
  %110 = vmatprep.subr.bf16.mxu0 0
  %111 = vmatpush1.bf16.msra.mxu0 %v82
  %112 = vmatprep.subr.bf16.mxu0 0
  %113 = vmatpush1.bf16.msra.mxu0 %v83
  %114 = vmatprep.subr.bf16.mxu0 0
  %115 = vmatpush1.bf16.msra.mxu0 %v84
  %116 = vmatprep.subr.bf16.mxu0 0
  %117 = vmatpush1.bf16.msra.mxu0 0
  %118 = vmatprep.subr.bf16.mxu0 0
  %119 = vmatpush1.bf16.msra.mxu0 0
  %120 = vmatprep.subr.bf16.mxu0 0
  %121 = vmatpush1.bf16.msra.mxu0 0
  %122 = vmatprep.subr.bf16.mxu0 0
  %123 = vmatpush1.bf16.msra.mxu0 0
  %124 = vmatprep.subr.bf16.mxu0 0
  %125 = vmatpush1.bf16.msra.mxu0 0
  %126 = vmatprep.subr.bf16.mxu0 0
  %127 = vmatpush1.bf16.msra.mxu0 0
  %128 = vmatprep.subr.bf16.mxu0 0
  %129 = vmatpush1.bf16.msra.mxu0 0
  %130 = vmatprep.mubr.bf16.mxu0 %v96
  %131 = vmatmul.mubr.bf16.gmra.mrb[0].mxu0 %v37
  %v132 = vpop.f32.mrb[0].mxu0
  %v133 = vadd.f32 0.0, %v132
  %v134 = vpop.f32.mrb[0].mxu0
  %v135 = vpop.f32.mrb[0].mxu0
  %v136 = vpop.f32.mrb[0].mxu0
  %137 = vdwg.mxu0
  %s138 = scalar_lea.vmem %s1, 72
  %v139 = vld [vmem:[%s138] sm:$0xf]
  %v140 = vld [vmem:[%s138 + $0x4] sm:$0xf]
  %v141 = vld [vmem:[%s138 + $0x8] sm:$0xf]
  %v142 = vld [vmem:[%s138 + $0xc] sm:$0xf]
  %v143 = vld [vmem:[%s138 + $0x10] sm:$0xf]
  %v144 = vld [vmem:[%s138 + $0x14] sm:$0xf]
  %v145 = vld [vmem:[%s138 + $0x18] sm:$0xf]
  %v146 = vld [vmem:[%s138 + $0x1c] sm:$0xf]
  %v147 = vld [vmem:[%s138 + $0x20] sm:$0xf]
  %v148 = vld [vmem:[%s138 + $0x24] sm:$0xf]
  %v149 = vld [vmem:[%s138 + $0x28] sm:$0xf]
  %v150 = vld [vmem:[%s138 + $0x2c] sm:$0xf]
  %v151 = vld [vmem:[%s138 + $0x30] sm:$0xf]
  %v152 = vld [vmem:[%s138 + $0x34] sm:$0xf]
  %v153 = vld [vmem:[%s138 + $0x38] sm:$0xf]
  %v154 = vld [vmem:[%s138 + $0x3c] sm:$0xf]
  %v155 = vld [vmem:[%s138 + $0x40] sm:$0xf]
  %v156 = vld [vmem:[%s138 + $0x44] sm:$0xf]
  %v175 = vunpack.c.l.b16 %v139
  %v176 = vunpack.c.l.b16 %v140
  %v177 = vunpack.c.l.b16 %v141
  %v178 = vunpack.c.l.b16 %v142
  %v179 = vunpack.c.l.b16 %v143
  %v180 = vunpack.c.l.b16 %v144
  %v181 = vunpack.c.l.b16 %v145
  %v182 = vunpack.c.l.b16 %v146
  %v183 = vunpack.c.l.b16 %v147
  %v184 = vunpack.c.l.b16 %v148
  %v185 = vunpack.c.l.b16 %v149
  %v186 = vunpack.c.l.b16 %v150
  %v187 = vunpack.c.l.b16 %v151
  %v188 = vunpack.c.l.b16 %v152
  %v189 = vunpack.c.l.b16 %v153
  %v190 = vunpack.c.l.b16 %v154
  %v191 = vunpack.c.l.b16 %v155
  %v192 = vunpack.c.l.b16 %v156
  %v193 = vpack.c.b16 %v176, %v175
  %v194 = vpack.c.b16 %v178, %v177
  %v195 = vpack.c.b16 %v180, %v179
  %v196 = vpack.c.b16 %v182, %v181
  %v197 = vpack.c.b16 %v184, %v183
  %v198 = vpack.c.b16 %v186, %v185
  %v199 = vpack.c.b16 %v188, %v187
  %v200 = vpack.c.b16 %v190, %v189
  %v201 = vpack.c.b16 %v192, %v191
  %211 = vmatprep.subr.bf16.mxu0 0
  %212 = vmatpush1.bf16.msra.mxu0 %v193
  %213 = vmatprep.subr.bf16.mxu0 0
  %214 = vmatpush1.bf16.msra.mxu0 %v194
  %215 = vmatprep.subr.bf16.mxu0 0
  %216 = vmatpush1.bf16.msra.mxu0 %v195
  %217 = vmatprep.subr.bf16.mxu0 0
  %218 = vmatpush1.bf16.msra.mxu0 %v196
  %219 = vmatprep.subr.bf16.mxu0 0
  %220 = vmatpush1.bf16.msra.mxu0 %v197
  %221 = vmatprep.subr.bf16.mxu0 0
  %222 = vmatpush1.bf16.msra.mxu0 %v198
  %223 = vmatprep.subr.bf16.mxu0 0
  %224 = vmatpush1.bf16.msra.mxu0 %v199
  %225 = vmatprep.subr.bf16.mxu0 0
  %226 = vmatpush1.bf16.msra.mxu0 %v200
  %227 = vmatprep.subr.bf16.mxu0 0
  %228 = vmatpush1.bf16.msra.mxu0 %v201
  %229 = vmatprep.subr.bf16.mxu0 0
  %230 = vmatpush1.bf16.msra.mxu0 0
  %231 = vmatprep.subr.bf16.mxu0 0
  %232 = vmatpush1.bf16.msra.mxu0 0
  %233 = vmatprep.subr.bf16.mxu0 0
  %234 = vmatpush1.bf16.msra.mxu0 0
  %235 = vmatprep.subr.bf16.mxu0 0
  %236 = vmatpush1.bf16.msra.mxu0 0
  %237 = vmatprep.subr.bf16.mxu0 0
  %238 = vmatpush1.bf16.msra.mxu0 0
  %239 = vmatprep.subr.bf16.mxu0 0
  %240 = vmatpush1.bf16.msra.mxu0 0
  %241 = vmatprep.subr.bf16.mxu0 0
  %242 = vmatpush1.bf16.msra.mxu0 0
  %243 = vmatprep.mubr.bf16.mxu0 %v96
  %244 = vmatmul.mubr.bf16.gmra.mrb[0].mxu0 %v37
  %v245 = vpop.f32.mrb[0].mxu0
  %v246 = vadd.f32 0.0, %v245
  %v247 = vpop.f32.mrb[0].mxu0
  %v248 = vpop.f32.mrb[0].mxu0
  %v249 = vpop.f32.mrb[0].mxu0
  %250 = vdwg.mxu0
  %s251 = scalar_lea.vmem %s1, 144
  %v252 = vld [vmem:[%s251] sm:$0xf]
  %v253 = vld [vmem:[%s251 + $0x4] sm:$0xf]
  %v254 = vld [vmem:[%s251 + $0x8] sm:$0xf]
  %v255 = vld [vmem:[%s251 + $0xc] sm:$0xf]
  %v256 = vld [vmem:[%s251 + $0x10] sm:$0xf]
  %v257 = vld [vmem:[%s251 + $0x14] sm:$0xf]
  %v258 = vld [vmem:[%s251 + $0x18] sm:$0xf]
  %v259 = vld [vmem:[%s251 + $0x1c] sm:$0xf]
  %v260 = vld [vmem:[%s251 + $0x20] sm:$0xf]
  %v261 = vld [vmem:[%s251 + $0x24] sm:$0xf]
  %v262 = vld [vmem:[%s251 + $0x28] sm:$0xf]
  %v263 = vld [vmem:[%s251 + $0x2c] sm:$0xf]
  %v264 = vld [vmem:[%s251 + $0x30] sm:$0xf]
  %v265 = vld [vmem:[%s251 + $0x34] sm:$0xf]
  %v266 = vld [vmem:[%s251 + $0x38] sm:$0xf]
  %v267 = vld [vmem:[%s251 + $0x3c] sm:$0xf]
  %v268 = vld [vmem:[%s251 + $0x40] sm:$0xf]
  %v269 = vld [vmem:[%s251 + $0x44] sm:$0xf]
  %v288 = vunpack.c.l.b16 %v252
  %v289 = vunpack.c.l.b16 %v253
  %v290 = vunpack.c.l.b16 %v254
  %v291 = vunpack.c.l.b16 %v255
  %v292 = vunpack.c.l.b16 %v256
  %v293 = vunpack.c.l.b16 %v257
  %v294 = vunpack.c.l.b16 %v258
  %v295 = vunpack.c.l.b16 %v259
  %v296 = vunpack.c.l.b16 %v260
  %v297 = vunpack.c.l.b16 %v261
  %v298 = vunpack.c.l.b16 %v262
  %v299 = vunpack.c.l.b16 %v263
  %v300 = vunpack.c.l.b16 %v264
  %v301 = vunpack.c.l.b16 %v265
  %v302 = vunpack.c.l.b16 %v266
  %v303 = vunpack.c.l.b16 %v267
  %v304 = vunpack.c.l.b16 %v268
  %v305 = vunpack.c.l.b16 %v269
  %v306 = vpack.c.b16 %v289, %v288
  %v307 = vpack.c.b16 %v291, %v290
  %v308 = vpack.c.b16 %v293, %v292
  %v309 = vpack.c.b16 %v295, %v294
  %v310 = vpack.c.b16 %v297, %v296
  %v311 = vpack.c.b16 %v299, %v298
  %v312 = vpack.c.b16 %v301, %v300
  %v313 = vpack.c.b16 %v303, %v302
  %v314 = vpack.c.b16 %v305, %v304
  %324 = vmatprep.subr.bf16.mxu0 0
  %325 = vmatpush1.bf16.msra.mxu0 %v306
  %326 = vmatprep.subr.bf16.mxu0 0
  %327 = vmatpush1.bf16.msra.mxu0 %v307
  %328 = vmatprep.subr.bf16.mxu0 0
  %329 = vmatpush1.bf16.msra.mxu0 %v308
  %330 = vmatprep.subr.bf16.mxu0 0
  %331 = vmatpush1.bf16.msra.mxu0 %v309
  %332 = vmatprep.subr.bf16.mxu0 0
  %333 = vmatpush1.bf16.msra.mxu0 %v310
  %334 = vmatprep.subr.bf16.mxu0 0
  %335 = vmatpush1.bf16.msra.mxu0 %v311
  %336 = vmatprep.subr.bf16.mxu0 0
  %337 = vmatpush1.bf16.msra.mxu0 %v312
  %338 = vmatprep.subr.bf16.mxu0 0
  %339 = vmatpush1.bf16.msra.mxu0 %v313
  %340 = vmatprep.subr.bf16.mxu0 0
  %341 = vmatpush1.bf16.msra.mxu0 %v314
  %342 = vmatprep.subr.bf16.mxu0 0
  %343 = vmatpush1.bf16.msra.mxu0 0
  %344 = vmatprep.subr.bf16.mxu0 0
  %345 = vmatpush1.bf16.msra.mxu0 0
  %346 = vmatprep.subr.bf16.mxu0 0
  %347 = vmatpush1.bf16.msra.mxu0 0
  %348 = vmatprep.subr.bf16.mxu0 0
  %349 = vmatpush1.bf16.msra.mxu0 0
  %350 = vmatprep.subr.bf16.mxu0 0
  %351 = vmatpush1.bf16.msra.mxu0 0
  %352 = vmatprep.subr.bf16.mxu0 0
  %353 = vmatpush1.bf16.msra.mxu0 0
  %354 = vmatprep.subr.bf16.mxu0 0
  %355 = vmatpush1.bf16.msra.mxu0 0
  %356 = vmatprep.mubr.bf16.mxu0 %v96
  %357 = vmatmul.mubr.bf16.gmra.mrb[0].mxu0 %v37
  %v358 = vpop.f32.mrb[0].mxu0
  %v359 = vadd.f32 0.0, %v358
  %v360 = vpop.f32.mrb[0].mxu0
  %v361 = vpop.f32.mrb[0].mxu0
  %v362 = vpop.f32.mrb[0].mxu0
  %363 = vdwg.mxu0
  %s364 = scalar_lea.vmem %s1, 216
  %v365 = vld [vmem:[%s364] sm:$0xf]
  %v366 = vld [vmem:[%s364 + $0x4] sm:$0xf]
  %v367 = vld [vmem:[%s364 + $0x8] sm:$0xf]
  %v368 = vld [vmem:[%s364 + $0xc] sm:$0xf]
  %v369 = vld [vmem:[%s364 + $0x10] sm:$0xf]
  %v370 = vld [vmem:[%s364 + $0x14] sm:$0xf]
  %v371 = vld [vmem:[%s364 + $0x18] sm:$0xf]
  %v372 = vld [vmem:[%s364 + $0x1c] sm:$0xf]
  %v373 = vld [vmem:[%s364 + $0x20] sm:$0xf]
  %v374 = vld [vmem:[%s364 + $0x24] sm:$0xf]
  %v375 = vld [vmem:[%s364 + $0x28] sm:$0xf]
  %v376 = vld [vmem:[%s364 + $0x2c] sm:$0xf]
  %v377 = vld [vmem:[%s364 + $0x30] sm:$0xf]
  %v378 = vld [vmem:[%s364 + $0x34] sm:$0xf]
  %v379 = vld [vmem:[%s364 + $0x38] sm:$0xf]
  %v380 = vld [vmem:[%s364 + $0x3c] sm:$0xf]
  %v381 = vld [vmem:[%s364 + $0x40] sm:$0xf]
  %v382 = vld [vmem:[%s364 + $0x44] sm:$0xf]
  %v401 = vunpack.c.l.b16 %v365
  %v402 = vunpack.c.l.b16 %v366
  %v403 = vunpack.c.l.b16 %v367
  %v404 = vunpack.c.l.b16 %v368
  %v405 = vunpack.c.l.b16 %v369
  %v406 = vunpack.c.l.b16 %v370
  %v407 = vunpack.c.l.b16 %v371
  %v408 = vunpack.c.l.b16 %v372
  %v409 = vunpack.c.l.b16 %v373
  %v410 = vunpack.c.l.b16 %v374
  %v411 = vunpack.c.l.b16 %v375
  %v412 = vunpack.c.l.b16 %v376
  %v413 = vunpack.c.l.b16 %v377
  %v414 = vunpack.c.l.b16 %v378
  %v415 = vunpack.c.l.b16 %v379
  %v416 = vunpack.c.l.b16 %v380
  %v417 = vunpack.c.l.b16 %v381
  %v418 = vunpack.c.l.b16 %v382
  %v419 = vpack.c.b16 %v402, %v401
  %v420 = vpack.c.b16 %v404, %v403
  %v421 = vpack.c.b16 %v406, %v405
  %v422 = vpack.c.b16 %v408, %v407
  %v423 = vpack.c.b16 %v410, %v409
  %v424 = vpack.c.b16 %v412, %v411
  %v425 = vpack.c.b16 %v414, %v413
  %v426 = vpack.c.b16 %v416, %v415
  %v427 = vpack.c.b16 %v418, %v417
  %437 = vmatprep.subr.bf16.mxu0 0
  %438 = vmatpush1.bf16.msra.mxu0 %v419
  %439 = vmatprep.subr.bf16.mxu0 0
  %440 = vmatpush1.bf16.msra.mxu0 %v420
  %441 = vmatprep.subr.bf16.mxu0 0
  %442 = vmatpush1.bf16.msra.mxu0 %v421
  %443 = vmatprep.subr.bf16.mxu0 0
  %444 = vmatpush1.bf16.msra.mxu0 %v422
  %445 = vmatprep.subr.bf16.mxu0 0
  %446 = vmatpush1.bf16.msra.mxu0 %v423
  %447 = vmatprep.subr.bf16.mxu0 0
  %448 = vmatpush1.bf16.msra.mxu0 %v424
  %449 = vmatprep.subr.bf16.mxu0 0
  %450 = vmatpush1.bf16.msra.mxu0 %v425
  %451 = vmatprep.subr.bf16.mxu0 0
  %452 = vmatpush1.bf16.msra.mxu0 %v426
  %453 = vmatprep.subr.bf16.mxu0 0
  %454 = vmatpush1.bf16.msra.mxu0 %v427
  %455 = vmatprep.subr.bf16.mxu0 0
  %456 = vmatpush1.bf16.msra.mxu0 0
  %457 = vmatprep.subr.bf16.mxu0 0
  %458 = vmatpush1.bf16.msra.mxu0 0
  %459 = vmatprep.subr.bf16.mxu0 0
  %460 = vmatpush1.bf16.msra.mxu0 0
  %461 = vmatprep.subr.bf16.mxu0 0
  %462 = vmatpush1.bf16.msra.mxu0 0
  %463 = vmatprep.subr.bf16.mxu0 0
  %464 = vmatpush1.bf16.msra.mxu0 0
  %465 = vmatprep.subr.bf16.mxu0 0
  %466 = vmatpush1.bf16.msra.mxu0 0
  %467 = vmatprep.subr.bf16.mxu0 0
  %468 = vmatpush1.bf16.msra.mxu0 0
  %469 = vmatprep.mubr.bf16.mxu0 %v96
  %470 = vmatmul.mubr.bf16.gmra.mrb[0].mxu0 %v37
  %v471 = vpop.f32.mrb[0].mxu0
  %v472 = vadd.f32 0.0, %v471
  %v473 = vpop.f32.mrb[0].mxu0
  %v474 = vpop.f32.mrb[0].mxu0
  %v475 = vpop.f32.mrb[0].mxu0
  %476 = vdwg.mxu0
  %v477 = vmax.f32 %v133, %v246
  %v478 = vmax.f32 %v359, %v472
  %v479 = vmax.f32 %v477, %v478
  %v480 = vld [vmem:[%s2] sm:$0xff]
  %482 = vset.pattern.permute.xlu0 0
  %483 = vperm.xlu0 %482, %v480
  %v484 = vpop.permute.xlu0 %483
  %v486 = vadd.f32 %v479, %v484
  %v487 = vmax.f32 %v486, 0.0
  %vm488 = vcmask 146432
  %489 = vst.msk [vmem:[%s3] sm:$0xff] %vm488, %v487
  // Predicated region
  $region14: #{conv_denoiser_forward.9} parent=0 // pred_check
    _
  $region15: #{conv_denoiser_forward.9} parent=0 // pred_check_branch
    %491 = sbr.rel (0) target = $region17
  $region16: #{conv_denoiser_forward.9} parent=0 // pred_region
    _
  $region17: #{conv_denoiser_forward.9} parent=0 // pred_fallthru
    _
  // Predicated region
  $region18: #{conv_denoiser_forward.9} parent=0 // pred_check
    _
  $region19: #{conv_denoiser_forward.9} parent=0 // pred_check_branch
    %493 = sbr.rel (0) target = $region21
  $region20: #{conv_denoiser_forward.9} parent=0 // pred_region
    _
  $region21: #{conv_denoiser_forward.9} parent=0 // pred_fallthru
    _

// kernel: conv_denoiser_forward.11
$region0: #{conv_denoiser_forward.11}
  #allocation0 [shape = 'u32[]', space=smem, size = 0x4, offset = 0x4, fixed_abs, tag = 'smem constant byte address 0x4 - core index']
  #allocation1 [shape = 'u32[144,128]{1,0:T(1,128)}', space=vmem, size = 0x12000, scoped, tag = 'internal scratch']
  %s0 = inlined_call_operand.vmem [shape: bf16[64,8], index: 0, kind: input, shape index: {}]
  %s1 = inlined_call_operand.vmem [shape: bf16[8,98], index: 1, kind: input, shape index: {}]
  %s2 = inlined_call_operand.vmem [shape: f32[64,1], index: 2, kind: input, shape index: {}]
  %s3 = inlined_call_operand.vmem [shape: f32[64,98], index: 3, kind: output, shape index: {}]
  %s4 = sld [smem:[#allocation0]]
  $region22: #{conv_denoiser_forward.11} parent=0
    _
  %s6 = ssub.s32 1, %s4
  %s7 = scalar_select 0, %s6, %s4
  // Predicated region
  $region2: #{conv_denoiser_forward.11} parent=0 // pred_check
    _
  $region3: #{conv_denoiser_forward.11} parent=0 // pred_check_branch
    %9 = sbr.rel (0) target = $region5
  $region4: #{conv_denoiser_forward.11} parent=0 // pred_region
    _
  $region5: #{conv_denoiser_forward.11} parent=0 // pred_fallthru
    _
  // Predicated region
  $region6: #{conv_denoiser_forward.11} parent=0 // pred_check
    _
  $region7: #{conv_denoiser_forward.11} parent=0 // pred_check_branch
    %11 = sbr.rel (0) target = $region9
  $region8: #{conv_denoiser_forward.11} parent=0 // pred_region
    _
  $region9: #{conv_denoiser_forward.11} parent=0 // pred_fallthru
    _
  // Predicated region
  $region10: #{conv_denoiser_forward.11} parent=0 // pred_check
    _
  $region11: #{conv_denoiser_forward.11} parent=0 // pred_check_branch
    %13 = sbr.rel (0) target = $region13
  $region12: #{conv_denoiser_forward.11} parent=0 // pred_region
    _
  $region13: #{conv_denoiser_forward.11} parent=0 // pred_fallthru
    _
  %v15 = vld [vmem:[%s0] sm:$0xf]
  %v16 = vld [vmem:[%s0 + $0x4] sm:$0xf]
  %v17 = vld [vmem:[%s0 + $0x8] sm:$0xf]
  %v18 = vld [vmem:[%s0 + $0xc] sm:$0xf]
  %v19 = vld [vmem:[%s0 + $0x10] sm:$0xf]
  %v20 = vld [vmem:[%s0 + $0x14] sm:$0xf]
  %v21 = vld [vmem:[%s0 + $0x18] sm:$0xf]
  %v22 = vld [vmem:[%s0 + $0x1c] sm:$0xf]
  %v23 = vld [vmem:[%s1] sm:$0xf]
  %v24 = vld [vmem:[%s2] sm:$0xff]
  %v25 = vld [vmem:[%s2 + $0x8] sm:$0xff]
  %v26 = vld [vmem:[%s2 + $0x10] sm:$0xff]
  %v27 = vld [vmem:[%s2 + $0x18] sm:$0xff]
  %v28 = vld [vmem:[%s2 + $0x20] sm:$0xff]
  %v29 = vld [vmem:[%s2 + $0x28] sm:$0xff]
  %v30 = vld [vmem:[%s2 + $0x30] sm:$0xff]
  %v31 = vld [vmem:[%s2 + $0x38] sm:$0xff]
  %33 = vset.pattern.permute.xlu0 0
  %34 = vperm.xlu0 %33, %v24
  %v35 = vpop.permute.xlu0 %34
  %38 = vset.pattern.permute.xlu0 0
  %39 = vperm.xlu0 %38, %v25
  %v40 = vpop.permute.xlu0 %39
  %43 = vset.pattern.permute.xlu0 0
  %44 = vperm.xlu0 %43, %v26
  %v45 = vpop.permute.xlu0 %44
  %48 = vset.pattern.permute.xlu0 0
  %49 = vperm.xlu0 %48, %v27
  %v50 = vpop.permute.xlu0 %49
  %53 = vset.pattern.permute.xlu0 0
  %54 = vperm.xlu0 %53, %v28
  %v55 = vpop.permute.xlu0 %54
  %58 = vset.pattern.permute.xlu0 0
  %59 = vperm.xlu0 %58, %v29
  %v60 = vpop.permute.xlu0 %59
  %63 = vset.pattern.permute.xlu0 0
  %64 = vperm.xlu0 %63, %v30
  %v65 = vpop.permute.xlu0 %64
  %68 = vset.pattern.permute.xlu0 0
  %69 = vperm.xlu0 %68, %v31
  %v70 = vpop.permute.xlu0 %69
  %v80 = vunpack.c.l.b16 %v15
  %v81 = vunpack.c.l.b16 %v16
  %v82 = vunpack.c.l.b16 %v17
  %v83 = vunpack.c.l.b16 %v18
  %v84 = vunpack.c.l.b16 %v19
  %v85 = vunpack.c.l.b16 %v20
  %v86 = vunpack.c.l.b16 %v21
  %v87 = vunpack.c.l.b16 %v22
  %v88 = vpack.c.b16 %v81, %v80
  %v89 = vpack.c.b16 %v83, %v82
  %v90 = vpack.c.b16 %v85, %v84
  %v91 = vpack.c.b16 %v87, %v86
  %vm92 = vcmask 64512
  %v94 = vsel %vm92, %v88, 0
  %v97 = vsel %vm92, %v89, 0
  %v100 = vsel %vm92, %v90, 0
  %v103 = vsel %vm92, %v91, 0
  %vm105 = vcmask 1043456
  %v107 = vsel %vm105, %v23, 0
  %109 = vmatprep.subr.bf16.mxu0 0
  %110 = vmatpush1.bf16.msra.mxu0 %v107
  %111 = vmatprep.subr.bf16.mxu0 0
  %112 = vmatpush1.bf16.msra.mxu0 0
  %113 = vmatprep.subr.bf16.mxu0 0
  %114 = vmatpush1.bf16.msra.mxu0 0
  %115 = vmatprep.subr.bf16.mxu0 0
  %116 = vmatpush1.bf16.msra.mxu0 0
  %117 = vmatprep.subr.bf16.mxu0 0
  %118 = vmatpush1.bf16.msra.mxu0 0
  %119 = vmatprep.subr.bf16.mxu0 0
  %120 = vmatpush1.bf16.msra.mxu0 0
  %121 = vmatprep.subr.bf16.mxu0 0
  %122 = vmatpush1.bf16.msra.mxu0 0
  %123 = vmatprep.subr.bf16.mxu0 0
  %124 = vmatpush1.bf16.msra.mxu0 0
  %125 = vmatprep.subr.bf16.mxu0 0
  %126 = vmatpush1.bf16.msra.mxu0 0
  %127 = vmatprep.subr.bf16.mxu0 0
  %128 = vmatpush1.bf16.msra.mxu0 0
  %129 = vmatprep.subr.bf16.mxu0 0
  %130 = vmatpush1.bf16.msra.mxu0 0
  %131 = vmatprep.subr.bf16.mxu0 0
  %132 = vmatpush1.bf16.msra.mxu0 0
  %133 = vmatprep.subr.bf16.mxu0 0
  %134 = vmatpush1.bf16.msra.mxu0 0
  %135 = vmatprep.subr.bf16.mxu0 0
  %136 = vmatpush1.bf16.msra.mxu0 0
  %137 = vmatprep.subr.bf16.mxu0 0
  %138 = vmatpush1.bf16.msra.mxu0 0
  %139 = vmatprep.subr.bf16.mxu0 0
  %140 = vmatpush1.bf16.msra.mxu0 0
  %141 = vmatprep.mubr.bf16.mxu0 0
  %142 = vmatmul.mubr.bf16.gmra.mrb[0].mxu0 %v94
  %v143 = vpop.f32.mrb[0].mxu0
  %v144 = vadd.f32 %v35, %v143
  %v145 = vpop.f32.mrb[0].mxu0
  %v146 = vpop.f32.mrb[0].mxu0
  %v147 = vadd.f32 %v40, %v146
  %v148 = vpop.f32.mrb[0].mxu0
  %149 = vmatprep.mubr.bf16.mxu0 0
  %150 = vmatmul.mubr.bf16.gmra.mrb[0].mxu0 %v97
  %v151 = vpop.f32.mrb[0].mxu0
  %v152 = vadd.f32 %v45, %v151
  %v153 = vpop.f32.mrb[0].mxu0
  %v154 = vpop.f32.mrb[0].mxu0
  %v155 = vadd.f32 %v50, %v154
  %v156 = vpop.f32.mrb[0].mxu0
  %157 = vmatprep.mubr.bf16.mxu0 0
  %158 = vmatmul.mubr.bf16.gmra.mrb[0].mxu0 %v100
  %v159 = vpop.f32.mrb[0].mxu0
  %v160 = vadd.f32 %v55, %v159
  %v161 = vpop.f32.mrb[0].mxu0
  %v162 = vpop.f32.mrb[0].mxu0
  %v163 = vadd.f32 %v60, %v162
  %v164 = vpop.f32.mrb[0].mxu0
  %165 = vmatprep.mubr.bf16.mxu0 0
  %166 = vmatmul.mubr.bf16.gmra.mrb[0].mxu0 %v103
  %v167 = vpop.f32.mrb[0].mxu0
  %v168 = vadd.f32 %v65, %v167
  %v169 = vpop.f32.mrb[0].mxu0
  %v170 = vpop.f32.mrb[0].mxu0
  %v171 = vadd.f32 %v70, %v170
  %v172 = vpop.f32.mrb[0].mxu0
  %173 = vdwg.mxu0
  %v174 = vmax.f32 %v144, 0.0
  %v175 = vmax.f32 %v147, 0.0
  %v176 = vmax.f32 %v152, 0.0
  %v177 = vmax.f32 %v155, 0.0
  %v178 = vmax.f32 %v160, 0.0
  %v179 = vmax.f32 %v163, 0.0
  %v180 = vmax.f32 %v168, 0.0
  %v181 = vmax.f32 %v171, 0.0
  %vm182 = vcmask 801792
  %183 = vst.msk [vmem:[%s3] sm:$0xff] %vm182, %v174
  %184 = vst.msk [vmem:[%s3 + $0x8] sm:$0xff] %vm182, %v175
  %185 = vst.msk [vmem:[%s3 + $0x10] sm:$0xff] %vm182, %v176
  %186 = vst.msk [vmem:[%s3 + $0x18] sm:$0xff] %vm182, %v177
  %187 = vst.msk [vmem:[%s3 + $0x20] sm:$0xff] %vm182, %v178
  %188 = vst.msk [vmem:[%s3 + $0x28] sm:$0xff] %vm182, %v179
  %189 = vst.msk [vmem:[%s3 + $0x30] sm:$0xff] %vm182, %v180
  %190 = vst.msk [vmem:[%s3 + $0x38] sm:$0xff] %vm182, %v181
  // Predicated region
  $region14: #{conv_denoiser_forward.11} parent=0 // pred_check
    _
  $region15: #{conv_denoiser_forward.11} parent=0 // pred_check_branch
    %192 = sbr.rel (0) target = $region17
  $region16: #{conv_denoiser_forward.11} parent=0 // pred_region
    _
  $region17: #{conv_denoiser_forward.11} parent=0 // pred_fallthru
    _
  // Predicated region
  $region18: #{conv_denoiser_forward.11} parent=0 // pred_check
    _
  $region19: #{conv_denoiser_forward.11} parent=0 // pred_check_branch
    %194 = sbr.rel (0) target = $region21
  $region20: #{conv_denoiser_forward.11} parent=0 // pred_region
    _
  $region21: #{conv_denoiser_forward.11} parent=0 // pred_fallthru
    _

// kernel: conv_denoiser_forward.12
$region0: #{conv_denoiser_forward.12}
  #allocation0 [shape = 'u32[]', space=smem, size = 0x4, offset = 0x4, fixed_abs, tag = 'smem constant byte address 0x4 - core index']
  #allocation1 [shape = 'u32[144,128]{1,0:T(1,128)}', space=vmem, size = 0x12000, scoped, tag = 'internal scratch']
  %s0 = inlined_call_operand.vmem [shape: bf16[128,16], index: 0, kind: input, shape index: {}]
  %s1 = inlined_call_operand.vmem [shape: bf16[16,392], index: 1, kind: input, shape index: {}]
  %s2 = inlined_call_operand.vmem [shape: f32[128,1], index: 2, kind: input, shape index: {}]
  %s3 = inlined_call_operand.vmem [shape: f32[128,392], index: 3, kind: output, shape index: {}]
  %s4 = sld [smem:[#allocation0]]
  $region22: #{conv_denoiser_forward.12} parent=0
    _
  %s6 = ssub.s32 1, %s4
  %s7 = scalar_select 0, %s6, %s4
  // Predicated region
  $region2: #{conv_denoiser_forward.12} parent=0 // pred_check
    _
  $region3: #{conv_denoiser_forward.12} parent=0 // pred_check_branch
    %9 = sbr.rel (0) target = $region5
  $region4: #{conv_denoiser_forward.12} parent=0 // pred_region
    _
  $region5: #{conv_denoiser_forward.12} parent=0 // pred_fallthru
    _
  // Predicated region
  $region6: #{conv_denoiser_forward.12} parent=0 // pred_check
    _
  $region7: #{conv_denoiser_forward.12} parent=0 // pred_check_branch
    %11 = sbr.rel (0) target = $region9
  $region8: #{conv_denoiser_forward.12} parent=0 // pred_region
    _
  $region9: #{conv_denoiser_forward.12} parent=0 // pred_fallthru
    _
  // Predicated region
  $region10: #{conv_denoiser_forward.12} parent=0 // pred_check
    _
  $region11: #{conv_denoiser_forward.12} parent=0 // pred_check_branch
    %13 = sbr.rel (0) target = $region13
  $region12: #{conv_denoiser_forward.12} parent=0 // pred_region
    _
  $region13: #{conv_denoiser_forward.12} parent=0 // pred_fallthru
    _
  %v15 = vld [vmem:[%s0] sm:$0xf]
  %v16 = vld [vmem:[%s0 + $0x4] sm:$0xf]
  %v17 = vld [vmem:[%s0 + $0x8] sm:$0xf]
  %v18 = vld [vmem:[%s0 + $0xc] sm:$0xf]
  %v19 = vld [vmem:[%s0 + $0x10] sm:$0xf]
  %v20 = vld [vmem:[%s0 + $0x14] sm:$0xf]
  %v21 = vld [vmem:[%s0 + $0x18] sm:$0xf]
  %v22 = vld [vmem:[%s0 + $0x1c] sm:$0xf]
  %v23 = vld [vmem:[%s0 + $0x20] sm:$0xf]
  %v24 = vld [vmem:[%s0 + $0x24] sm:$0xf]
  %v25 = vld [vmem:[%s0 + $0x28] sm:$0xf]
  %v26 = vld [vmem:[%s0 + $0x2c] sm:$0xf]
  %v27 = vld [vmem:[%s0 + $0x30] sm:$0xf]
  %v28 = vld [vmem:[%s0 + $0x34] sm:$0xf]
  %v29 = vld [vmem:[%s0 + $0x38] sm:$0xf]
  %v30 = vld [vmem:[%s0 + $0x3c] sm:$0xf]
  %v31 = vld [vmem:[%s1] sm:$0xff]
  %v32 = vld [vmem:[%s1 + $0x8] sm:$0xff]
  %v33 = vld [vmem:[%s1 + $0x10] sm:$0xff]
  %v34 = vld [vmem:[%s1 + $0x18] sm:$0xff]
  %v35 = vld [vmem:[%s2] sm:$0xff]
  %v36 = vld [vmem:[%s2 + $0x8] sm:$0xff]
  %v37 = vld [vmem:[%s2 + $0x10] sm:$0xff]
  %v38 = vld [vmem:[%s2 + $0x18] sm:$0xff]
  %v39 = vld [vmem:[%s2 + $0x20] sm:$0xff]
  %v40 = vld [vmem:[%s2 + $0x28] sm:$0xff]
  %v41 = vld [vmem:[%s2 + $0x30] sm:$0xff]
  %v42 = vld [vmem:[%s2 + $0x38] sm:$0xff]
  %v43 = vld [vmem:[%s2 + $0x40] sm:$0xff]
  %v44 = vld [vmem:[%s2 + $0x48] sm:$0xff]
  %v45 = vld [vmem:[%s2 + $0x50] sm:$0xff]
  %v46 = vld [vmem:[%s2 + $0x58] sm:$0xff]
  %v47 = vld [vmem:[%s2 + $0x60] sm:$0xff]
  %v48 = vld [vmem:[%s2 + $0x68] sm:$0xff]
  %v49 = vld [vmem:[%s2 + $0x70] sm:$0xff]
  %v50 = vld [vmem:[%s2 + $0x78] sm:$0xff]
  %52 = vset.pattern.permute.xlu0 0
  %53 = vperm.xlu0 %52, %v35
  %v54 = vpop.permute.xlu0 %53
  %57 = vset.pattern.permute.xlu0 0
  %58 = vperm.xlu0 %57, %v36
  %v59 = vpop.permute.xlu0 %58
  %62 = vset.pattern.permute.xlu0 0
  %63 = vperm.xlu0 %62, %v37
  %v64 = vpop.permute.xlu0 %63
  %67 = vset.pattern.permute.xlu0 0
  %68 = vperm.xlu0 %67, %v38
  %v69 = vpop.permute.xlu0 %68
  %72 = vset.pattern.permute.xlu0 0
  %73 = vperm.xlu0 %72, %v39
  %v74 = vpop.permute.xlu0 %73
  %77 = vset.pattern.permute.xlu0 0
  %78 = vperm.xlu0 %77, %v40
  %v79 = vpop.permute.xlu0 %78
  %82 = vset.pattern.permute.xlu0 0
  %83 = vperm.xlu0 %82, %v41
  %v84 = vpop.permute.xlu0 %83
  %87 = vset.pattern.permute.xlu0 0
  %88 = vperm.xlu0 %87, %v42
  %v89 = vpop.permute.xlu0 %88
  %92 = vset.pattern.permute.xlu0 0
  %93 = vperm.xlu0 %92, %v43
  %v94 = vpop.permute.xlu0 %93
  %97 = vset.pattern.permute.xlu0 0
  %98 = vperm.xlu0 %97, %v44
  %v99 = vpop.permute.xlu0 %98
  %102 = vset.pattern.permute.xlu0 0
  %103 = vperm.xlu0 %102, %v45
  %v104 = vpop.permute.xlu0 %103
  %107 = vset.pattern.permute.xlu0 0
  %108 = vperm.xlu0 %107, %v46
  %v109 = vpop.permute.xlu0 %108
  %112 = vset.pattern.permute.xlu0 0
  %113 = vperm.xlu0 %112, %v47
  %v114 = vpop.permute.xlu0 %113
  %117 = vset.pattern.permute.xlu0 0
  %118 = vperm.xlu0 %117, %v48
  %v119 = vpop.permute.xlu0 %118
  %122 = vset.pattern.permute.xlu0 0
  %123 = vperm.xlu0 %122, %v49
  %v124 = vpop.permute.xlu0 %123
  %127 = vset.pattern.permute.xlu0 0
  %128 = vperm.xlu0 %127, %v50
  %v129 = vpop.permute.xlu0 %128
  %v147 = vunpack.c.l.b16 %v15
  %v148 = vunpack.c.l.b16 %v16
  %v149 = vunpack.c.l.b16 %v17
  %v150 = vunpack.c.l.b16 %v18
  %v151 = vunpack.c.l.b16 %v19
  %v152 = vunpack.c.l.b16 %v20
  %v153 = vunpack.c.l.b16 %v21
  %v154 = vunpack.c.l.b16 %v22
  %v155 = vunpack.c.l.b16 %v23
  %v156 = vunpack.c.l.b16 %v24
  %v157 = vunpack.c.l.b16 %v25
  %v158 = vunpack.c.l.b16 %v26
  %v159 = vunpack.c.l.b16 %v27
  %v160 = vunpack.c.l.b16 %v28
  %v161 = vunpack.c.l.b16 %v29
  %v162 = vunpack.c.l.b16 %v30
  %v163 = vpack.c.b16 %v148, %v147
  %v164 = vpack.c.b16 %v150, %v149
  %v165 = vpack.c.b16 %v152, %v151
  %v166 = vpack.c.b16 %v154, %v153
  %v167 = vpack.c.b16 %v156, %v155
  %v168 = vpack.c.b16 %v158, %v157
  %v169 = vpack.c.b16 %v160, %v159
  %v170 = vpack.c.b16 %v162, %v161
  %v175 = vunpack.c.l.b16 %v31
  %v176 = vunpack.c.h.b16 %v31
  %v177 = vunpack.c.l.b16 %v32
  %v178 = vunpack.c.h.b16 %v32
  %v179 = vunpack.c.l.b16 %v33
  %v180 = vunpack.c.h.b16 %v33
  %v181 = vunpack.c.l.b16 %v34
  %v182 = vunpack.c.h.b16 %v34
  %v183 = vpack.c.b16 %v179, %v175
  %v184 = vpack.c.b16 %v180, %v176
  %v185 = vpack.c.b16 %v181, %v177
  %v186 = vpack.c.b16 %v182, %v178
  %vm191 = vcmask 130048
  %v193 = vsel %vm191, %v163, 0
  %v196 = vsel %vm191, %v164, 0
  %v199 = vsel %vm191, %v165, 0
  %v202 = vsel %vm191, %v166, 0
  %v205 = vsel %vm191, %v167, 0
  %v208 = vsel %vm191, %v168, 0
  %v211 = vsel %vm191, %v169, 0
  %v214 = vsel %vm191, %v170, 0
  %216 = vmatprep.subr.bf16.mxu0 %v184
  %217 = vmatpush1.bf16.msra.mxu0 %v183
  %218 = vmatprep.subr.bf16.mxu0 0
  %219 = vmatpush1.bf16.msra.mxu0 0
  %220 = vmatprep.subr.bf16.mxu0 0
  %221 = vmatpush1.bf16.msra.mxu0 0
  %222 = vmatprep.subr.bf16.mxu0 0
  %223 = vmatpush1.bf16.msra.mxu0 0
  %224 = vmatprep.subr.bf16.mxu0 0
  %225 = vmatpush1.bf16.msra.mxu0 0
  %226 = vmatprep.subr.bf16.mxu0 0
  %227 = vmatpush1.bf16.msra.mxu0 0
  %228 = vmatprep.subr.bf16.mxu0 0
  %229 = vmatpush1.bf16.msra.mxu0 0
  %230 = vmatprep.subr.bf16.mxu0 0
  %231 = vmatpush1.bf16.msra.mxu0 0
  %232 = vmatprep.subr.bf16.mxu0 0
  %233 = vmatpush1.bf16.msra.mxu0 0
  %234 = vmatprep.subr.bf16.mxu0 0
  %235 = vmatpush1.bf16.msra.mxu0 0
  %236 = vmatprep.subr.bf16.mxu0 0
  %237 = vmatpush1.bf16.msra.mxu0 0
  %238 = vmatprep.subr.bf16.mxu0 0
  %239 = vmatpush1.bf16.msra.mxu0 0
  %240 = vmatprep.subr.bf16.mxu0 0
  %241 = vmatpush1.bf16.msra.mxu0 0
  %242 = vmatprep.subr.bf16.mxu0 0
  %243 = vmatpush1.bf16.msra.mxu0 0
  %244 = vmatprep.subr.bf16.mxu0 0
  %245 = vmatpush1.bf16.msra.mxu0 0
  %246 = vmatprep.subr.bf16.mxu0 0
  %247 = vmatpush1.bf16.msra.mxu0 0
  %248 = vmatprep.mubr.bf16.mxu0 0
  %249 = vmatmul.mubr.bf16.gmra.mrb[0].mxu0 %v193
  %v250 = vpop.f32.mrb[0].mxu0
  %v251 = vadd.f32 %v54, %v250
  %v252 = vpop.f32.mrb[0].mxu0
  %v253 = vadd.f32 %v54, %v252
  %v254 = vpop.f32.mrb[0].mxu0
  %v255 = vadd.f32 %v59, %v254
  %v256 = vpop.f32.mrb[0].mxu0
  %v257 = vadd.f32 %v59, %v256
  %258 = vmatprep.mubr.bf16.mxu0 0
  %259 = vmatmul.mubr.bf16.gmra.mrb[0].mxu0 %v196
  %v260 = vpop.f32.mrb[0].mxu0
  %v261 = vadd.f32 %v64, %v260
  %v262 = vpop.f32.mrb[0].mxu0
  %v263 = vadd.f32 %v64, %v262
  %v264 = vpop.f32.mrb[0].mxu0
  %v265 = vadd.f32 %v69, %v264
  %v266 = vpop.f32.mrb[0].mxu0
  %v267 = vadd.f32 %v69, %v266
  %268 = vmatprep.mubr.bf16.mxu0 0
  %269 = vmatmul.mubr.bf16.gmra.mrb[0].mxu0 %v199
  %v270 = vpop.f32.mrb[0].mxu0
  %v271 = vadd.f32 %v74, %v270
  %v272 = vpop.f32.mrb[0].mxu0
  %v273 = vadd.f32 %v74, %v272
  %v274 = vpop.f32.mrb[0].mxu0
  %v275 = vadd.f32 %v79, %v274
  %v276 = vpop.f32.mrb[0].mxu0
  %v277 = vadd.f32 %v79, %v276
  %278 = vmatprep.mubr.bf16.mxu0 0
  %279 = vmatmul.mubr.bf16.gmra.mrb[0].mxu0 %v202
  %v280 = vpop.f32.mrb[0].mxu0
  %v281 = vadd.f32 %v84, %v280
  %v282 = vpop.f32.mrb[0].mxu0
  %v283 = vadd.f32 %v84, %v282
  %v284 = vpop.f32.mrb[0].mxu0
  %v285 = vadd.f32 %v89, %v284
  %v286 = vpop.f32.mrb[0].mxu0
  %v287 = vadd.f32 %v89, %v286
  %288 = vmatprep.mubr.bf16.mxu0 0
  %289 = vmatmul.mubr.bf16.gmra.mrb[0].mxu0 %v205
  %v290 = vpop.f32.mrb[0].mxu0
  %v291 = vadd.f32 %v94, %v290
  %v292 = vpop.f32.mrb[0].mxu0
  %v293 = vadd.f32 %v94, %v292
  %v294 = vpop.f32.mrb[0].mxu0
  %v295 = vadd.f32 %v99, %v294
  %v296 = vpop.f32.mrb[0].mxu0
  %v297 = vadd.f32 %v99, %v296
  %298 = vmatprep.mubr.bf16.mxu0 0
  %299 = vmatmul.mubr.bf16.gmra.mrb[0].mxu0 %v208
  %v300 = vpop.f32.mrb[0].mxu0
  %v301 = vadd.f32 %v104, %v300
  %v302 = vpop.f32.mrb[0].mxu0
  %v303 = vadd.f32 %v104, %v302
  %v304 = vpop.f32.mrb[0].mxu0
  %v305 = vadd.f32 %v109, %v304
  %v306 = vpop.f32.mrb[0].mxu0
  %v307 = vadd.f32 %v109, %v306
  %308 = vmatprep.mubr.bf16.mxu0 0
  %309 = vmatmul.mubr.bf16.gmra.mrb[0].mxu0 %v211
  %v310 = vpop.f32.mrb[0].mxu0
  %v311 = vadd.f32 %v114, %v310
  %v312 = vpop.f32.mrb[0].mxu0
  %v313 = vadd.f32 %v114, %v312
  %v314 = vpop.f32.mrb[0].mxu0
  %v315 = vadd.f32 %v119, %v314
  %v316 = vpop.f32.mrb[0].mxu0
  %v317 = vadd.f32 %v119, %v316
  %318 = vmatprep.mubr.bf16.mxu0 0
  %319 = vmatmul.mubr.bf16.gmra.mrb[0].mxu0 %v214
  %v320 = vpop.f32.mrb[0].mxu0
  %v321 = vadd.f32 %v124, %v320
  %v322 = vpop.f32.mrb[0].mxu0
  %v323 = vadd.f32 %v124, %v322
  %v324 = vpop.f32.mrb[0].mxu0
  %v325 = vadd.f32 %v129, %v324
  %v326 = vpop.f32.mrb[0].mxu0
  %v327 = vadd.f32 %v129, %v326
  %328 = vdwg.mxu0
  %329 = vmatprep.subr.bf16.mxu0 %v186
  %330 = vmatpush1.bf16.msra.mxu0 %v185
  %331 = vmatprep.subr.bf16.mxu0 0
  %332 = vmatpush1.bf16.msra.mxu0 0
  %333 = vmatprep.subr.bf16.mxu0 0
  %334 = vmatpush1.bf16.msra.mxu0 0
  %335 = vmatprep.subr.bf16.mxu0 0
  %336 = vmatpush1.bf16.msra.mxu0 0
  %337 = vmatprep.subr.bf16.mxu0 0
  %338 = vmatpush1.bf16.msra.mxu0 0
  %339 = vmatprep.subr.bf16.mxu0 0
  %340 = vmatpush1.bf16.msra.mxu0 0
  %341 = vmatprep.subr.bf16.mxu0 0
  %342 = vmatpush1.bf16.msra.mxu0 0
  %343 = vmatprep.subr.bf16.mxu0 0
  %344 = vmatpush1.bf16.msra.mxu0 0
  %345 = vmatprep.subr.bf16.mxu0 0
  %346 = vmatpush1.bf16.msra.mxu0 0
  %347 = vmatprep.subr.bf16.mxu0 0
  %348 = vmatpush1.bf16.msra.mxu0 0
  %349 = vmatprep.subr.bf16.mxu0 0
  %350 = vmatpush1.bf16.msra.mxu0 0
  %351 = vmatprep.subr.bf16.mxu0 0
  %352 = vmatpush1.bf16.msra.mxu0 0
  %353 = vmatprep.subr.bf16.mxu0 0
  %354 = vmatpush1.bf16.msra.mxu0 0
  %355 = vmatprep.subr.bf16.mxu0 0
  %356 = vmatpush1.bf16.msra.mxu0 0
  %357 = vmatprep.subr.bf16.mxu0 0
  %358 = vmatpush1.bf16.msra.mxu0 0
  %359 = vmatprep.subr.bf16.mxu0 0
  %360 = vmatpush1.bf16.msra.mxu0 0
  %361 = vmatprep.mubr.bf16.mxu0 0
  %362 = vmatmul.mubr.bf16.gmra.mrb[0].mxu0 %v193
  %v363 = vpop.f32.mrb[0].mxu0
  %v364 = vadd.f32 %v54, %v363
  %v365 = vpop.f32.mrb[0].mxu0
  %v366 = vadd.f32 %v54, %v365
  %v367 = vpop.f32.mrb[0].mxu0
  %v368 = vadd.f32 %v59, %v367
  %v369 = vpop.f32.mrb[0].mxu0
  %v370 = vadd.f32 %v59, %v369
  %371 = vmatprep.mubr.bf16.mxu0 0
  %372 = vmatmul.mubr.bf16.gmra.mrb[0].mxu0 %v196
  %v373 = vpop.f32.mrb[0].mxu0
  %v374 = vadd.f32 %v64, %v373
  %v375 = vpop.f32.mrb[0].mxu0
  %v376 = vadd.f32 %v64, %v375
  %v377 = vpop.f32.mrb[0].mxu0
  %v378 = vadd.f32 %v69, %v377
  %v379 = vpop.f32.mrb[0].mxu0
  %v380 = vadd.f32 %v69, %v379
  %381 = vmatprep.mubr.bf16.mxu0 0
  %382 = vmatmul.mubr.bf16.gmra.mrb[0].mxu0 %v199
  %v383 = vpop.f32.mrb[0].mxu0
  %v384 = vadd.f32 %v74, %v383
  %v385 = vpop.f32.mrb[0].mxu0
  %v386 = vadd.f32 %v74, %v385
  %v387 = vpop.f32.mrb[0].mxu0
  %v388 = vadd.f32 %v79, %v387
  %v389 = vpop.f32.mrb[0].mxu0
  %v390 = vadd.f32 %v79, %v389
  %391 = vmatprep.mubr.bf16.mxu0 0
  %392 = vmatmul.mubr.bf16.gmra.mrb[0].mxu0 %v202
  %v393 = vpop.f32.mrb[0].mxu0
  %v394 = vadd.f32 %v84, %v393
  %v395 = vpop.f32.mrb[0].mxu0
  %v396 = vadd.f32 %v84, %v395
  %v397 = vpop.f32.mrb[0].mxu0
  %v398 = vadd.f32 %v89, %v397
  %v399 = vpop.f32.mrb[0].mxu0
  %v400 = vadd.f32 %v89, %v399
  %401 = vmatprep.mubr.bf16.mxu0 0
  %402 = vmatmul.mubr.bf16.gmra.mrb[0].mxu0 %v205
  %v403 = vpop.f32.mrb[0].mxu0
  %v404 = vadd.f32 %v94, %v403
  %v405 = vpop.f32.mrb[0].mxu0
  %v406 = vadd.f32 %v94, %v405
  %v407 = vpop.f32.mrb[0].mxu0
  %v408 = vadd.f32 %v99, %v407
  %v409 = vpop.f32.mrb[0].mxu0
  %v410 = vadd.f32 %v99, %v409
  %411 = vmatprep.mubr.bf16.mxu0 0
  %412 = vmatmul.mubr.bf16.gmra.mrb[0].mxu0 %v208
  %v413 = vpop.f32.mrb[0].mxu0
  %v414 = vadd.f32 %v104, %v413
  %v415 = vpop.f32.mrb[0].mxu0
  %v416 = vadd.f32 %v104, %v415
  %v417 = vpop.f32.mrb[0].mxu0
  %v418 = vadd.f32 %v109, %v417
  %v419 = vpop.f32.mrb[0].mxu0
  %v420 = vadd.f32 %v109, %v419
  %421 = vmatprep.mubr.bf16.mxu0 0
  %422 = vmatmul.mubr.bf16.gmra.mrb[0].mxu0 %v211
  %v423 = vpop.f32.mrb[0].mxu0
  %v424 = vadd.f32 %v114, %v423
  %v425 = vpop.f32.mrb[0].mxu0
  %v426 = vadd.f32 %v114, %v425
  %v427 = vpop.f32.mrb[0].mxu0
  %v428 = vadd.f32 %v119, %v427
  %v429 = vpop.f32.mrb[0].mxu0
  %v430 = vadd.f32 %v119, %v429
  %431 = vmatprep.mubr.bf16.mxu0 0
  %432 = vmatmul.mubr.bf16.gmra.mrb[0].mxu0 %v214
  %v433 = vpop.f32.mrb[0].mxu0
  %v434 = vadd.f32 %v124, %v433
  %v435 = vpop.f32.mrb[0].mxu0
  %v436 = vadd.f32 %v124, %v435
  %v437 = vpop.f32.mrb[0].mxu0
  %v438 = vadd.f32 %v129, %v437
  %v439 = vpop.f32.mrb[0].mxu0
  %v440 = vadd.f32 %v129, %v439
  %441 = vdwg.mxu0
  %v442 = vmax.f32 %v251, 0.0
  %v443 = vmax.f32 %v253, 0.0
  %v444 = vmax.f32 %v364, 0.0
  %v445 = vmax.f32 %v366, 0.0
  %v446 = vmax.f32 %v255, 0.0
  %v447 = vmax.f32 %v257, 0.0
  %v448 = vmax.f32 %v368, 0.0
  %v449 = vmax.f32 %v370, 0.0
  %v450 = vmax.f32 %v261, 0.0
  %v451 = vmax.f32 %v263, 0.0
  %v452 = vmax.f32 %v374, 0.0
  %v453 = vmax.f32 %v376, 0.0
  %v454 = vmax.f32 %v265, 0.0
  %v455 = vmax.f32 %v267, 0.0
  %v456 = vmax.f32 %v378, 0.0
  %v457 = vmax.f32 %v380, 0.0
  %v458 = vmax.f32 %v271, 0.0
  %v459 = vmax.f32 %v273, 0.0
  %v460 = vmax.f32 %v384, 0.0
  %v461 = vmax.f32 %v386, 0.0
  %v462 = vmax.f32 %v275, 0.0
  %v463 = vmax.f32 %v277, 0.0
  %v464 = vmax.f32 %v388, 0.0
  %v465 = vmax.f32 %v390, 0.0
  %v466 = vmax.f32 %v281, 0.0
  %v467 = vmax.f32 %v283, 0.0
  %v468 = vmax.f32 %v394, 0.0
  %v469 = vmax.f32 %v396, 0.0
  %v470 = vmax.f32 %v285, 0.0
  %v471 = vmax.f32 %v287, 0.0
  %v472 = vmax.f32 %v398, 0.0
  %v473 = vmax.f32 %v400, 0.0
  %v474 = vmax.f32 %v291, 0.0
  %v475 = vmax.f32 %v293, 0.0
  %v476 = vmax.f32 %v404, 0.0
  %v477 = vmax.f32 %v406, 0.0
  %v478 = vmax.f32 %v295, 0.0
  %v479 = vmax.f32 %v297, 0.0
  %v480 = vmax.f32 %v408, 0.0
  %v481 = vmax.f32 %v410, 0.0
  %v482 = vmax.f32 %v301, 0.0
  %v483 = vmax.f32 %v303, 0.0
  %v484 = vmax.f32 %v414, 0.0
  %v485 = vmax.f32 %v416, 0.0
  %v486 = vmax.f32 %v305, 0.0
  %v487 = vmax.f32 %v307, 0.0
  %v488 = vmax.f32 %v418, 0.0
  %v489 = vmax.f32 %v420, 0.0
  %v490 = vmax.f32 %v311, 0.0
  %v491 = vmax.f32 %v313, 0.0
  %v492 = vmax.f32 %v424, 0.0
  %v493 = vmax.f32 %v426, 0.0
  %v494 = vmax.f32 %v315, 0.0
  %v495 = vmax.f32 %v317, 0.0
  %v496 = vmax.f32 %v428, 0.0
  %v497 = vmax.f32 %v430, 0.0
  %v498 = vmax.f32 %v321, 0.0
  %v499 = vmax.f32 %v323, 0.0
  %v500 = vmax.f32 %v434, 0.0
  %v501 = vmax.f32 %v436, 0.0
  %v502 = vmax.f32 %v325, 0.0
  %v503 = vmax.f32 %v327, 0.0
  %v504 = vmax.f32 %v438, 0.0
  %v505 = vmax.f32 %v440, 0.0
  %506 = vst [vmem:[%s3] sm:$0xff] %v442
  %507 = vst [vmem:[%s3 + $0x8] sm:$0xff] %v443
  %508 = vst [vmem:[%s3 + $0x10] sm:$0xff] %v444
  %vm509 = vcmask 64512
  %510 = vst.msk [vmem:[%s3 + $0x18] sm:$0xff] %vm509, %v445
  %511 = vst [vmem:[%s3 + $0x20] sm:$0xff] %v446
  %512 = vst [vmem:[%s3 + $0x28] sm:$0xff] %v447
  %513 = vst [vmem:[%s3 + $0x30] sm:$0xff] %v448
  %514 = vst.msk [vmem:[%s3 + $0x38] sm:$0xff] %vm509, %v449
  %515 = vst [vmem:[%s3 + $0x40] sm:$0xff] %v450
  %516 = vst [vmem:[%s3 + $0x48] sm:$0xff] %v451
  %517 = vst [vmem:[%s3 + $0x50] sm:$0xff] %v452
  %518 = vst.msk [vmem:[%s3 + $0x58] sm:$0xff] %vm509, %v453
  %519 = vst [vmem:[%s3 + $0x60] sm:$0xff] %v454
  %520 = vst [vmem:[%s3 + $0x68] sm:$0xff] %v455
  %521 = vst [vmem:[%s3 + $0x70] sm:$0xff] %v456
  %522 = vst.msk [vmem:[%s3 + $0x78] sm:$0xff] %vm509, %v457
  %523 = vst [vmem:[%s3 + $0x80] sm:$0xff] %v458
  %524 = vst [vmem:[%s3 + $0x88] sm:$0xff] %v459
  %525 = vst [vmem:[%s3 + $0x90] sm:$0xff] %v460
  %526 = vst.msk [vmem:[%s3 + $0x98] sm:$0xff] %vm509, %v461
  %527 = vst [vmem:[%s3 + $0xa0] sm:$0xff] %v462
  %528 = vst [vmem:[%s3 + $0xa8] sm:$0xff] %v463
  %529 = vst [vmem:[%s3 + $0xb0] sm:$0xff] %v464
  %530 = vst.msk [vmem:[%s3 + $0xb8] sm:$0xff] %vm509, %v465
  %531 = vst [vmem:[%s3 + $0xc0] sm:$0xff] %v466
  %532 = vst [vmem:[%s3 + $0xc8] sm:$0xff] %v467
  %533 = vst [vmem:[%s3 + $0xd0] sm:$0xff] %v468
  %534 = vst.msk [vmem:[%s3 + $0xd8] sm:$0xff] %vm509, %v469
  %535 = vst [vmem:[%s3 + $0xe0] sm:$0xff] %v470
  %536 = vst [vmem:[%s3 + $0xe8] sm:$0xff] %v471
  %537 = vst [vmem:[%s3 + $0xf0] sm:$0xff] %v472
  %538 = vst.msk [vmem:[%s3 + $0xf8] sm:$0xff] %vm509, %v473
  %539 = vst [vmem:[%s3 + $0x100] sm:$0xff] %v474
  %540 = vst [vmem:[%s3 + $0x108] sm:$0xff] %v475
  %541 = vst [vmem:[%s3 + $0x110] sm:$0xff] %v476
  %542 = vst.msk [vmem:[%s3 + $0x118] sm:$0xff] %vm509, %v477
  %543 = vst [vmem:[%s3 + $0x120] sm:$0xff] %v478
  %544 = vst [vmem:[%s3 + $0x128] sm:$0xff] %v479
  %545 = vst [vmem:[%s3 + $0x130] sm:$0xff] %v480
  %546 = vst.msk [vmem:[%s3 + $0x138] sm:$0xff] %vm509, %v481
  %547 = vst [vmem:[%s3 + $0x140] sm:$0xff] %v482
  %548 = vst [vmem:[%s3 + $0x148] sm:$0xff] %v483
  %549 = vst [vmem:[%s3 + $0x150] sm:$0xff] %v484
  %550 = vst.msk [vmem:[%s3 + $0x158] sm:$0xff] %vm509, %v485
  %551 = vst [vmem:[%s3 + $0x160] sm:$0xff] %v486
  %552 = vst [vmem:[%s3 + $0x168] sm:$0xff] %v487
  %553 = vst [vmem:[%s3 + $0x170] sm:$0xff] %v488
  %554 = vst.msk [vmem:[%s3 + $0x178] sm:$0xff] %vm509, %v489
  %555 = vst [vmem:[%s3 + $0x180] sm:$0xff] %v490
  %556 = vst [vmem:[%s3 + $0x188] sm:$0xff] %v491
  %557 = vst [vmem:[%s3 + $0x190] sm:$0xff] %v492
  %558 = vst.msk [vmem:[%s3 + $0x198] sm:$0xff] %vm509, %v493
  %559 = vst [vmem:[%s3 + $0x1a0] sm:$0xff] %v494
  %560 = vst [vmem:[%s3 + $0x1a8] sm:$0xff] %v495
  %561 = vst [vmem:[%s3 + $0x1b0] sm:$0xff] %v496
  %562 = vst.msk [vmem:[%s3 + $0x1b8] sm:$0xff] %vm509, %v497
  %563 = vst [vmem:[%s3 + $0x1c0] sm:$0xff] %v498
  %564 = vst [vmem:[%s3 + $0x1c8] sm:$0xff] %v499
  %565 = vst [vmem:[%s3 + $0x1d0] sm:$0xff] %v500
  %566 = vst.msk [vmem:[%s3 + $0x1d8] sm:$0xff] %vm509, %v501
  %567 = vst [vmem:[%s3 + $0x1e0] sm:$0xff] %v502
  %568 = vst [vmem:[%s3 + $0x1e8] sm:$0xff] %v503
  %569 = vst [vmem:[%s3 + $0x1f0] sm:$0xff] %v504
  %570 = vst.msk [vmem:[%s3 + $0x1f8] sm:$0xff] %vm509, %v505
  // Predicated region
  $region14: #{conv_denoiser_forward.12} parent=0 // pred_check
    _
  $region15: #{conv_denoiser_forward.12} parent=0 // pred_check_branch
    %572 = sbr.rel (0) target = $region17
  $region16: #{conv_denoiser_forward.12} parent=0 // pred_region
    _
  $region17: #{conv_denoiser_forward.12} parent=0 // pred_fallthru
    _
  // Predicated region
  $region18: #{conv_denoiser_forward.12} parent=0 // pred_check
    _
  $region19: #{conv_denoiser_forward.12} parent=0 // pred_check_branch
    %574 = sbr.rel (0) target = $region21
  $region20: #{conv_denoiser_forward.12} parent=0 // pred_region
    _
  $region21: #{conv_denoiser_forward.12} parent=0 // pred_fallthru
    _

// kernel: conv_denoiser_forward.13
$region0: #{conv_denoiser_forward.13}
  #allocation0 [shape = 'u32[]', space=smem, size = 0x4, offset = 0x4, fixed_abs, tag = 'smem constant byte address 0x4 - core index']
  #allocation1 [shape = 'u32[144,128]{1,0:T(1,128)}', space=vmem, size = 0x12000, scoped, tag = 'internal scratch']
  #allocation2 [shape = 'f32[1,1]{1,0:T(1,128)S(1)}', space=vmem, size = 0x200, scoped, tag = 'scoped memory for conv_denoiser_forward.13']
  %s0 = inlined_call_operand.vmem [shape: bf16[1,288], index: 0, kind: input, shape index: {}]
  %s1 = inlined_call_operand.vmem [shape: bf16[288,1568], index: 1, kind: input, shape index: {}]
  %s2 = inlined_call_operand.<no memory space> [shape: f32[1,1], index: 2, kind: input, shape index: {}]
  %s3 = inlined_call_operand.vmem [shape: f32[1,1568], index: 3, kind: output, shape index: {}]
  %s4 = sld [smem:[#allocation0]]
  $region22: #{conv_denoiser_forward.13} parent=0
    _
  %s6 = ssub.s32 1, %s4
  %s7 = scalar_select 0, %s6, %s4
  %v8 = vstv %s2
  %9 = vst [vmem:[#allocation2] sm:$0x1] %v8
  // Predicated region
  $region2: #{conv_denoiser_forward.13} parent=0 // pred_check
    _
  $region3: #{conv_denoiser_forward.13} parent=0 // pred_check_branch
    %11 = sbr.rel (0) target = $region5
  $region4: #{conv_denoiser_forward.13} parent=0 // pred_region
    _
  $region5: #{conv_denoiser_forward.13} parent=0 // pred_fallthru
    _
  // Predicated region
  $region6: #{conv_denoiser_forward.13} parent=0 // pred_check
    _
  $region7: #{conv_denoiser_forward.13} parent=0 // pred_check_branch
    %13 = sbr.rel (0) target = $region9
  $region8: #{conv_denoiser_forward.13} parent=0 // pred_region
    _
  $region9: #{conv_denoiser_forward.13} parent=0 // pred_fallthru
    _
  // Predicated region
  $region10: #{conv_denoiser_forward.13} parent=0 // pred_check
    _
  $region11: #{conv_denoiser_forward.13} parent=0 // pred_check_branch
    %15 = sbr.rel (0) target = $region13
  $region12: #{conv_denoiser_forward.13} parent=0 // pred_region
    _
  $region13: #{conv_denoiser_forward.13} parent=0 // pred_fallthru
    _
  %v17 = vld [vmem:[%s0] sm:$0x7]
  %v18 = vld [vmem:[%s1] sm:$0xff]
  %v19 = vld [vmem:[%s1 + $0x8] sm:$0xff]
  %v20 = vld [vmem:[%s1 + $0x10] sm:$0xff]
  %v21 = vld [vmem:[%s1 + $0x18] sm:$0xff]
  %v22 = vld [vmem:[%s1 + $0x20] sm:$0xff]
  %v23 = vld [vmem:[%s1 + $0x28] sm:$0xff]
  %v24 = vld [vmem:[%s1 + $0x30] sm:$0xf]
  %v25 = vld [vmem:[%s1 + $0x34] sm:$0xff]
  %v26 = vld [vmem:[%s1 + $0x3c] sm:$0xff]
  %v27 = vld [vmem:[%s1 + $0x44] sm:$0xff]
  %v28 = vld [vmem:[%s1 + $0x4c] sm:$0xff]
  %v29 = vld [vmem:[%s1 + $0x54] sm:$0xff]
  %v30 = vld [vmem:[%s1 + $0x5c] sm:$0xff]
  %v31 = vld [vmem:[%s1 + $0x64] sm:$0xf]
  %v32 = vld [vmem:[%s1 + $0x68] sm:$0xff]
  %v33 = vld [vmem:[%s1 + $0x70] sm:$0xff]
  %v34 = vld [vmem:[%s1 + $0x78] sm:$0xff]
  %v35 = vld [vmem:[%s1 + $0x80] sm:$0xff]
  %v36 = vld [vmem:[%s1 + $0x88] sm:$0xff]
  %v37 = vld [vmem:[%s1 + $0x90] sm:$0xff]
  %v38 = vld [vmem:[%s1 + $0x98] sm:$0xf]
  %v39 = vld [vmem:[%s1 + $0x9c] sm:$0xff]
  %v40 = vld [vmem:[%s1 + $0xa4] sm:$0xff]
  %v41 = vld [vmem:[%s1 + $0xac] sm:$0xff]
  %v42 = vld [vmem:[%s1 + $0xb4] sm:$0xff]
  %v43 = vld [vmem:[%s1 + $0xbc] sm:$0xff]
  %v44 = vld [vmem:[%s1 + $0xc4] sm:$0xff]
  %v45 = vld [vmem:[%s1 + $0xcc] sm:$0xf]
  %v46 = vld [vmem:[%s1 + $0xd0] sm:$0xff]
  %v47 = vld [vmem:[%s1 + $0xd8] sm:$0xff]
  %v48 = vld [vmem:[%s1 + $0xe0] sm:$0xff]
  %v49 = vld [vmem:[%s1 + $0xe8] sm:$0xff]
  %v50 = vld [vmem:[%s1 + $0xf0] sm:$0xff]
  %v51 = vld [vmem:[%s1 + $0xf8] sm:$0xff]
  %v52 = vld [vmem:[%s1 + $0x100] sm:$0xf]
  %v53 = vld [vmem:[%s1 + $0x104] sm:$0xff]
  %v54 = vld [vmem:[%s1 + $0x10c] sm:$0xff]
  %v55 = vld [vmem:[%s1 + $0x114] sm:$0xff]
  %v56 = vld [vmem:[%s1 + $0x11c] sm:$0xff]
  %v57 = vld [vmem:[%s1 + $0x124] sm:$0xff]
  %v58 = vld [vmem:[%s1 + $0x12c] sm:$0xff]
  %v59 = vld [vmem:[%s1 + $0x134] sm:$0xf]
  %v60 = vld [vmem:[%s1 + $0x138] sm:$0xff]
  %v61 = vld [vmem:[%s1 + $0x140] sm:$0xff]
  %v62 = vld [vmem:[%s1 + $0x148] sm:$0xff]
  %v63 = vld [vmem:[%s1 + $0x150] sm:$0xff]
  %v64 = vld [vmem:[%s1 + $0x158] sm:$0xff]
  %v65 = vld [vmem:[%s1 + $0x160] sm:$0xff]
  %v66 = vld [vmem:[%s1 + $0x168] sm:$0xf]
  %v67 = vld [vmem:[%s1 + $0x16c] sm:$0xff]
  %v68 = vld [vmem:[%s1 + $0x174] sm:$0xff]
  %v69 = vld [vmem:[%s1 + $0x17c] sm:$0xff]
  %v70 = vld [vmem:[%s1 + $0x184] sm:$0xff]
  %v71 = vld [vmem:[%s1 + $0x18c] sm:$0xff]
  %v72 = vld [vmem:[%s1 + $0x194] sm:$0xff]
  %v73 = vld [vmem:[%s1 + $0x19c] sm:$0xf]
  %v74 = vld [vmem:[%s1 + $0x1a0] sm:$0xff]
  %v75 = vld [vmem:[%s1 + $0x1a8] sm:$0xff]
  %v76 = vld [vmem:[%s1 + $0x1b0] sm:$0xff]
  %v77 = vld [vmem:[%s1 + $0x1b8] sm:$0xff]
  %v78 = vld [vmem:[%s1 + $0x1c0] sm:$0xff]
  %v79 = vld [vmem:[%s1 + $0x1c8] sm:$0xff]
  %v80 = vld [vmem:[%s1 + $0x1d0] sm:$0xf]
  %v81 = vld [vmem:[%s1 + $0x1d4] sm:$0xff]
  %v82 = vld [vmem:[%s1 + $0x1dc] sm:$0xff]
  %v83 = vld [vmem:[%s1 + $0x1e4] sm:$0xff]
  %v84 = vld [vmem:[%s1 + $0x1ec] sm:$0xff]
  %v85 = vld [vmem:[%s1 + $0x1f4] sm:$0xff]
  %v86 = vld [vmem:[%s1 + $0x1fc] sm:$0xff]
  %v87 = vld [vmem:[%s1 + $0x204] sm:$0xf]
  %v88 = vld [vmem:[%s1 + $0x208] sm:$0xff]
  %v89 = vld [vmem:[%s1 + $0x210] sm:$0xff]
  %v90 = vld [vmem:[%s1 + $0x218] sm:$0xff]
  %v91 = vld [vmem:[%s1 + $0x220] sm:$0xff]
  %v92 = vld [vmem:[%s1 + $0x228] sm:$0xff]
  %v93 = vld [vmem:[%s1 + $0x230] sm:$0xff]
  %v94 = vld [vmem:[%s1 + $0x238] sm:$0xf]
  %v95 = vld [vmem:[%s1 + $0x23c] sm:$0xff]
  %v96 = vld [vmem:[%s1 + $0x244] sm:$0xff]
  %v97 = vld [vmem:[%s1 + $0x24c] sm:$0xff]
  %v98 = vld [vmem:[%s1 + $0x254] sm:$0xff]
  %v99 = vld [vmem:[%s1 + $0x25c] sm:$0xff]
  %v100 = vld [vmem:[%s1 + $0x264] sm:$0xff]
  %v101 = vld [vmem:[%s1 + $0x26c] sm:$0xf]
  %v102 = vld [vmem:[%s1 + $0x270] sm:$0xff]
  %v103 = vld [vmem:[%s1 + $0x278] sm:$0xff]
  %v104 = vld [vmem:[%s1 + $0x280] sm:$0xff]
  %v105 = vld [vmem:[%s1 + $0x288] sm:$0xff]
  %v106 = vld [vmem:[%s1 + $0x290] sm:$0xff]
  %v107 = vld [vmem:[%s1 + $0x298] sm:$0xff]
  %v108 = vld [vmem:[%s1 + $0x2a0] sm:$0xf]
  %v109 = vld [vmem:[%s1 + $0x2a4] sm:$0xff]
  %v110 = vld [vmem:[%s1 + $0x2ac] sm:$0xff]
  %v111 = vld [vmem:[%s1 + $0x2b4] sm:$0xff]
  %v112 = vld [vmem:[%s1 + $0x2bc] sm:$0xff]
  %v113 = vld [vmem:[%s1 + $0x2c4] sm:$0xff]
  %v114 = vld [vmem:[%s1 + $0x2cc] sm:$0xff]
  %v115 = vld [vmem:[%s1 + $0x2d4] sm:$0xf]
  %v116 = vld [vmem:[%s1 + $0x2d8] sm:$0xff]
  %v117 = vld [vmem:[%s1 + $0x2e0] sm:$0xff]
  %v118 = vld [vmem:[%s1 + $0x2e8] sm:$0xff]
  %v119 = vld [vmem:[%s1 + $0x2f0] sm:$0xff]
  %v120 = vld [vmem:[%s1 + $0x2f8] sm:$0xff]
  %v121 = vld [vmem:[%s1 + $0x300] sm:$0xff]
  %v122 = vld [vmem:[%s1 + $0x308] sm:$0xf]
  %v123 = vld [vmem:[%s1 + $0x30c] sm:$0xff]
  %v124 = vld [vmem:[%s1 + $0x314] sm:$0xff]
  %v125 = vld [vmem:[%s1 + $0x31c] sm:$0xff]
  %v126 = vld [vmem:[%s1 + $0x324] sm:$0xff]
  %v127 = vld [vmem:[%s1 + $0x32c] sm:$0xff]
  %v128 = vld [vmem:[%s1 + $0x334] sm:$0xff]
  %v129 = vld [vmem:[%s1 + $0x33c] sm:$0xf]
  %v130 = vld [vmem:[%s1 + $0x340] sm:$0xff]
  %v131 = vld [vmem:[%s1 + $0x348] sm:$0xff]
  %v132 = vld [vmem:[%s1 + $0x350] sm:$0xff]
  %v133 = vld [vmem:[%s1 + $0x358] sm:$0xff]
  %v134 = vld [vmem:[%s1 + $0x360] sm:$0xff]
  %v135 = vld [vmem:[%s1 + $0x368] sm:$0xff]
  %v136 = vld [vmem:[%s1 + $0x370] sm:$0xf]
  %v137 = vld [vmem:[%s1 + $0x374] sm:$0xff]
  %v138 = vld [vmem:[%s1 + $0x37c] sm:$0xff]
  %v139 = vld [vmem:[%s1 + $0x384] sm:$0xff]
  %v140 = vld [vmem:[%s1 + $0x38c] sm:$0xff]
  %v141 = vld [vmem:[%s1 + $0x394] sm:$0xff]
  %v142 = vld [vmem:[%s1 + $0x39c] sm:$0xff]
  %v143 = vld [vmem:[%s1 + $0x3a4] sm:$0xf]
  %v144 = vld [vmem:[%s1 + $0x3a8] sm:$0xff]
  %v145 = vld [vmem:[%s1 + $0x3b0] sm:$0xff]
  %v146 = vld [vmem:[%s1 + $0x3b8] sm:$0xff]
  %v147 = vld [vmem:[%s1 + $0x3c0] sm:$0xff]
  %v148 = vld [vmem:[%s1 + $0x3c8] sm:$0xff]
  %v149 = vld [vmem:[%s1 + $0x3d0] sm:$0xff]
  %v150 = vld [vmem:[%s1 + $0x3d8] sm:$0xf]
  %v151 = vld [vmem:[%s1 + $0x3dc] sm:$0xff]
  %v152 = vld [vmem:[%s1 + $0x3e4] sm:$0xff]
  %v153 = vld [vmem:[%s1 + $0x3ec] sm:$0xff]
  %v154 = vld [vmem:[%s1 + $0x3f4] sm:$0xff]
  %v155 = vld [vmem:[%s1 + $0x3fc] sm:$0xff]
  %v156 = vld [vmem:[%s1 + $0x404] sm:$0xff]
  %v157 = vld [vmem:[%s1 + $0x40c] sm:$0xf]
  %v158 = vld [vmem:[%s1 + $0x410] sm:$0xff]
  %v159 = vld [vmem:[%s1 + $0x418] sm:$0xff]
  %v160 = vld [vmem:[%s1 + $0x420] sm:$0xff]
  %v161 = vld [vmem:[%s1 + $0x428] sm:$0xff]
  %v162 = vld [vmem:[%s1 + $0x430] sm:$0xff]
  %v163 = vld [vmem:[%s1 + $0x438] sm:$0xff]
  %v164 = vld [vmem:[%s1 + $0x440] sm:$0xf]
  %v165 = vld [vmem:[%s1 + $0x444] sm:$0xff]
  %v166 = vld [vmem:[%s1 + $0x44c] sm:$0xff]
  %v167 = vld [vmem:[%s1 + $0x454] sm:$0xff]
  %v168 = vld [vmem:[%s1 + $0x45c] sm:$0xff]
  %v169 = vld [vmem:[%s1 + $0x464] sm:$0xff]
  %v170 = vld [vmem:[%s1 + $0x46c] sm:$0xff]
  %v171 = vld [vmem:[%s1 + $0x474] sm:$0xf]
  %v172 = vld [vmem:[%s1 + $0x478] sm:$0xff]
  %v173 = vld [vmem:[%s1 + $0x480] sm:$0xff]
  %v174 = vld [vmem:[%s1 + $0x488] sm:$0xff]
  %v175 = vld [vmem:[%s1 + $0x490] sm:$0xff]
  %v176 = vld [vmem:[%s1 + $0x498] sm:$0xff]
  %v177 = vld [vmem:[%s1 + $0x4a0] sm:$0xff]
  %v178 = vld [vmem:[%s1 + $0x4a8] sm:$0xf]
  %v179 = vld [vmem:[%s1 + $0x4ac] sm:$0xff]
  %v180 = vld [vmem:[%s1 + $0x4b4] sm:$0xff]
  %v181 = vld [vmem:[%s1 + $0x4bc] sm:$0xff]
  %v182 = vld [vmem:[%s1 + $0x4c4] sm:$0xff]
  %v183 = vld [vmem:[%s1 + $0x4cc] sm:$0xff]
  %v184 = vld [vmem:[%s1 + $0x4d4] sm:$0xff]
  %v185 = vld [vmem:[%s1 + $0x4dc] sm:$0xf]
  %v186 = vld [vmem:[%s1 + $0x4e0] sm:$0xff]
  %v187 = vld [vmem:[%s1 + $0x4e8] sm:$0xff]
  %v188 = vld [vmem:[%s1 + $0x4f0] sm:$0xff]
  %v189 = vld [vmem:[%s1 + $0x4f8] sm:$0xff]
  %v190 = vld [vmem:[%s1 + $0x500] sm:$0xff]
  %v191 = vld [vmem:[%s1 + $0x508] sm:$0xff]
  %v192 = vld [vmem:[%s1 + $0x510] sm:$0xf]
  %v193 = vld [vmem:[%s1 + $0x514] sm:$0xff]
  %v194 = vld [vmem:[%s1 + $0x51c] sm:$0xff]
  %v195 = vld [vmem:[%s1 + $0x524] sm:$0xff]
  %v196 = vld [vmem:[%s1 + $0x52c] sm:$0xff]
  %v197 = vld [vmem:[%s1 + $0x534] sm:$0xff]
  %v198 = vld [vmem:[%s1 + $0x53c] sm:$0xff]
  %v199 = vld [vmem:[%s1 + $0x544] sm:$0xf]
  %v200 = vld [vmem:[%s1 + $0x548] sm:$0xff]
  %v201 = vld [vmem:[%s1 + $0x550] sm:$0xff]
  %v202 = vld [vmem:[%s1 + $0x558] sm:$0xff]
  %v203 = vld [vmem:[%s1 + $0x560] sm:$0xff]
  %v204 = vld [vmem:[%s1 + $0x568] sm:$0xff]
  %v205 = vld [vmem:[%s1 + $0x570] sm:$0xff]
  %v206 = vld [vmem:[%s1 + $0x578] sm:$0xf]
  %v207 = vld [vmem:[%s1 + $0x57c] sm:$0xff]
  %v208 = vld [vmem:[%s1 + $0x584] sm:$0xff]
  %v209 = vld [vmem:[%s1 + $0x58c] sm:$0xff]
  %v210 = vld [vmem:[%s1 + $0x594] sm:$0xff]
  %v211 = vld [vmem:[%s1 + $0x59c] sm:$0xff]
  %v212 = vld [vmem:[%s1 + $0x5a4] sm:$0xff]
  %v213 = vld [vmem:[%s1 + $0x5ac] sm:$0xf]
  %v214 = vld [vmem:[%s1 + $0x5b0] sm:$0xff]
  %v215 = vld [vmem:[%s1 + $0x5b8] sm:$0xff]
  %v216 = vld [vmem:[%s1 + $0x5c0] sm:$0xff]
  %v217 = vld [vmem:[%s1 + $0x5c8] sm:$0xff]
  %v218 = vld [vmem:[%s1 + $0x5d0] sm:$0xff]
  %v219 = vld [vmem:[%s1 + $0x5d8] sm:$0xff]
  %v220 = vld [vmem:[%s1 + $0x5e0] sm:$0xf]
  %v221 = vld [vmem:[%s1 + $0x5e4] sm:$0xff]
  %v222 = vld [vmem:[%s1 + $0x5ec] sm:$0xff]
  %v223 = vld [vmem:[%s1 + $0x5f4] sm:$0xff]
  %v224 = vld [vmem:[%s1 + $0x5fc] sm:$0xff]
  %v225 = vld [vmem:[%s1 + $0x604] sm:$0xff]
  %v226 = vld [vmem:[%s1 + $0x60c] sm:$0xff]
  %v227 = vld [vmem:[%s1 + $0x614] sm:$0xf]
  %v228 = vld [vmem:[%s1 + $0x618] sm:$0xff]
  %v229 = vld [vmem:[%s1 + $0x620] sm:$0xff]
  %v230 = vld [vmem:[%s1 + $0x628] sm:$0xff]
  %v231 = vld [vmem:[%s1 + $0x630] sm:$0xff]
  %v232 = vld [vmem:[%s1 + $0x638] sm:$0xff]
  %v233 = vld [vmem:[%s1 + $0x640] sm:$0xff]
  %v234 = vld [vmem:[%s1 + $0x648] sm:$0xf]
  %v235 = vld [vmem:[%s1 + $0x64c] sm:$0xff]
  %v236 = vld [vmem:[%s1 + $0x654] sm:$0xff]
  %v237 = vld [vmem:[%s1 + $0x65c] sm:$0xff]
  %v238 = vld [vmem:[%s1 + $0x664] sm:$0xff]
  %v239 = vld [vmem:[%s1 + $0x66c] sm:$0xff]
  %v240 = vld [vmem:[%s1 + $0x674] sm:$0xff]
  %v241 = vld [vmem:[%s1 + $0x67c] sm:$0xf]
  %v242 = vld [vmem:[%s1 + $0x680] sm:$0xff]
  %v243 = vld [vmem:[%s1 + $0x688] sm:$0xff]
  %v244 = vld [vmem:[%s1 + $0x690] sm:$0xff]
  %v245 = vld [vmem:[%s1 + $0x698] sm:$0xff]
  %v246 = vld [vmem:[%s1 + $0x6a0] sm:$0xff]
  %v247 = vld [vmem:[%s1 + $0x6a8] sm:$0xff]
  %v248 = vld [vmem:[%s1 + $0x6b0] sm:$0xf]
  %v249 = vld [vmem:[%s1 + $0x6b4] sm:$0xff]
  %v250 = vld [vmem:[%s1 + $0x6bc] sm:$0xff]
  %v251 = vld [vmem:[%s1 + $0x6c4] sm:$0xff]
  %v252 = vld [vmem:[%s1 + $0x6cc] sm:$0xff]
  %v253 = vld [vmem:[%s1 + $0x6d4] sm:$0xff]
  %v254 = vld [vmem:[%s1 + $0x6dc] sm:$0xff]
  %v255 = vld [vmem:[%s1 + $0x6e4] sm:$0xf]
  %v256 = vld [vmem:[%s1 + $0x6e8] sm:$0xff]
  %v257 = vld [vmem:[%s1 + $0x6f0] sm:$0xff]
  %v258 = vld [vmem:[%s1 + $0x6f8] sm:$0xff]
  %v259 = vld [vmem:[%s1 + $0x700] sm:$0xff]
  %v260 = vld [vmem:[%s1 + $0x708] sm:$0xff]
  %v261 = vld [vmem:[%s1 + $0x710] sm:$0xff]
  %v262 = vld [vmem:[%s1 + $0x718] sm:$0xf]
  %v263 = vld [vmem:[%s1 + $0x71c] sm:$0xff]
  %v264 = vld [vmem:[%s1 + $0x724] sm:$0xff]
  %v265 = vld [vmem:[%s1 + $0x72c] sm:$0xff]
  %v266 = vld [vmem:[%s1 + $0x734] sm:$0xff]
  %v267 = vld [vmem:[%s1 + $0x73c] sm:$0xff]
  %v268 = vld [vmem:[%s1 + $0x744] sm:$0xff]
  %v269 = vld [vmem:[%s1 + $0x74c] sm:$0xf]
  %v270 = vld [vmem:[#allocation2] sm:$0x1]
  %272 = vset.pattern.permute.xlu0 0
  %273 = vperm.xlu0 %272, %v270
  %v274 = vpop.permute.xlu0 %273
  %v276 = vlaneseq
  %v277 = vshrl.u32 %v276, 7
  %v278 = vsub.s32 0, %v277
  %v279 = vrot.slane %v274, %v278
  %v282 = vunpack.c.l.s4 1966171168
  %v283 = vunpack.c.0.s8 %v282
  %v284 = vlaneseq
  %v285 = vshrl.u32 %v284, 7
  %v286 = vsub.s32 %v283, %v285
  %v287 = vrot.slane %v17, %v286
  %v288 = vcombine.high %v287, %v287
  %v290 = vunpack.c.l.s4 1966171168
  %v291 = vunpack.c.0.s8 %v290
  %v292 = vlaneseq
  %v293 = vshrl.u32 %v292, 7
  %v294 = vsub.s32 %v291, %v293
  %v295 = vrot.slane %v287, %v294
  %v297 = vunpack.c.l.s4 1966171168
  %v298 = vunpack.c.0.s8 %v297
  %v299 = vlaneseq
  %v300 = vshrl.u32 %v299, 7
  %v301 = vsub.s32 %v298, %v300
  %v302 = vrot.slane %v288, %v301
  %v303 = vcombine.high %v295, %v295
  %v558 = vunpack.c.l.b16 %v18
  %v559 = vunpack.c.h.b16 %v18
  %v560 = vunpack.c.l.b16 %v19
  %v561 = vunpack.c.h.b16 %v19
  %v562 = vunpack.c.l.b16 %v20
  %v563 = vunpack.c.h.b16 %v20
  %v564 = vunpack.c.l.b16 %v21
  %v565 = vunpack.c.h.b16 %v21
  %v566 = vunpack.c.l.b16 %v22
  %v567 = vunpack.c.h.b16 %v22
  %v568 = vunpack.c.l.b16 %v23
  %v569 = vunpack.c.h.b16 %v23
  %v570 = vunpack.c.l.b16 %v24
  %v571 = vunpack.c.l.b16 %v25
  %v572 = vunpack.c.h.b16 %v25
  %v573 = vunpack.c.l.b16 %v26
  %v574 = vunpack.c.h.b16 %v26
  %v575 = vunpack.c.l.b16 %v27
  %v576 = vunpack.c.h.b16 %v27
  %v577 = vunpack.c.l.b16 %v28
  %v578 = vunpack.c.h.b16 %v28
  %v579 = vunpack.c.l.b16 %v29
  %v580 = vunpack.c.h.b16 %v29
  %v581 = vunpack.c.l.b16 %v30
  %v582 = vunpack.c.h.b16 %v30
  %v583 = vunpack.c.l.b16 %v31
  %v584 = vunpack.c.l.b16 %v32
  %v585 = vunpack.c.h.b16 %v32
  %v586 = vunpack.c.l.b16 %v33
  %v587 = vunpack.c.h.b16 %v33
  %v588 = vunpack.c.l.b16 %v34
  %v589 = vunpack.c.h.b16 %v34
  %v590 = vunpack.c.l.b16 %v35
  %v591 = vunpack.c.h.b16 %v35
  %v592 = vunpack.c.l.b16 %v36
  %v593 = vunpack.c.h.b16 %v36
  %v594 = vunpack.c.l.b16 %v37
  %v595 = vunpack.c.h.b16 %v37
  %v596 = vunpack.c.l.b16 %v38
  %v597 = vunpack.c.l.b16 %v39
  %v598 = vunpack.c.h.b16 %v39
  %v599 = vunpack.c.l.b16 %v40
  %v600 = vunpack.c.h.b16 %v40
  %v601 = vunpack.c.l.b16 %v41
  %v602 = vunpack.c.h.b16 %v41
  %v603 = vunpack.c.l.b16 %v42
  %v604 = vunpack.c.h.b16 %v42
  %v605 = vunpack.c.l.b16 %v43
  %v606 = vunpack.c.h.b16 %v43
  %v607 = vunpack.c.l.b16 %v44
  %v608 = vunpack.c.h.b16 %v44
  %v609 = vunpack.c.l.b16 %v45
  %v610 = vunpack.c.l.b16 %v46
  %v611 = vunpack.c.h.b16 %v46
  %v612 = vunpack.c.l.b16 %v47
  %v613 = vunpack.c.h.b16 %v47
  %v614 = vunpack.c.l.b16 %v48
  %v615 = vunpack.c.h.b16 %v48
  %v616 = vunpack.c.l.b16 %v49
  %v617 = vunpack.c.h.b16 %v49
  %v618 = vunpack.c.l.b16 %v50
  %v619 = vunpack.c.h.b16 %v50
  %v620 = vunpack.c.l.b16 %v51
  %v621 = vunpack.c.h.b16 %v51
  %v622 = vunpack.c.l.b16 %v52
  %v623 = vunpack.c.l.b16 %v53
  %v624 = vunpack.c.h.b16 %v53
  %v625 = vunpack.c.l.b16 %v54
  %v626 = vunpack.c.h.b16 %v54
  %v627 = vunpack.c.l.b16 %v55
  %v628 = vunpack.c.h.b16 %v55
  %v629 = vunpack.c.l.b16 %v56
  %v630 = vunpack.c.h.b16 %v56
  %v631 = vunpack.c.l.b16 %v57
  %v632 = vunpack.c.h.b16 %v57
  %v633 = vunpack.c.l.b16 %v58
  %v634 = vunpack.c.h.b16 %v58
  %v635 = vunpack.c.l.b16 %v59
  %v636 = vunpack.c.l.b16 %v60
  %v637 = vunpack.c.h.b16 %v60
  %v638 = vunpack.c.l.b16 %v61
  %v639 = vunpack.c.h.b16 %v61
  %v640 = vunpack.c.l.b16 %v62
  %v641 = vunpack.c.h.b16 %v62
  %v642 = vunpack.c.l.b16 %v63
  %v643 = vunpack.c.h.b16 %v63
  %v644 = vunpack.c.l.b16 %v64
  %v645 = vunpack.c.h.b16 %v64
  %v646 = vunpack.c.l.b16 %v65
  %v647 = vunpack.c.h.b16 %v65
  %v648 = vunpack.c.l.b16 %v66
  %v649 = vunpack.c.l.b16 %v67
  %v650 = vunpack.c.h.b16 %v67
  %v651 = vunpack.c.l.b16 %v68
  %v652 = vunpack.c.h.b16 %v68
  %v653 = vunpack.c.l.b16 %v69
  %v654 = vunpack.c.h.b16 %v69
  %v655 = vunpack.c.l.b16 %v70
  %v656 = vunpack.c.h.b16 %v70
  %v657 = vunpack.c.l.b16 %v71
  %v658 = vunpack.c.h.b16 %v71
  %v659 = vunpack.c.l.b16 %v72
  %v660 = vunpack.c.h.b16 %v72
  %v661 = vunpack.c.l.b16 %v73
  %v662 = vunpack.c.l.b16 %v74
  %v663 = vunpack.c.h.b16 %v74
  %v664 = vunpack.c.l.b16 %v75
  %v665 = vunpack.c.h.b16 %v75
  %v666 = vunpack.c.l.b16 %v76
  %v667 = vunpack.c.h.b16 %v76
  %v668 = vunpack.c.l.b16 %v77
  %v669 = vunpack.c.h.b16 %v77
  %v670 = vunpack.c.l.b16 %v78
  %v671 = vunpack.c.h.b16 %v78
  %v672 = vunpack.c.l.b16 %v79
  %v673 = vunpack.c.h.b16 %v79
  %v674 = vunpack.c.l.b16 %v80
  %v675 = vunpack.c.l.b16 %v81
  %v676 = vunpack.c.h.b16 %v81
  %v677 = vunpack.c.l.b16 %v82
  %v678 = vunpack.c.h.b16 %v82
  %v679 = vunpack.c.l.b16 %v83
  %v680 = vunpack.c.h.b16 %v83
  %v681 = vunpack.c.l.b16 %v84
  %v682 = vunpack.c.h.b16 %v84
  %v683 = vunpack.c.l.b16 %v85
  %v684 = vunpack.c.h.b16 %v85
  %v685 = vunpack.c.l.b16 %v86
  %v686 = vunpack.c.h.b16 %v86
  %v687 = vunpack.c.l.b16 %v87
  %v688 = vunpack.c.l.b16 %v88
  %v689 = vunpack.c.h.b16 %v88
  %v690 = vunpack.c.l.b16 %v89
  %v691 = vunpack.c.h.b16 %v89
  %v692 = vunpack.c.l.b16 %v90
  %v693 = vunpack.c.h.b16 %v90
  %v694 = vunpack.c.l.b16 %v91
  %v695 = vunpack.c.h.b16 %v91
  %v696 = vunpack.c.l.b16 %v92
  %v697 = vunpack.c.h.b16 %v92
  %v698 = vunpack.c.l.b16 %v93
  %v699 = vunpack.c.h.b16 %v93
  %v700 = vunpack.c.l.b16 %v94
  %v701 = vunpack.c.l.b16 %v95
  %v702 = vunpack.c.h.b16 %v95
  %v703 = vunpack.c.l.b16 %v96
  %v704 = vunpack.c.h.b16 %v96
  %v705 = vunpack.c.l.b16 %v97
  %v706 = vunpack.c.h.b16 %v97
  %v707 = vunpack.c.l.b16 %v98
  %v708 = vunpack.c.h.b16 %v98
  %v709 = vunpack.c.l.b16 %v99
  %v710 = vunpack.c.h.b16 %v99
  %v711 = vunpack.c.l.b16 %v100
  %v712 = vunpack.c.h.b16 %v100
  %v713 = vunpack.c.l.b16 %v101
  %v714 = vunpack.c.l.b16 %v102
  %v715 = vunpack.c.h.b16 %v102
  %v716 = vunpack.c.l.b16 %v103
  %v717 = vunpack.c.h.b16 %v103
  %v718 = vunpack.c.l.b16 %v104
  %v719 = vunpack.c.h.b16 %v104
  %v720 = vunpack.c.l.b16 %v105
  %v721 = vunpack.c.h.b16 %v105
  %v722 = vunpack.c.l.b16 %v106
  %v723 = vunpack.c.h.b16 %v106
  %v724 = vunpack.c.l.b16 %v107
  %v725 = vunpack.c.h.b16 %v107
  %v726 = vunpack.c.l.b16 %v108
  %v727 = vunpack.c.l.b16 %v109
  %v728 = vunpack.c.h.b16 %v109
  %v729 = vunpack.c.l.b16 %v110
  %v730 = vunpack.c.h.b16 %v110
  %v731 = vunpack.c.l.b16 %v111
  %v732 = vunpack.c.h.b16 %v111
  %v733 = vunpack.c.l.b16 %v112
  %v734 = vunpack.c.h.b16 %v112
  %v735 = vunpack.c.l.b16 %v113
  %v736 = vunpack.c.h.b16 %v113
  %v737 = vunpack.c.l.b16 %v114
  %v738 = vunpack.c.h.b16 %v114
  %v739 = vunpack.c.l.b16 %v115
  %v740 = vunpack.c.l.b16 %v116
  %v741 = vunpack.c.h.b16 %v116
  %v742 = vunpack.c.l.b16 %v117
  %v743 = vunpack.c.h.b16 %v117
  %v744 = vunpack.c.l.b16 %v118
  %v745 = vunpack.c.h.b16 %v118
  %v746 = vunpack.c.l.b16 %v119
  %v747 = vunpack.c.h.b16 %v119
  %v748 = vunpack.c.l.b16 %v120
  %v749 = vunpack.c.h.b16 %v120
  %v750 = vunpack.c.l.b16 %v121
  %v751 = vunpack.c.h.b16 %v121
  %v752 = vunpack.c.l.b16 %v122
  %v753 = vunpack.c.l.b16 %v123
  %v754 = vunpack.c.h.b16 %v123
  %v755 = vunpack.c.l.b16 %v124
  %v756 = vunpack.c.h.b16 %v124
  %v757 = vunpack.c.l.b16 %v125
  %v758 = vunpack.c.h.b16 %v125
  %v759 = vunpack.c.l.b16 %v126
  %v760 = vunpack.c.h.b16 %v126
  %v761 = vunpack.c.l.b16 %v127
  %v762 = vunpack.c.h.b16 %v127
  %v763 = vunpack.c.l.b16 %v128
  %v764 = vunpack.c.h.b16 %v128
  %v765 = vunpack.c.l.b16 %v129
  %v766 = vunpack.c.l.b16 %v130
  %v767 = vunpack.c.h.b16 %v130
  %v768 = vunpack.c.l.b16 %v131
  %v769 = vunpack.c.h.b16 %v131
  %v770 = vunpack.c.l.b16 %v132
  %v771 = vunpack.c.h.b16 %v132
  %v772 = vunpack.c.l.b16 %v133
  %v773 = vunpack.c.h.b16 %v133
  %v774 = vunpack.c.l.b16 %v134
  %v775 = vunpack.c.h.b16 %v134
  %v776 = vunpack.c.l.b16 %v135
  %v777 = vunpack.c.h.b16 %v135
  %v778 = vunpack.c.l.b16 %v136
  %v779 = vunpack.c.l.b16 %v137
  %v780 = vunpack.c.h.b16 %v137
  %v781 = vunpack.c.l.b16 %v138
  %v782 = vunpack.c.h.b16 %v138
  %v783 = vunpack.c.l.b16 %v139
  %v784 = vunpack.c.h.b16 %v139
  %v785 = vunpack.c.l.b16 %v140
  %v786 = vunpack.c.h.b16 %v140
  %v787 = vunpack.c.l.b16 %v141
  %v788 = vunpack.c.h.b16 %v141
  %v789 = vunpack.c.l.b16 %v142
  %v790 = vunpack.c.h.b16 %v142
  %v791 = vunpack.c.l.b16 %v143
  %v792 = vunpack.c.l.b16 %v144
  %v793 = vunpack.c.h.b16 %v144
  %v794 = vunpack.c.l.b16 %v145
  %v795 = vunpack.c.h.b16 %v145
  %v796 = vunpack.c.l.b16 %v146
  %v797 = vunpack.c.h.b16 %v146
  %v798 = vunpack.c.l.b16 %v147
  %v799 = vunpack.c.h.b16 %v147
  %v800 = vunpack.c.l.b16 %v148
  %v801 = vunpack.c.h.b16 %v148
  %v802 = vunpack.c.l.b16 %v149
  %v803 = vunpack.c.h.b16 %v149
  %v804 = vunpack.c.l.b16 %v150
  %v805 = vunpack.c.l.b16 %v151
  %v806 = vunpack.c.h.b16 %v151
  %v807 = vunpack.c.l.b16 %v152
  %v808 = vunpack.c.h.b16 %v152
  %v809 = vunpack.c.l.b16 %v153
  %v810 = vunpack.c.h.b16 %v153
  %v811 = vunpack.c.l.b16 %v154
  %v812 = vunpack.c.h.b16 %v154
  %v813 = vunpack.c.l.b16 %v155
  %v814 = vunpack.c.h.b16 %v155
  %v815 = vunpack.c.l.b16 %v156
  %v816 = vunpack.c.h.b16 %v156
  %v817 = vunpack.c.l.b16 %v157
  %v818 = vunpack.c.l.b16 %v158
  %v819 = vunpack.c.h.b16 %v158
  %v820 = vunpack.c.l.b16 %v159
  %v821 = vunpack.c.h.b16 %v159
  %v822 = vunpack.c.l.b16 %v160
  %v823 = vunpack.c.h.b16 %v160
  %v824 = vunpack.c.l.b16 %v161
  %v825 = vunpack.c.h.b16 %v161
  %v826 = vunpack.c.l.b16 %v162
  %v827 = vunpack.c.h.b16 %v162
  %v828 = vunpack.c.l.b16 %v163
  %v829 = vunpack.c.h.b16 %v163
  %v830 = vunpack.c.l.b16 %v164
  %v831 = vunpack.c.l.b16 %v165
  %v832 = vunpack.c.h.b16 %v165
  %v833 = vunpack.c.l.b16 %v166
  %v834 = vunpack.c.h.b16 %v166
  %v835 = vunpack.c.l.b16 %v167
  %v836 = vunpack.c.h.b16 %v167
  %v837 = vunpack.c.l.b16 %v168
  %v838 = vunpack.c.h.b16 %v168
  %v839 = vunpack.c.l.b16 %v169
  %v840 = vunpack.c.h.b16 %v169
  %v841 = vunpack.c.l.b16 %v170
  %v842 = vunpack.c.h.b16 %v170
  %v843 = vunpack.c.l.b16 %v171
  %v844 = vunpack.c.l.b16 %v172
  %v845 = vunpack.c.h.b16 %v172
  %v846 = vunpack.c.l.b16 %v173
  %v847 = vunpack.c.h.b16 %v173
  %v848 = vunpack.c.l.b16 %v174
  %v849 = vunpack.c.h.b16 %v174
  %v850 = vunpack.c.l.b16 %v175
  %v851 = vunpack.c.h.b16 %v175
  %v852 = vunpack.c.l.b16 %v176
  %v853 = vunpack.c.h.b16 %v176
  %v854 = vunpack.c.l.b16 %v177
  %v855 = vunpack.c.h.b16 %v177
  %v856 = vunpack.c.l.b16 %v178
  %v857 = vunpack.c.l.b16 %v179
  %v858 = vunpack.c.h.b16 %v179
  %v859 = vunpack.c.l.b16 %v180
  %v860 = vunpack.c.h.b16 %v180
  %v861 = vunpack.c.l.b16 %v181
  %v862 = vunpack.c.h.b16 %v181
  %v863 = vunpack.c.l.b16 %v182
  %v864 = vunpack.c.h.b16 %v182
  %v865 = vunpack.c.l.b16 %v183
  %v866 = vunpack.c.h.b16 %v183
  %v867 = vunpack.c.l.b16 %v184
  %v868 = vunpack.c.h.b16 %v184
  %v869 = vunpack.c.l.b16 %v185
  %v870 = vunpack.c.l.b16 %v186
  %v871 = vunpack.c.h.b16 %v186
  %v872 = vunpack.c.l.b16 %v187
  %v873 = vunpack.c.h.b16 %v187
  %v874 = vunpack.c.l.b16 %v188
  %v875 = vunpack.c.h.b16 %v188
  %v876 = vunpack.c.l.b16 %v189
  %v877 = vunpack.c.h.b16 %v189
  %v878 = vunpack.c.l.b16 %v190
  %v879 = vunpack.c.h.b16 %v190
  %v880 = vunpack.c.l.b16 %v191
  %v881 = vunpack.c.h.b16 %v191
  %v882 = vunpack.c.l.b16 %v192
  %v883 = vunpack.c.l.b16 %v193
  %v884 = vunpack.c.h.b16 %v193
  %v885 = vunpack.c.l.b16 %v194
  %v886 = vunpack.c.h.b16 %v194
  %v887 = vunpack.c.l.b16 %v195
  %v888 = vunpack.c.h.b16 %v195
  %v889 = vunpack.c.l.b16 %v196
  %v890 = vunpack.c.h.b16 %v196
  %v891 = vunpack.c.l.b16 %v197
  %v892 = vunpack.c.h.b16 %v197
  %v893 = vunpack.c.l.b16 %v198
  %v894 = vunpack.c.h.b16 %v198
  %v895 = vunpack.c.l.b16 %v199
  %v896 = vunpack.c.l.b16 %v200
  %v897 = vunpack.c.h.b16 %v200
  %v898 = vunpack.c.l.b16 %v201
  %v899 = vunpack.c.h.b16 %v201
  %v900 = vunpack.c.l.b16 %v202
  %v901 = vunpack.c.h.b16 %v202
  %v902 = vunpack.c.l.b16 %v203
  %v903 = vunpack.c.h.b16 %v203
  %v904 = vunpack.c.l.b16 %v204
  %v905 = vunpack.c.h.b16 %v204
  %v906 = vunpack.c.l.b16 %v205
  %v907 = vunpack.c.h.b16 %v205
  %v908 = vunpack.c.l.b16 %v206
  %v909 = vunpack.c.l.b16 %v207
  %v910 = vunpack.c.h.b16 %v207
  %v911 = vunpack.c.l.b16 %v208
  %v912 = vunpack.c.h.b16 %v208
  %v913 = vunpack.c.l.b16 %v209
  %v914 = vunpack.c.h.b16 %v209
  %v915 = vunpack.c.l.b16 %v210
  %v916 = vunpack.c.h.b16 %v210
  %v917 = vunpack.c.l.b16 %v211
  %v918 = vunpack.c.h.b16 %v211
  %v919 = vunpack.c.l.b16 %v212
  %v920 = vunpack.c.h.b16 %v212
  %v921 = vunpack.c.l.b16 %v213
  %v922 = vunpack.c.l.b16 %v214
  %v923 = vunpack.c.h.b16 %v214
  %v924 = vunpack.c.l.b16 %v215
  %v925 = vunpack.c.h.b16 %v215
  %v926 = vunpack.c.l.b16 %v216
  %v927 = vunpack.c.h.b16 %v216
  %v928 = vunpack.c.l.b16 %v217
  %v929 = vunpack.c.h.b16 %v217
  %v930 = vunpack.c.l.b16 %v218
  %v931 = vunpack.c.h.b16 %v218
  %v932 = vunpack.c.l.b16 %v219
  %v933 = vunpack.c.h.b16 %v219
  %v934 = vunpack.c.l.b16 %v220
  %v935 = vunpack.c.l.b16 %v221
  %v936 = vunpack.c.h.b16 %v221
  %v937 = vunpack.c.l.b16 %v222
  %v938 = vunpack.c.h.b16 %v222
  %v939 = vunpack.c.l.b16 %v223
  %v940 = vunpack.c.h.b16 %v223
  %v941 = vunpack.c.l.b16 %v224
  %v942 = vunpack.c.h.b16 %v224
  %v943 = vunpack.c.l.b16 %v225
  %v944 = vunpack.c.h.b16 %v225
  %v945 = vunpack.c.l.b16 %v226
  %v946 = vunpack.c.h.b16 %v226
  %v947 = vunpack.c.l.b16 %v227
  %v948 = vunpack.c.l.b16 %v228
  %v949 = vunpack.c.h.b16 %v228
  %v950 = vunpack.c.l.b16 %v229
  %v951 = vunpack.c.h.b16 %v229
  %v952 = vunpack.c.l.b16 %v230
  %v953 = vunpack.c.h.b16 %v230
  %v954 = vunpack.c.l.b16 %v231
  %v955 = vunpack.c.h.b16 %v231
  %v956 = vunpack.c.l.b16 %v232
  %v957 = vunpack.c.h.b16 %v232
  %v958 = vunpack.c.l.b16 %v233
  %v959 = vunpack.c.h.b16 %v233
  %v960 = vunpack.c.l.b16 %v234
  %v961 = vunpack.c.l.b16 %v235
  %v962 = vunpack.c.h.b16 %v235
  %v963 = vunpack.c.l.b16 %v236
  %v964 = vunpack.c.h.b16 %v236
  %v965 = vunpack.c.l.b16 %v237
  %v966 = vunpack.c.h.b16 %v237
  %v967 = vunpack.c.l.b16 %v238
  %v968 = vunpack.c.h.b16 %v238
  %v969 = vunpack.c.l.b16 %v239
  %v970 = vunpack.c.h.b16 %v239
  %v971 = vunpack.c.l.b16 %v240
  %v972 = vunpack.c.h.b16 %v240
  %v973 = vunpack.c.l.b16 %v241
  %v974 = vunpack.c.l.b16 %v242
  %v975 = vunpack.c.h.b16 %v242
  %v976 = vunpack.c.l.b16 %v243
  %v977 = vunpack.c.h.b16 %v243
  %v978 = vunpack.c.l.b16 %v244
  %v979 = vunpack.c.h.b16 %v244
  %v980 = vunpack.c.l.b16 %v245
  %v981 = vunpack.c.h.b16 %v245
  %v982 = vunpack.c.l.b16 %v246
  %v983 = vunpack.c.h.b16 %v246
  %v984 = vunpack.c.l.b16 %v247
  %v985 = vunpack.c.h.b16 %v247
  %v986 = vunpack.c.l.b16 %v248
  %v987 = vunpack.c.l.b16 %v249
  %v988 = vunpack.c.h.b16 %v249
  %v989 = vunpack.c.l.b16 %v250
  %v990 = vunpack.c.h.b16 %v250
  %v991 = vunpack.c.l.b16 %v251
  %v992 = vunpack.c.h.b16 %v251
  %v993 = vunpack.c.l.b16 %v252
  %v994 = vunpack.c.h.b16 %v252
  %v995 = vunpack.c.l.b16 %v253
  %v996 = vunpack.c.h.b16 %v253
  %v997 = vunpack.c.l.b16 %v254
  %v998 = vunpack.c.h.b16 %v254
  %v999 = vunpack.c.l.b16 %v255
  %v1000 = vunpack.c.l.b16 %v256
  %v1001 = vunpack.c.h.b16 %v256
  %v1002 = vunpack.c.l.b16 %v257
  %v1003 = vunpack.c.h.b16 %v257
  %v1004 = vunpack.c.l.b16 %v258
  %v1005 = vunpack.c.h.b16 %v258
  %v1006 = vunpack.c.l.b16 %v259
  %v1007 = vunpack.c.h.b16 %v259
  %v1008 = vunpack.c.l.b16 %v260
  %v1009 = vunpack.c.h.b16 %v260
  %v1010 = vunpack.c.l.b16 %v261
  %v1011 = vunpack.c.h.b16 %v261
  %v1012 = vunpack.c.l.b16 %v262
  %v1013 = vunpack.c.l.b16 %v263
  %v1014 = vunpack.c.h.b16 %v263
  %v1015 = vunpack.c.l.b16 %v264
  %v1016 = vunpack.c.h.b16 %v264
  %v1017 = vunpack.c.l.b16 %v265
  %v1018 = vunpack.c.h.b16 %v265
  %v1019 = vunpack.c.l.b16 %v266
  %v1020 = vunpack.c.h.b16 %v266
  %v1021 = vunpack.c.l.b16 %v267
  %v1022 = vunpack.c.h.b16 %v267
  %v1023 = vunpack.c.l.b16 %v268
  %v1024 = vunpack.c.h.b16 %v268
  %v1025 = vunpack.c.l.b16 %v269
  %v1026 = vpack.c.b16 %v571, %v558
  %v1027 = vpack.c.b16 %v572, %v559
  %v1028 = vpack.c.b16 %v573, %v560
  %v1029 = vpack.c.b16 %v574, %v561
  %v1030 = vpack.c.b16 %v575, %v562
  %v1031 = vpack.c.b16 %v576, %v563
  %v1032 = vpack.c.b16 %v577, %v564
  %v1033 = vpack.c.b16 %v578, %v565
  %v1034 = vpack.c.b16 %v579, %v566
  %v1035 = vpack.c.b16 %v580, %v567
  %v1036 = vpack.c.b16 %v581, %v568
  %v1037 = vpack.c.b16 %v582, %v569
  %v1038 = vpack.c.b16 %v583, %v570
  %v1039 = vpack.c.b16 %v597, %v584
  %v1040 = vpack.c.b16 %v598, %v585
  %v1041 = vpack.c.b16 %v599, %v586
  %v1042 = vpack.c.b16 %v600, %v587
  %v1043 = vpack.c.b16 %v601, %v588
  %v1044 = vpack.c.b16 %v602, %v589
  %v1045 = vpack.c.b16 %v603, %v590
  %v1046 = vpack.c.b16 %v604, %v591
  %v1047 = vpack.c.b16 %v605, %v592
  %v1048 = vpack.c.b16 %v606, %v593
  %v1049 = vpack.c.b16 %v607, %v594
  %v1050 = vpack.c.b16 %v608, %v595
  %v1051 = vpack.c.b16 %v609, %v596
  %v1052 = vpack.c.b16 %v623, %v610
  %v1053 = vpack.c.b16 %v624, %v611
  %v1054 = vpack.c.b16 %v625, %v612
  %v1055 = vpack.c.b16 %v626, %v613
  %v1056 = vpack.c.b16 %v627, %v614
  %v1057 = vpack.c.b16 %v628, %v615
  %v1058 = vpack.c.b16 %v629, %v616
  %v1059 = vpack.c.b16 %v630, %v617
  %v1060 = vpack.c.b16 %v631, %v618
  %v1061 = vpack.c.b16 %v632, %v619
  %v1062 = vpack.c.b16 %v633, %v620
  %v1063 = vpack.c.b16 %v634, %v621
  %v1064 = vpack.c.b16 %v635, %v622
  %v1065 = vpack.c.b16 %v649, %v636
  %v1066 = vpack.c.b16 %v650, %v637
  %v1067 = vpack.c.b16 %v651, %v638
  %v1068 = vpack.c.b16 %v652, %v639
  %v1069 = vpack.c.b16 %v653, %v640
  %v1070 = vpack.c.b16 %v654, %v641
  %v1071 = vpack.c.b16 %v655, %v642
  %v1072 = vpack.c.b16 %v656, %v643
  %v1073 = vpack.c.b16 %v657, %v644
  %v1074 = vpack.c.b16 %v658, %v645
  %v1075 = vpack.c.b16 %v659, %v646
  %v1076 = vpack.c.b16 %v660, %v647
  %v1077 = vpack.c.b16 %v661, %v648
  %v1078 = vpack.c.b16 %v675, %v662
  %v1079 = vpack.c.b16 %v676, %v663
  %v1080 = vpack.c.b16 %v677, %v664
  %v1081 = vpack.c.b16 %v678, %v665
  %v1082 = vpack.c.b16 %v679, %v666
  %v1083 = vpack.c.b16 %v680, %v667
  %v1084 = vpack.c.b16 %v681, %v668
  %v1085 = vpack.c.b16 %v682, %v669
  %v1086 = vpack.c.b16 %v683, %v670
  %v1087 = vpack.c.b16 %v684, %v671
  %v1088 = vpack.c.b16 %v685, %v672
  %v1089 = vpack.c.b16 %v686, %v673
  %v1090 = vpack.c.b16 %v687, %v674
  %v1091 = vpack.c.b16 %v701, %v688
  %v1092 = vpack.c.b16 %v702, %v689
  %v1093 = vpack.c.b16 %v703, %v690
  %v1094 = vpack.c.b16 %v704, %v691
  %v1095 = vpack.c.b16 %v705, %v692
  %v1096 = vpack.c.b16 %v706, %v693
  %v1097 = vpack.c.b16 %v707, %v694
  %v1098 = vpack.c.b16 %v708, %v695
  %v1099 = vpack.c.b16 %v709, %v696
  %v1100 = vpack.c.b16 %v710, %v697
  %v1101 = vpack.c.b16 %v711, %v698
  %v1102 = vpack.c.b16 %v712, %v699
  %v1103 = vpack.c.b16 %v713, %v700
  %v1104 = vpack.c.b16 %v727, %v714
  %v1105 = vpack.c.b16 %v728, %v715
  %v1106 = vpack.c.b16 %v729, %v716
  %v1107 = vpack.c.b16 %v730, %v717
  %v1108 = vpack.c.b16 %v731, %v718
  %v1109 = vpack.c.b16 %v732, %v719
  %v1110 = vpack.c.b16 %v733, %v720
  %v1111 = vpack.c.b16 %v734, %v721
  %v1112 = vpack.c.b16 %v735, %v722
  %v1113 = vpack.c.b16 %v736, %v723
  %v1114 = vpack.c.b16 %v737, %v724
  %v1115 = vpack.c.b16 %v738, %v725
  %v1116 = vpack.c.b16 %v739, %v726
  %v1117 = vpack.c.b16 %v753, %v740
  %v1118 = vpack.c.b16 %v754, %v741
  %v1119 = vpack.c.b16 %v755, %v742
  %v1120 = vpack.c.b16 %v756, %v743
  %v1121 = vpack.c.b16 %v757, %v744
  %v1122 = vpack.c.b16 %v758, %v745
  %v1123 = vpack.c.b16 %v759, %v746
  %v1124 = vpack.c.b16 %v760, %v747
  %v1125 = vpack.c.b16 %v761, %v748
  %v1126 = vpack.c.b16 %v762, %v749
  %v1127 = vpack.c.b16 %v763, %v750
  %v1128 = vpack.c.b16 %v764, %v751
  %v1129 = vpack.c.b16 %v765, %v752
  %v1130 = vpack.c.b16 %v779, %v766
  %v1131 = vpack.c.b16 %v780, %v767
  %v1132 = vpack.c.b16 %v781, %v768
  %v1133 = vpack.c.b16 %v782, %v769
  %v1134 = vpack.c.b16 %v783, %v770
  %v1135 = vpack.c.b16 %v784, %v771
  %v1136 = vpack.c.b16 %v785, %v772
  %v1137 = vpack.c.b16 %v786, %v773
  %v1138 = vpack.c.b16 %v787, %v774
  %v1139 = vpack.c.b16 %v788, %v775
  %v1140 = vpack.c.b16 %v789, %v776
  %v1141 = vpack.c.b16 %v790, %v777
  %v1142 = vpack.c.b16 %v791, %v778
  %v1143 = vpack.c.b16 %v805, %v792
  %v1144 = vpack.c.b16 %v806, %v793
  %v1145 = vpack.c.b16 %v807, %v794
  %v1146 = vpack.c.b16 %v808, %v795
  %v1147 = vpack.c.b16 %v809, %v796
  %v1148 = vpack.c.b16 %v810, %v797
  %v1149 = vpack.c.b16 %v811, %v798
  %v1150 = vpack.c.b16 %v812, %v799
  %v1151 = vpack.c.b16 %v813, %v800
  %v1152 = vpack.c.b16 %v814, %v801
  %v1153 = vpack.c.b16 %v815, %v802
  %v1154 = vpack.c.b16 %v816, %v803
  %v1155 = vpack.c.b16 %v817, %v804
  %v1156 = vpack.c.b16 %v831, %v818
  %v1157 = vpack.c.b16 %v832, %v819
  %v1158 = vpack.c.b16 %v833, %v820
  %v1159 = vpack.c.b16 %v834, %v821
  %v1160 = vpack.c.b16 %v835, %v822
  %v1161 = vpack.c.b16 %v836, %v823
  %v1162 = vpack.c.b16 %v837, %v824
  %v1163 = vpack.c.b16 %v838, %v825
  %v1164 = vpack.c.b16 %v839, %v826
  %v1165 = vpack.c.b16 %v840, %v827
  %v1166 = vpack.c.b16 %v841, %v828
  %v1167 = vpack.c.b16 %v842, %v829
  %v1168 = vpack.c.b16 %v843, %v830
  %v1169 = vpack.c.b16 %v857, %v844
  %v1170 = vpack.c.b16 %v858, %v845
  %v1171 = vpack.c.b16 %v859, %v846
  %v1172 = vpack.c.b16 %v860, %v847
  %v1173 = vpack.c.b16 %v861, %v848
  %v1174 = vpack.c.b16 %v862, %v849
  %v1175 = vpack.c.b16 %v863, %v850
  %v1176 = vpack.c.b16 %v864, %v851
  %v1177 = vpack.c.b16 %v865, %v852
  %v1178 = vpack.c.b16 %v866, %v853
  %v1179 = vpack.c.b16 %v867, %v854
  %v1180 = vpack.c.b16 %v868, %v855
  %v1181 = vpack.c.b16 %v869, %v856
  %v1182 = vpack.c.b16 %v883, %v870
  %v1183 = vpack.c.b16 %v884, %v871
  %v1184 = vpack.c.b16 %v885, %v872
  %v1185 = vpack.c.b16 %v886, %v873
  %v1186 = vpack.c.b16 %v887, %v874
  %v1187 = vpack.c.b16 %v888, %v875
  %v1188 = vpack.c.b16 %v889, %v876
  %v1189 = vpack.c.b16 %v890, %v877
  %v1190 = vpack.c.b16 %v891, %v878
  %v1191 = vpack.c.b16 %v892, %v879
  %v1192 = vpack.c.b16 %v893, %v880
  %v1193 = vpack.c.b16 %v894, %v881
  %v1194 = vpack.c.b16 %v895, %v882
  %v1195 = vpack.c.b16 %v909, %v896
  %v1196 = vpack.c.b16 %v910, %v897
  %v1197 = vpack.c.b16 %v911, %v898
  %v1198 = vpack.c.b16 %v912, %v899
  %v1199 = vpack.c.b16 %v913, %v900
  %v1200 = vpack.c.b16 %v914, %v901
  %v1201 = vpack.c.b16 %v915, %v902
  %v1202 = vpack.c.b16 %v916, %v903
  %v1203 = vpack.c.b16 %v917, %v904
  %v1204 = vpack.c.b16 %v918, %v905
  %v1205 = vpack.c.b16 %v919, %v906
  %v1206 = vpack.c.b16 %v920, %v907
  %v1207 = vpack.c.b16 %v921, %v908
  %v1208 = vpack.c.b16 %v935, %v922
  %v1209 = vpack.c.b16 %v936, %v923
  %v1210 = vpack.c.b16 %v937, %v924
  %v1211 = vpack.c.b16 %v938, %v925
  %v1212 = vpack.c.b16 %v939, %v926
  %v1213 = vpack.c.b16 %v940, %v927
  %v1214 = vpack.c.b16 %v941, %v928
  %v1215 = vpack.c.b16 %v942, %v929
  %v1216 = vpack.c.b16 %v943, %v930
  %v1217 = vpack.c.b16 %v944, %v931
  %v1218 = vpack.c.b16 %v945, %v932
  %v1219 = vpack.c.b16 %v946, %v933
  %v1220 = vpack.c.b16 %v947, %v934
  %v1221 = vpack.c.b16 %v961, %v948
  %v1222 = vpack.c.b16 %v962, %v949
  %v1223 = vpack.c.b16 %v963, %v950
  %v1224 = vpack.c.b16 %v964, %v951
  %v1225 = vpack.c.b16 %v965, %v952
  %v1226 = vpack.c.b16 %v966, %v953
  %v1227 = vpack.c.b16 %v967, %v954
  %v1228 = vpack.c.b16 %v968, %v955
  %v1229 = vpack.c.b16 %v969, %v956
  %v1230 = vpack.c.b16 %v970, %v957
  %v1231 = vpack.c.b16 %v971, %v958
  %v1232 = vpack.c.b16 %v972, %v959
  %v1233 = vpack.c.b16 %v973, %v960
  %v1234 = vpack.c.b16 %v987, %v974
  %v1235 = vpack.c.b16 %v988, %v975
  %v1236 = vpack.c.b16 %v989, %v976
  %v1237 = vpack.c.b16 %v990, %v977
  %v1238 = vpack.c.b16 %v991, %v978
  %v1239 = vpack.c.b16 %v992, %v979
  %v1240 = vpack.c.b16 %v993, %v980
  %v1241 = vpack.c.b16 %v994, %v981
  %v1242 = vpack.c.b16 %v995, %v982
  %v1243 = vpack.c.b16 %v996, %v983
  %v1244 = vpack.c.b16 %v997, %v984
  %v1245 = vpack.c.b16 %v998, %v985
  %v1246 = vpack.c.b16 %v999, %v986
  %v1247 = vpack.c.b16 %v1013, %v1000
  %v1248 = vpack.c.b16 %v1014, %v1001
  %v1249 = vpack.c.b16 %v1015, %v1002
  %v1250 = vpack.c.b16 %v1016, %v1003
  %v1251 = vpack.c.b16 %v1017, %v1004
  %v1252 = vpack.c.b16 %v1018, %v1005
  %v1253 = vpack.c.b16 %v1019, %v1006
  %v1254 = vpack.c.b16 %v1020, %v1007
  %v1255 = vpack.c.b16 %v1021, %v1008
  %v1256 = vpack.c.b16 %v1022, %v1009
  %v1257 = vpack.c.b16 %v1023, %v1010
  %v1258 = vpack.c.b16 %v1024, %v1011
  %v1259 = vpack.c.b16 %v1025, %v1012
  %vm1494 = vcmask 261120
  %v1496 = vsel %vm1494, %v303, 0
  %1498 = vmatprep.subr.bf16.mxu0 %v1027
  %1499 = vmatpush1.bf16.msra.mxu0 %v1026
  %1500 = vmatprep.subr.bf16.mxu0 %v1040
  %1501 = vmatpush1.bf16.msra.mxu0 %v1039
  %1502 = vmatprep.subr.bf16.mxu0 %v1053
  %1503 = vmatpush1.bf16.msra.mxu0 %v1052
  %1504 = vmatprep.subr.bf16.mxu0 %v1066
  %1505 = vmatpush1.bf16.msra.mxu0 %v1065
  %1506 = vmatprep.subr.bf16.mxu0 %v1079
  %1507 = vmatpush1.bf16.msra.mxu0 %v1078
  %1508 = vmatprep.subr.bf16.mxu0 %v1092
  %1509 = vmatpush1.bf16.msra.mxu0 %v1091
  %1510 = vmatprep.subr.bf16.mxu0 %v1105
  %1511 = vmatpush1.bf16.msra.mxu0 %v1104
  %1512 = vmatprep.subr.bf16.mxu0 %v1118
  %1513 = vmatpush1.bf16.msra.mxu0 %v1117
  %1514 = vmatprep.subr.bf16.mxu0 %v1131
  %1515 = vmatpush1.bf16.msra.mxu0 %v1130
  %1516 = vmatprep.subr.bf16.mxu0 %v1144
  %1517 = vmatpush1.bf16.msra.mxu0 %v1143
  %1518 = vmatprep.subr.bf16.mxu0 %v1157
  %1519 = vmatpush1.bf16.msra.mxu0 %v1156
  %1520 = vmatprep.subr.bf16.mxu0 %v1170
  %1521 = vmatpush1.bf16.msra.mxu0 %v1169
  %1522 = vmatprep.subr.bf16.mxu0 %v1183
  %1523 = vmatpush1.bf16.msra.mxu0 %v1182
  %1524 = vmatprep.subr.bf16.mxu0 %v1196
  %1525 = vmatpush1.bf16.msra.mxu0 %v1195
  %1526 = vmatprep.subr.bf16.mxu0 %v1209
  %1527 = vmatpush1.bf16.msra.mxu0 %v1208
  %1528 = vmatprep.subr.bf16.mxu0 %v1222
  %1529 = vmatpush1.bf16.msra.mxu0 %v1221
  %1530 = vmatprep.mubr.bf16.mxu0 %v302
  %1531 = vmatmul.mubr.bf16.gmra.mrb[0].mxu0 %v295
  %v1532 = vpop.f32.mrb[0].mxu0
  %v1533 = vadd.f32 %v279, %v1532
  %v1534 = vpop.f32.mrb[0].mxu0
  %v1535 = vadd.f32 %v279, %v1534
  %v1536 = vpop.f32.mrb[0].mxu0
  %v1537 = vpop.f32.mrb[0].mxu0
  %1538 = vdwg.mxu0
  %1539 = vmatprep.subr.bf16.mxu0 %v1235
  %1540 = vmatpush1.bf16.msra.mxu0 %v1234
  %1541 = vmatprep.subr.bf16.mxu0 %v1248
  %1542 = vmatpush1.bf16.msra.mxu0 %v1247
  %1543 = vmatprep.subr.bf16.mxu0 0
  %1544 = vmatpush1.bf16.msra.mxu0 0
  %1545 = vmatprep.subr.bf16.mxu0 0
  %1546 = vmatpush1.bf16.msra.mxu0 0
  %1547 = vmatprep.subr.bf16.mxu0 0
  %1548 = vmatpush1.bf16.msra.mxu0 0
  %1549 = vmatprep.subr.bf16.mxu0 0
  %1550 = vmatpush1.bf16.msra.mxu0 0
  %1551 = vmatprep.subr.bf16.mxu0 0
  %1552 = vmatpush1.bf16.msra.mxu0 0
  %1553 = vmatprep.subr.bf16.mxu0 0
  %1554 = vmatpush1.bf16.msra.mxu0 0
  %1555 = vmatprep.subr.bf16.mxu0 0
  %1556 = vmatpush1.bf16.msra.mxu0 0
  %1557 = vmatprep.subr.bf16.mxu0 0
  %1558 = vmatpush1.bf16.msra.mxu0 0
  %1559 = vmatprep.subr.bf16.mxu0 0
  %1560 = vmatpush1.bf16.msra.mxu0 0
  %1561 = vmatprep.subr.bf16.mxu0 0
  %1562 = vmatpush1.bf16.msra.mxu0 0
  %1563 = vmatprep.subr.bf16.mxu0 0
  %1564 = vmatpush1.bf16.msra.mxu0 0
  %1565 = vmatprep.subr.bf16.mxu0 0
  %1566 = vmatpush1.bf16.msra.mxu0 0
  %1567 = vmatprep.subr.bf16.mxu0 0
  %1568 = vmatpush1.bf16.msra.mxu0 0
  %1569 = vmatprep.subr.bf16.mxu0 0
  %1570 = vmatpush1.bf16.msra.mxu0 0
  %1571 = vmatprep.mubr.bf16.mxu0 0
  %1572 = vmatmul.mubr.bf16.gmra.mrb[0].mxu0 %v1496
  %v1573 = vpop.f32.mrb[0].mxu0
  %v1574 = vadd.f32 %v1533, %v1573
  %v1575 = vpop.f32.mrb[0].mxu0
  %v1576 = vadd.f32 %v1535, %v1575
  %v1577 = vpop.f32.mrb[0].mxu0
  %v1578 = vpop.f32.mrb[0].mxu0
  %1579 = vdwg.mxu0
  %1580 = vmatprep.subr.bf16.mxu0 %v1029
  %1581 = vmatpush1.bf16.msra.mxu0 %v1028
  %1582 = vmatprep.subr.bf16.mxu0 %v1042
  %1583 = vmatpush1.bf16.msra.mxu0 %v1041
  %1584 = vmatprep.subr.bf16.mxu0 %v1055
  %1585 = vmatpush1.bf16.msra.mxu0 %v1054
  %1586 = vmatprep.subr.bf16.mxu0 %v1068
  %1587 = vmatpush1.bf16.msra.mxu0 %v1067
  %1588 = vmatprep.subr.bf16.mxu0 %v1081
  %1589 = vmatpush1.bf16.msra.mxu0 %v1080
  %1590 = vmatprep.subr.bf16.mxu0 %v1094
  %1591 = vmatpush1.bf16.msra.mxu0 %v1093
  %1592 = vmatprep.subr.bf16.mxu0 %v1107
  %1593 = vmatpush1.bf16.msra.mxu0 %v1106
  %1594 = vmatprep.subr.bf16.mxu0 %v1120
  %1595 = vmatpush1.bf16.msra.mxu0 %v1119
  %1596 = vmatprep.subr.bf16.mxu0 %v1133
  %1597 = vmatpush1.bf16.msra.mxu0 %v1132
  %1598 = vmatprep.subr.bf16.mxu0 %v1146
  %1599 = vmatpush1.bf16.msra.mxu0 %v1145
  %1600 = vmatprep.subr.bf16.mxu0 %v1159
  %1601 = vmatpush1.bf16.msra.mxu0 %v1158
  %1602 = vmatprep.subr.bf16.mxu0 %v1172
  %1603 = vmatpush1.bf16.msra.mxu0 %v1171
  %1604 = vmatprep.subr.bf16.mxu0 %v1185
  %1605 = vmatpush1.bf16.msra.mxu0 %v1184
  %1606 = vmatprep.subr.bf16.mxu0 %v1198
  %1607 = vmatpush1.bf16.msra.mxu0 %v1197
  %1608 = vmatprep.subr.bf16.mxu0 %v1211
  %1609 = vmatpush1.bf16.msra.mxu0 %v1210
  %1610 = vmatprep.subr.bf16.mxu0 %v1224
  %1611 = vmatpush1.bf16.msra.mxu0 %v1223
  %1612 = vmatprep.mubr.bf16.mxu0 %v302
  %1613 = vmatmul.mubr.bf16.gmra.mrb[0].mxu0 %v295
  %v1614 = vpop.f32.mrb[0].mxu0
  %v1615 = vadd.f32 %v279, %v1614
  %v1616 = vpop.f32.mrb[0].mxu0
  %v1617 = vadd.f32 %v279, %v1616
  %v1618 = vpop.f32.mrb[0].mxu0
  %v1619 = vpop.f32.mrb[0].mxu0
  %1620 = vdwg.mxu0
  %1621 = vmatprep.subr.bf16.mxu0 %v1237
  %1622 = vmatpush1.bf16.msra.mxu0 %v1236
  %1623 = vmatprep.subr.bf16.mxu0 %v1250
  %1624 = vmatpush1.bf16.msra.mxu0 %v1249
  %1625 = vmatprep.subr.bf16.mxu0 0
  %1626 = vmatpush1.bf16.msra.mxu0 0
  %1627 = vmatprep.subr.bf16.mxu0 0
  %1628 = vmatpush1.bf16.msra.mxu0 0
  %1629 = vmatprep.subr.bf16.mxu0 0
  %1630 = vmatpush1.bf16.msra.mxu0 0
  %1631 = vmatprep.subr.bf16.mxu0 0
  %1632 = vmatpush1.bf16.msra.mxu0 0
  %1633 = vmatprep.subr.bf16.mxu0 0
  %1634 = vmatpush1.bf16.msra.mxu0 0
  %1635 = vmatprep.subr.bf16.mxu0 0
  %1636 = vmatpush1.bf16.msra.mxu0 0
  %1637 = vmatprep.subr.bf16.mxu0 0
  %1638 = vmatpush1.bf16.msra.mxu0 0
  %1639 = vmatprep.subr.bf16.mxu0 0
  %1640 = vmatpush1.bf16.msra.mxu0 0
  %1641 = vmatprep.subr.bf16.mxu0 0
  %1642 = vmatpush1.bf16.msra.mxu0 0
  %1643 = vmatprep.subr.bf16.mxu0 0
  %1644 = vmatpush1.bf16.msra.mxu0 0
  %1645 = vmatprep.subr.bf16.mxu0 0
  %1646 = vmatpush1.bf16.msra.mxu0 0
  %1647 = vmatprep.subr.bf16.mxu0 0
  %1648 = vmatpush1.bf16.msra.mxu0 0
  %1649 = vmatprep.subr.bf16.mxu0 0
  %1650 = vmatpush1.bf16.msra.mxu0 0
  %1651 = vmatprep.subr.bf16.mxu0 0
  %1652 = vmatpush1.bf16.msra.mxu0 0
  %1653 = vmatprep.mubr.bf16.mxu0 0
  %1654 = vmatmul.mubr.bf16.gmra.mrb[0].mxu0 %v1496
  %v1655 = vpop.f32.mrb[0].mxu0
  %v1656 = vadd.f32 %v1615, %v1655
  %v1657 = vpop.f32.mrb[0].mxu0
  %v1658 = vadd.f32 %v1617, %v1657
  %v1659 = vpop.f32.mrb[0].mxu0
  %v1660 = vpop.f32.mrb[0].mxu0
  %1661 = vdwg.mxu0
  %1662 = vmatprep.subr.bf16.mxu0 %v1031
  %1663 = vmatpush1.bf16.msra.mxu0 %v1030
  %1664 = vmatprep.subr.bf16.mxu0 %v1044
  %1665 = vmatpush1.bf16.msra.mxu0 %v1043
  %1666 = vmatprep.subr.bf16.mxu0 %v1057
  %1667 = vmatpush1.bf16.msra.mxu0 %v1056
  %1668 = vmatprep.subr.bf16.mxu0 %v1070
  %1669 = vmatpush1.bf16.msra.mxu0 %v1069
  %1670 = vmatprep.subr.bf16.mxu0 %v1083
  %1671 = vmatpush1.bf16.msra.mxu0 %v1082
  %1672 = vmatprep.subr.bf16.mxu0 %v1096
  %1673 = vmatpush1.bf16.msra.mxu0 %v1095
  %1674 = vmatprep.subr.bf16.mxu0 %v1109
  %1675 = vmatpush1.bf16.msra.mxu0 %v1108
  %1676 = vmatprep.subr.bf16.mxu0 %v1122
  %1677 = vmatpush1.bf16.msra.mxu0 %v1121
  %1678 = vmatprep.subr.bf16.mxu0 %v1135
  %1679 = vmatpush1.bf16.msra.mxu0 %v1134
  %1680 = vmatprep.subr.bf16.mxu0 %v1148
  %1681 = vmatpush1.bf16.msra.mxu0 %v1147
  %1682 = vmatprep.subr.bf16.mxu0 %v1161
  %1683 = vmatpush1.bf16.msra.mxu0 %v1160
  %1684 = vmatprep.subr.bf16.mxu0 %v1174
  %1685 = vmatpush1.bf16.msra.mxu0 %v1173
  %1686 = vmatprep.subr.bf16.mxu0 %v1187
  %1687 = vmatpush1.bf16.msra.mxu0 %v1186
  %1688 = vmatprep.subr.bf16.mxu0 %v1200
  %1689 = vmatpush1.bf16.msra.mxu0 %v1199
  %1690 = vmatprep.subr.bf16.mxu0 %v1213
  %1691 = vmatpush1.bf16.msra.mxu0 %v1212
  %1692 = vmatprep.subr.bf16.mxu0 %v1226
  %1693 = vmatpush1.bf16.msra.mxu0 %v1225
  %1694 = vmatprep.mubr.bf16.mxu0 %v302
  %1695 = vmatmul.mubr.bf16.gmra.mrb[0].mxu0 %v295
  %v1696 = vpop.f32.mrb[0].mxu0
  %v1697 = vadd.f32 %v279, %v1696
  %v1698 = vpop.f32.mrb[0].mxu0
  %v1699 = vadd.f32 %v279, %v1698
  %v1700 = vpop.f32.mrb[0].mxu0
  %v1701 = vpop.f32.mrb[0].mxu0
  %1702 = vdwg.mxu0
  %1703 = vmatprep.subr.bf16.mxu0 %v1239
  %1704 = vmatpush1.bf16.msra.mxu0 %v1238
  %1705 = vmatprep.subr.bf16.mxu0 %v1252
  %1706 = vmatpush1.bf16.msra.mxu0 %v1251
  %1707 = vmatprep.subr.bf16.mxu0 0
  %1708 = vmatpush1.bf16.msra.mxu0 0
  %1709 = vmatprep.subr.bf16.mxu0 0
  %1710 = vmatpush1.bf16.msra.mxu0 0
  %1711 = vmatprep.subr.bf16.mxu0 0
  %1712 = vmatpush1.bf16.msra.mxu0 0
  %1713 = vmatprep.subr.bf16.mxu0 0
  %1714 = vmatpush1.bf16.msra.mxu0 0
  %1715 = vmatprep.subr.bf16.mxu0 0
  %1716 = vmatpush1.bf16.msra.mxu0 0
  %1717 = vmatprep.subr.bf16.mxu0 0
  %1718 = vmatpush1.bf16.msra.mxu0 0
  %1719 = vmatprep.subr.bf16.mxu0 0
  %1720 = vmatpush1.bf16.msra.mxu0 0
  %1721 = vmatprep.subr.bf16.mxu0 0
  %1722 = vmatpush1.bf16.msra.mxu0 0
  %1723 = vmatprep.subr.bf16.mxu0 0
  %1724 = vmatpush1.bf16.msra.mxu0 0
  %1725 = vmatprep.subr.bf16.mxu0 0
  %1726 = vmatpush1.bf16.msra.mxu0 0
  %1727 = vmatprep.subr.bf16.mxu0 0
  %1728 = vmatpush1.bf16.msra.mxu0 0
  %1729 = vmatprep.subr.bf16.mxu0 0
  %1730 = vmatpush1.bf16.msra.mxu0 0
  %1731 = vmatprep.subr.bf16.mxu0 0
  %1732 = vmatpush1.bf16.msra.mxu0 0
  %1733 = vmatprep.subr.bf16.mxu0 0
  %1734 = vmatpush1.bf16.msra.mxu0 0
  %1735 = vmatprep.mubr.bf16.mxu0 0
  %1736 = vmatmul.mubr.bf16.gmra.mrb[0].mxu0 %v1496
  %v1737 = vpop.f32.mrb[0].mxu0
  %v1738 = vadd.f32 %v1697, %v1737
  %v1739 = vpop.f32.mrb[0].mxu0
  %v1740 = vadd.f32 %v1699, %v1739
  %v1741 = vpop.f32.mrb[0].mxu0
  %v1742 = vpop.f32.mrb[0].mxu0
  %1743 = vdwg.mxu0
  %1744 = vmatprep.subr.bf16.mxu0 %v1033
  %1745 = vmatpush1.bf16.msra.mxu0 %v1032
  %1746 = vmatprep.subr.bf16.mxu0 %v1046
  %1747 = vmatpush1.bf16.msra.mxu0 %v1045
  %1748 = vmatprep.subr.bf16.mxu0 %v1059
  %1749 = vmatpush1.bf16.msra.mxu0 %v1058
  %1750 = vmatprep.subr.bf16.mxu0 %v1072
  %1751 = vmatpush1.bf16.msra.mxu0 %v1071
  %1752 = vmatprep.subr.bf16.mxu0 %v1085
  %1753 = vmatpush1.bf16.msra.mxu0 %v1084
  %1754 = vmatprep.subr.bf16.mxu0 %v1098
  %1755 = vmatpush1.bf16.msra.mxu0 %v1097
  %1756 = vmatprep.subr.bf16.mxu0 %v1111
  %1757 = vmatpush1.bf16.msra.mxu0 %v1110
  %1758 = vmatprep.subr.bf16.mxu0 %v1124
  %1759 = vmatpush1.bf16.msra.mxu0 %v1123
  %1760 = vmatprep.subr.bf16.mxu0 %v1137
  %1761 = vmatpush1.bf16.msra.mxu0 %v1136
  %1762 = vmatprep.subr.bf16.mxu0 %v1150
  %1763 = vmatpush1.bf16.msra.mxu0 %v1149
  %1764 = vmatprep.subr.bf16.mxu0 %v1163
  %1765 = vmatpush1.bf16.msra.mxu0 %v1162
  %1766 = vmatprep.subr.bf16.mxu0 %v1176
  %1767 = vmatpush1.bf16.msra.mxu0 %v1175
  %1768 = vmatprep.subr.bf16.mxu0 %v1189
  %1769 = vmatpush1.bf16.msra.mxu0 %v1188
  %1770 = vmatprep.subr.bf16.mxu0 %v1202
  %1771 = vmatpush1.bf16.msra.mxu0 %v1201
  %1772 = vmatprep.subr.bf16.mxu0 %v1215
  %1773 = vmatpush1.bf16.msra.mxu0 %v1214
  %1774 = vmatprep.subr.bf16.mxu0 %v1228
  %1775 = vmatpush1.bf16.msra.mxu0 %v1227
  %1776 = vmatprep.mubr.bf16.mxu0 %v302
  %1777 = vmatmul.mubr.bf16.gmra.mrb[0].mxu0 %v295
  %v1778 = vpop.f32.mrb[0].mxu0
  %v1779 = vadd.f32 %v279, %v1778
  %v1780 = vpop.f32.mrb[0].mxu0
  %v1781 = vadd.f32 %v279, %v1780
  %v1782 = vpop.f32.mrb[0].mxu0
  %v1783 = vpop.f32.mrb[0].mxu0
  %1784 = vdwg.mxu0
  %1785 = vmatprep.subr.bf16.mxu0 %v1241
  %1786 = vmatpush1.bf16.msra.mxu0 %v1240
  %1787 = vmatprep.subr.bf16.mxu0 %v1254
  %1788 = vmatpush1.bf16.msra.mxu0 %v1253
  %1789 = vmatprep.subr.bf16.mxu0 0
  %1790 = vmatpush1.bf16.msra.mxu0 0
  %1791 = vmatprep.subr.bf16.mxu0 0
  %1792 = vmatpush1.bf16.msra.mxu0 0
  %1793 = vmatprep.subr.bf16.mxu0 0
  %1794 = vmatpush1.bf16.msra.mxu0 0
  %1795 = vmatprep.subr.bf16.mxu0 0
  %1796 = vmatpush1.bf16.msra.mxu0 0
  %1797 = vmatprep.subr.bf16.mxu0 0
  %1798 = vmatpush1.bf16.msra.mxu0 0
  %1799 = vmatprep.subr.bf16.mxu0 0
  %1800 = vmatpush1.bf16.msra.mxu0 0
  %1801 = vmatprep.subr.bf16.mxu0 0
  %1802 = vmatpush1.bf16.msra.mxu0 0
  %1803 = vmatprep.subr.bf16.mxu0 0
  %1804 = vmatpush1.bf16.msra.mxu0 0
  %1805 = vmatprep.subr.bf16.mxu0 0
  %1806 = vmatpush1.bf16.msra.mxu0 0
  %1807 = vmatprep.subr.bf16.mxu0 0
  %1808 = vmatpush1.bf16.msra.mxu0 0
  %1809 = vmatprep.subr.bf16.mxu0 0
  %1810 = vmatpush1.bf16.msra.mxu0 0
  %1811 = vmatprep.subr.bf16.mxu0 0
  %1812 = vmatpush1.bf16.msra.mxu0 0
  %1813 = vmatprep.subr.bf16.mxu0 0
  %1814 = vmatpush1.bf16.msra.mxu0 0
  %1815 = vmatprep.subr.bf16.mxu0 0
  %1816 = vmatpush1.bf16.msra.mxu0 0
  %1817 = vmatprep.mubr.bf16.mxu0 0
  %1818 = vmatmul.mubr.bf16.gmra.mrb[0].mxu0 %v1496
  %v1819 = vpop.f32.mrb[0].mxu0
  %v1820 = vadd.f32 %v1779, %v1819
  %v1821 = vpop.f32.mrb[0].mxu0
  %v1822 = vadd.f32 %v1781, %v1821
  %v1823 = vpop.f32.mrb[0].mxu0
  %v1824 = vpop.f32.mrb[0].mxu0
  %1825 = vdwg.mxu0
  %1826 = vmatprep.subr.bf16.mxu0 %v1035
  %1827 = vmatpush1.bf16.msra.mxu0 %v1034
  %1828 = vmatprep.subr.bf16.mxu0 %v1048
  %1829 = vmatpush1.bf16.msra.mxu0 %v1047
  %1830 = vmatprep.subr.bf16.mxu0 %v1061
  %1831 = vmatpush1.bf16.msra.mxu0 %v1060
  %1832 = vmatprep.subr.bf16.mxu0 %v1074
  %1833 = vmatpush1.bf16.msra.mxu0 %v1073
  %1834 = vmatprep.subr.bf16.mxu0 %v1087
  %1835 = vmatpush1.bf16.msra.mxu0 %v1086
  %1836 = vmatprep.subr.bf16.mxu0 %v1100
  %1837 = vmatpush1.bf16.msra.mxu0 %v1099
  %1838 = vmatprep.subr.bf16.mxu0 %v1113
  %1839 = vmatpush1.bf16.msra.mxu0 %v1112
  %1840 = vmatprep.subr.bf16.mxu0 %v1126
  %1841 = vmatpush1.bf16.msra.mxu0 %v1125
  %1842 = vmatprep.subr.bf16.mxu0 %v1139
  %1843 = vmatpush1.bf16.msra.mxu0 %v1138
  %1844 = vmatprep.subr.bf16.mxu0 %v1152
  %1845 = vmatpush1.bf16.msra.mxu0 %v1151
  %1846 = vmatprep.subr.bf16.mxu0 %v1165
  %1847 = vmatpush1.bf16.msra.mxu0 %v1164
  %1848 = vmatprep.subr.bf16.mxu0 %v1178
  %1849 = vmatpush1.bf16.msra.mxu0 %v1177
  %1850 = vmatprep.subr.bf16.mxu0 %v1191
  %1851 = vmatpush1.bf16.msra.mxu0 %v1190
  %1852 = vmatprep.subr.bf16.mxu0 %v1204
  %1853 = vmatpush1.bf16.msra.mxu0 %v1203
  %1854 = vmatprep.subr.bf16.mxu0 %v1217
  %1855 = vmatpush1.bf16.msra.mxu0 %v1216
  %1856 = vmatprep.subr.bf16.mxu0 %v1230
  %1857 = vmatpush1.bf16.msra.mxu0 %v1229
  %1858 = vmatprep.mubr.bf16.mxu0 %v302
  %1859 = vmatmul.mubr.bf16.gmra.mrb[0].mxu0 %v295
  %v1860 = vpop.f32.mrb[0].mxu0
  %v1861 = vadd.f32 %v279, %v1860
  %v1862 = vpop.f32.mrb[0].mxu0
  %v1863 = vadd.f32 %v279, %v1862
  %v1864 = vpop.f32.mrb[0].mxu0
  %v1865 = vpop.f32.mrb[0].mxu0
  %1866 = vdwg.mxu0
  %1867 = vmatprep.subr.bf16.mxu0 %v1243
  %1868 = vmatpush1.bf16.msra.mxu0 %v1242
  %1869 = vmatprep.subr.bf16.mxu0 %v1256
  %1870 = vmatpush1.bf16.msra.mxu0 %v1255
  %1871 = vmatprep.subr.bf16.mxu0 0
  %1872 = vmatpush1.bf16.msra.mxu0 0
  %1873 = vmatprep.subr.bf16.mxu0 0
  %1874 = vmatpush1.bf16.msra.mxu0 0
  %1875 = vmatprep.subr.bf16.mxu0 0
  %1876 = vmatpush1.bf16.msra.mxu0 0
  %1877 = vmatprep.subr.bf16.mxu0 0
  %1878 = vmatpush1.bf16.msra.mxu0 0
  %1879 = vmatprep.subr.bf16.mxu0 0
  %1880 = vmatpush1.bf16.msra.mxu0 0
  %1881 = vmatprep.subr.bf16.mxu0 0
  %1882 = vmatpush1.bf16.msra.mxu0 0
  %1883 = vmatprep.subr.bf16.mxu0 0
  %1884 = vmatpush1.bf16.msra.mxu0 0
  %1885 = vmatprep.subr.bf16.mxu0 0
  %1886 = vmatpush1.bf16.msra.mxu0 0
  %1887 = vmatprep.subr.bf16.mxu0 0
  %1888 = vmatpush1.bf16.msra.mxu0 0
  %1889 = vmatprep.subr.bf16.mxu0 0
  %1890 = vmatpush1.bf16.msra.mxu0 0
  %1891 = vmatprep.subr.bf16.mxu0 0
  %1892 = vmatpush1.bf16.msra.mxu0 0
  %1893 = vmatprep.subr.bf16.mxu0 0
  %1894 = vmatpush1.bf16.msra.mxu0 0
  %1895 = vmatprep.subr.bf16.mxu0 0
  %1896 = vmatpush1.bf16.msra.mxu0 0
  %1897 = vmatprep.subr.bf16.mxu0 0
  %1898 = vmatpush1.bf16.msra.mxu0 0
  %1899 = vmatprep.mubr.bf16.mxu0 0
  %1900 = vmatmul.mubr.bf16.gmra.mrb[0].mxu0 %v1496
  %v1901 = vpop.f32.mrb[0].mxu0
  %v1902 = vadd.f32 %v1861, %v1901
  %v1903 = vpop.f32.mrb[0].mxu0
  %v1904 = vadd.f32 %v1863, %v1903
  %v1905 = vpop.f32.mrb[0].mxu0
  %v1906 = vpop.f32.mrb[0].mxu0
  %1907 = vdwg.mxu0
  %1908 = vmatprep.subr.bf16.mxu0 %v1037
  %1909 = vmatpush1.bf16.msra.mxu0 %v1036
  %1910 = vmatprep.subr.bf16.mxu0 %v1050
  %1911 = vmatpush1.bf16.msra.mxu0 %v1049
  %1912 = vmatprep.subr.bf16.mxu0 %v1063
  %1913 = vmatpush1.bf16.msra.mxu0 %v1062
  %1914 = vmatprep.subr.bf16.mxu0 %v1076
  %1915 = vmatpush1.bf16.msra.mxu0 %v1075
  %1916 = vmatprep.subr.bf16.mxu0 %v1089
  %1917 = vmatpush1.bf16.msra.mxu0 %v1088
  %1918 = vmatprep.subr.bf16.mxu0 %v1102
  %1919 = vmatpush1.bf16.msra.mxu0 %v1101
  %1920 = vmatprep.subr.bf16.mxu0 %v1115
  %1921 = vmatpush1.bf16.msra.mxu0 %v1114
  %1922 = vmatprep.subr.bf16.mxu0 %v1128
  %1923 = vmatpush1.bf16.msra.mxu0 %v1127
  %1924 = vmatprep.subr.bf16.mxu0 %v1141
  %1925 = vmatpush1.bf16.msra.mxu0 %v1140
  %1926 = vmatprep.subr.bf16.mxu0 %v1154
  %1927 = vmatpush1.bf16.msra.mxu0 %v1153
  %1928 = vmatprep.subr.bf16.mxu0 %v1167
  %1929 = vmatpush1.bf16.msra.mxu0 %v1166
  %1930 = vmatprep.subr.bf16.mxu0 %v1180
  %1931 = vmatpush1.bf16.msra.mxu0 %v1179
  %1932 = vmatprep.subr.bf16.mxu0 %v1193
  %1933 = vmatpush1.bf16.msra.mxu0 %v1192
  %1934 = vmatprep.subr.bf16.mxu0 %v1206
  %1935 = vmatpush1.bf16.msra.mxu0 %v1205
  %1936 = vmatprep.subr.bf16.mxu0 %v1219
  %1937 = vmatpush1.bf16.msra.mxu0 %v1218
  %1938 = vmatprep.subr.bf16.mxu0 %v1232
  %1939 = vmatpush1.bf16.msra.mxu0 %v1231
  %1940 = vmatprep.mubr.bf16.mxu0 %v302
  %1941 = vmatmul.mubr.bf16.gmra.mrb[0].mxu0 %v295
  %v1942 = vpop.f32.mrb[0].mxu0
  %v1943 = vadd.f32 %v279, %v1942
  %v1944 = vpop.f32.mrb[0].mxu0
  %v1945 = vadd.f32 %v279, %v1944
  %v1946 = vpop.f32.mrb[0].mxu0
  %v1947 = vpop.f32.mrb[0].mxu0
  %1948 = vdwg.mxu0
  %1949 = vmatprep.subr.bf16.mxu0 %v1245
  %1950 = vmatpush1.bf16.msra.mxu0 %v1244
  %1951 = vmatprep.subr.bf16.mxu0 %v1258
  %1952 = vmatpush1.bf16.msra.mxu0 %v1257
  %1953 = vmatprep.subr.bf16.mxu0 0
  %1954 = vmatpush1.bf16.msra.mxu0 0
  %1955 = vmatprep.subr.bf16.mxu0 0
  %1956 = vmatpush1.bf16.msra.mxu0 0
  %1957 = vmatprep.subr.bf16.mxu0 0
  %1958 = vmatpush1.bf16.msra.mxu0 0
  %1959 = vmatprep.subr.bf16.mxu0 0
  %1960 = vmatpush1.bf16.msra.mxu0 0
  %1961 = vmatprep.subr.bf16.mxu0 0
  %1962 = vmatpush1.bf16.msra.mxu0 0
  %1963 = vmatprep.subr.bf16.mxu0 0
  %1964 = vmatpush1.bf16.msra.mxu0 0
  %1965 = vmatprep.subr.bf16.mxu0 0
  %1966 = vmatpush1.bf16.msra.mxu0 0
  %1967 = vmatprep.subr.bf16.mxu0 0
  %1968 = vmatpush1.bf16.msra.mxu0 0
  %1969 = vmatprep.subr.bf16.mxu0 0
  %1970 = vmatpush1.bf16.msra.mxu0 0
  %1971 = vmatprep.subr.bf16.mxu0 0
  %1972 = vmatpush1.bf16.msra.mxu0 0
  %1973 = vmatprep.subr.bf16.mxu0 0
  %1974 = vmatpush1.bf16.msra.mxu0 0
  %1975 = vmatprep.subr.bf16.mxu0 0
  %1976 = vmatpush1.bf16.msra.mxu0 0
  %1977 = vmatprep.subr.bf16.mxu0 0
  %1978 = vmatpush1.bf16.msra.mxu0 0
  %1979 = vmatprep.subr.bf16.mxu0 0
  %1980 = vmatpush1.bf16.msra.mxu0 0
  %1981 = vmatprep.mubr.bf16.mxu0 0
  %1982 = vmatmul.mubr.bf16.gmra.mrb[0].mxu0 %v1496
  %v1983 = vpop.f32.mrb[0].mxu0
  %v1984 = vadd.f32 %v1943, %v1983
  %v1985 = vpop.f32.mrb[0].mxu0
  %v1986 = vadd.f32 %v1945, %v1985
  %v1987 = vpop.f32.mrb[0].mxu0
  %v1988 = vpop.f32.mrb[0].mxu0
  %1989 = vdwg.mxu0
  %1990 = vmatprep.subr.bf16.mxu0 0
  %1991 = vmatpush1.bf16.msra.mxu0 %v1038
  %1992 = vmatprep.subr.bf16.mxu0 0
  %1993 = vmatpush1.bf16.msra.mxu0 %v1051
  %1994 = vmatprep.subr.bf16.mxu0 0
  %1995 = vmatpush1.bf16.msra.mxu0 %v1064
  %1996 = vmatprep.subr.bf16.mxu0 0
  %1997 = vmatpush1.bf16.msra.mxu0 %v1077
  %1998 = vmatprep.subr.bf16.mxu0 0
  %1999 = vmatpush1.bf16.msra.mxu0 %v1090
  %2000 = vmatprep.subr.bf16.mxu0 0
  %2001 = vmatpush1.bf16.msra.mxu0 %v1103
  %2002 = vmatprep.subr.bf16.mxu0 0
  %2003 = vmatpush1.bf16.msra.mxu0 %v1116
  %2004 = vmatprep.subr.bf16.mxu0 0
  %2005 = vmatpush1.bf16.msra.mxu0 %v1129
  %2006 = vmatprep.subr.bf16.mxu0 0
  %2007 = vmatpush1.bf16.msra.mxu0 %v1142
  %2008 = vmatprep.subr.bf16.mxu0 0
  %2009 = vmatpush1.bf16.msra.mxu0 %v1155
  %2010 = vmatprep.subr.bf16.mxu0 0
  %2011 = vmatpush1.bf16.msra.mxu0 %v1168
  %2012 = vmatprep.subr.bf16.mxu0 0
  %2013 = vmatpush1.bf16.msra.mxu0 %v1181
  %2014 = vmatprep.subr.bf16.mxu0 0
  %2015 = vmatpush1.bf16.msra.mxu0 %v1194
  %2016 = vmatprep.subr.bf16.mxu0 0
  %2017 = vmatpush1.bf16.msra.mxu0 %v1207
  %2018 = vmatprep.subr.bf16.mxu0 0
  %2019 = vmatpush1.bf16.msra.mxu0 %v1220
  %2020 = vmatprep.subr.bf16.mxu0 0
  %2021 = vmatpush1.bf16.msra.mxu0 %v1233
  %2022 = vmatprep.mubr.bf16.mxu0 %v302
  %2023 = vmatmul.mubr.bf16.gmra.mrb[0].mxu0 %v295
  %v2024 = vpop.f32.mrb[0].mxu0
  %v2025 = vadd.f32 %v279, %v2024
  %v2026 = vpop.f32.mrb[0].mxu0
  %v2027 = vpop.f32.mrb[0].mxu0
  %v2028 = vpop.f32.mrb[0].mxu0
  %2029 = vdwg.mxu0
  %2030 = vmatprep.subr.bf16.mxu0 0
  %2031 = vmatpush1.bf16.msra.mxu0 %v1246
  %2032 = vmatprep.subr.bf16.mxu0 0
  %2033 = vmatpush1.bf16.msra.mxu0 %v1259
  %2034 = vmatprep.subr.bf16.mxu0 0
  %2035 = vmatpush1.bf16.msra.mxu0 0
  %2036 = vmatprep.subr.bf16.mxu0 0
  %2037 = vmatpush1.bf16.msra.mxu0 0
  %2038 = vmatprep.subr.bf16.mxu0 0
  %2039 = vmatpush1.bf16.msra.mxu0 0
  %2040 = vmatprep.subr.bf16.mxu0 0
  %2041 = vmatpush1.bf16.msra.mxu0 0
  %2042 = vmatprep.subr.bf16.mxu0 0
  %2043 = vmatpush1.bf16.msra.mxu0 0
  %2044 = vmatprep.subr.bf16.mxu0 0
  %2045 = vmatpush1.bf16.msra.mxu0 0
  %2046 = vmatprep.subr.bf16.mxu0 0
  %2047 = vmatpush1.bf16.msra.mxu0 0
  %2048 = vmatprep.subr.bf16.mxu0 0
  %2049 = vmatpush1.bf16.msra.mxu0 0
  %2050 = vmatprep.subr.bf16.mxu0 0
  %2051 = vmatpush1.bf16.msra.mxu0 0
  %2052 = vmatprep.subr.bf16.mxu0 0
  %2053 = vmatpush1.bf16.msra.mxu0 0
  %2054 = vmatprep.subr.bf16.mxu0 0
  %2055 = vmatpush1.bf16.msra.mxu0 0
  %2056 = vmatprep.subr.bf16.mxu0 0
  %2057 = vmatpush1.bf16.msra.mxu0 0
  %2058 = vmatprep.subr.bf16.mxu0 0
  %2059 = vmatpush1.bf16.msra.mxu0 0
  %2060 = vmatprep.subr.bf16.mxu0 0
  %2061 = vmatpush1.bf16.msra.mxu0 0
  %2062 = vmatprep.mubr.bf16.mxu0 0
  %2063 = vmatmul.mubr.bf16.gmra.mrb[0].mxu0 %v1496
  %v2064 = vpop.f32.mrb[0].mxu0
  %v2065 = vadd.f32 %v2025, %v2064
  %v2066 = vpop.f32.mrb[0].mxu0
  %v2067 = vpop.f32.mrb[0].mxu0
  %v2068 = vpop.f32.mrb[0].mxu0
  %2069 = vdwg.mxu0
  %v2070 = vxor.u32 %v1574, 2147483648
  %v2071 = vxor.u32 %v1576, 2147483648
  %v2072 = vxor.u32 %v1656, 2147483648
  %v2073 = vxor.u32 %v1658, 2147483648
  %v2074 = vxor.u32 %v1738, 2147483648
  %v2075 = vxor.u32 %v1740, 2147483648
  %v2076 = vxor.u32 %v1820, 2147483648
  %v2077 = vxor.u32 %v1822, 2147483648
  %v2078 = vxor.u32 %v1902, 2147483648
  %v2079 = vxor.u32 %v1904, 2147483648
  %v2080 = vxor.u32 %v1984, 2147483648
  %v2081 = vxor.u32 %v1986, 2147483648
  %v2082 = vxor.u32 %v2065, 2147483648
  %v2083 = vmul.f32 %v2070, 1.442695
  %v2084 = vpow.pop %v2083
  %v2085 = vmul.f32 %v2071, 1.442695
  %v2086 = vpow.pop %v2085
  %v2087 = vmul.f32 %v2072, 1.442695
  %v2088 = vpow.pop %v2087
  %v2089 = vmul.f32 %v2073, 1.442695
  %v2090 = vpow.pop %v2089
  %v2091 = vmul.f32 %v2074, 1.442695
  %v2092 = vpow.pop %v2091
  %v2093 = vmul.f32 %v2075, 1.442695
  %v2094 = vpow.pop %v2093
  %v2095 = vmul.f32 %v2076, 1.442695
  %v2096 = vpow.pop %v2095
  %v2097 = vmul.f32 %v2077, 1.442695
  %v2098 = vpow.pop %v2097
  %v2099 = vmul.f32 %v2078, 1.442695
  %v2100 = vpow.pop %v2099
  %v2101 = vmul.f32 %v2079, 1.442695
  %v2102 = vpow.pop %v2101
  %v2103 = vmul.f32 %v2080, 1.442695
  %v2104 = vpow.pop %v2103
  %v2105 = vmul.f32 %v2081, 1.442695
  %v2106 = vpow.pop %v2105
  %v2107 = vmul.f32 %v2082, 1.442695
  %v2108 = vpow.pop %v2107
  %v2109 = vadd.f32 %v2084, 1.0
  %v2110 = vadd.f32 %v2086, 1.0
  %v2111 = vadd.f32 %v2088, 1.0
  %v2112 = vadd.f32 %v2090, 1.0
  %v2113 = vadd.f32 %v2092, 1.0
  %v2114 = vadd.f32 %v2094, 1.0
  %v2115 = vadd.f32 %v2096, 1.0
  %v2116 = vadd.f32 %v2098, 1.0
  %v2117 = vadd.f32 %v2100, 1.0
  %v2118 = vadd.f32 %v2102, 1.0
  %v2119 = vadd.f32 %v2104, 1.0
  %v2120 = vadd.f32 %v2106, 1.0
  %v2121 = vadd.f32 %v2108, 1.0
  %v2122 = vrcp.pop %v2109
  %v2123 = vmul.f32 1.0, %v2122
  %v2124 = vrcp.pop %v2110
  %v2125 = vmul.f32 1.0, %v2124
  %v2126 = vrcp.pop %v2111
  %v2127 = vmul.f32 1.0, %v2126
  %v2128 = vrcp.pop %v2112
  %v2129 = vmul.f32 1.0, %v2128
  %v2130 = vrcp.pop %v2113
  %v2131 = vmul.f32 1.0, %v2130
  %v2132 = vrcp.pop %v2114
  %v2133 = vmul.f32 1.0, %v2132
  %v2134 = vrcp.pop %v2115
  %v2135 = vmul.f32 1.0, %v2134
  %v2136 = vrcp.pop %v2116
  %v2137 = vmul.f32 1.0, %v2136
  %v2138 = vrcp.pop %v2117
  %v2139 = vmul.f32 1.0, %v2138
  %v2140 = vrcp.pop %v2118
  %v2141 = vmul.f32 1.0, %v2140
  %v2142 = vrcp.pop %v2119
  %v2143 = vmul.f32 1.0, %v2142
  %v2144 = vrcp.pop %v2120
  %v2145 = vmul.f32 1.0, %v2144
  %v2146 = vrcp.pop %v2121
  %v2147 = vmul.f32 1.0, %v2146
  %v2161 = vcombine.low %v2123, %v2125
  %v2162 = vcombine.low %v2127, %v2129
  %v2163 = vcombine.low %v2131, %v2133
  %v2164 = vcombine.low %v2135, %v2137
  %v2166 = vunpack.c.l.s4 1966171168
  %v2167 = vunpack.c.0.s8 %v2166
  %v2168 = vlaneseq
  %v2169 = vshrl.u32 %v2168, 7
  %v2170 = vsub.s32 %v2167, %v2169
  %v2171 = vrot.slane %v2161, %v2170
  %v2173 = vunpack.c.l.s4 1966171168
  %v2174 = vunpack.c.0.s8 %v2173
  %v2175 = vlaneseq
  %v2176 = vshrl.u32 %v2175, 7
  %v2177 = vsub.s32 %v2174, %v2176
  %v2178 = vrot.slane %v2162, %v2177
  %v2180 = vunpack.c.l.s4 1966171168
  %v2181 = vunpack.c.0.s8 %v2180
  %v2182 = vlaneseq
  %v2183 = vshrl.u32 %v2182, 7
  %v2184 = vsub.s32 %v2181, %v2183
  %v2185 = vrot.slane %v2163, %v2184
  %v2187 = vunpack.c.l.s4 1966171168
  %v2188 = vunpack.c.0.s8 %v2187
  %v2189 = vlaneseq
  %v2190 = vshrl.u32 %v2189, 7
  %v2191 = vsub.s32 %v2188, %v2190
  %v2192 = vrot.slane %v2164, %v2191
  %v2193 = vcombine.low %v2171, %v2178
  %v2194 = vcombine.low %v2185, %v2192
  %v2196 = vunpack.c.l.s4 1966171168
  %v2197 = vunpack.c.0.s8 %v2196
  %v2198 = vlaneseq
  %v2199 = vshrl.u32 %v2198, 7
  %v2200 = vsub.s32 %v2197, %v2199
  %v2201 = vrot.slane %v2193, %v2200
  %v2203 = vunpack.c.l.s4 1966171168
  %v2204 = vunpack.c.0.s8 %v2203
  %v2205 = vlaneseq
  %v2206 = vshrl.u32 %v2205, 7
  %v2207 = vsub.s32 %v2204, %v2206
  %v2208 = vrot.slane %v2194, %v2207
  %v2209 = vcombine.low %v2201, %v2208
  %v2210 = vcombine.low %v2139, %v2141
  %v2211 = vcombine.low %v2143, %v2145
  %v2213 = vunpack.c.l.s4 1966171168
  %v2214 = vunpack.c.0.s8 %v2213
  %v2215 = vlaneseq
  %v2216 = vshrl.u32 %v2215, 7
  %v2217 = vsub.s32 %v2214, %v2216
  %v2218 = vrot.slane %v2210, %v2217
  %v2220 = vunpack.c.l.s4 1966171168
  %v2221 = vunpack.c.0.s8 %v2220
  %v2222 = vlaneseq
  %v2223 = vshrl.u32 %v2222, 7
  %v2224 = vsub.s32 %v2221, %v2223
  %v2225 = vrot.slane %v2211, %v2224
  %v2227 = vunpack.c.l.s4 1966171168
  %v2228 = vunpack.c.0.s8 %v2227
  %v2229 = vlaneseq
  %v2230 = vshrl.u32 %v2229, 7
  %v2231 = vsub.s32 %v2228, %v2230
  %v2232 = vrot.slane %v2147, %v2231
  %v2233 = vcombine.low %v2218, %v2225
  %v2235 = vunpack.c.l.s4 1966171168
  %v2236 = vunpack.c.0.s8 %v2235
  %v2237 = vlaneseq
  %v2238 = vshrl.u32 %v2237, 7
  %v2239 = vsub.s32 %v2236, %v2238
  %v2240 = vrot.slane %v2233, %v2239
  %v2242 = vunpack.c.l.s4 1966171168
  %v2243 = vunpack.c.0.s8 %v2242
  %v2244 = vlaneseq
  %v2245 = vshrl.u32 %v2244, 7
  %v2246 = vsub.s32 %v2243, %v2245
  %v2247 = vrot.slane %v2232, %v2246
  %v2248 = vcombine.low %v2240, %v2247
  %2251 = vst [vmem:[%s3] sm:$0xff] %v2209
  %v2252 = vlaneseq
  %vm2253 = vcmp.ge.s32.totalorder %v2252, 0
  %vm2254 = vcmp.lt.s32.totalorder %v2252, 544
  %vm2255 = vmand %vm2253, %vm2254
  %2256 = vst.msk [vmem:[%s3 + $0x8] sm:$0x1f] %vm2255, %v2248
  // Predicated region
  $region14: #{conv_denoiser_forward.13} parent=0 // pred_check
    _
  $region15: #{conv_denoiser_forward.13} parent=0 // pred_check_branch
    %2258 = sbr.rel (0) target = $region17
  $region16: #{conv_denoiser_forward.13} parent=0 // pred_region
    _
  $region17: #{conv_denoiser_forward.13} parent=0 // pred_fallthru
    _
  // Predicated region
  $region18: #{conv_denoiser_forward.13} parent=0 // pred_check
    _
  $region19: #{conv_denoiser_forward.13} parent=0 // pred_check_branch
    %2260 = sbr.rel (0) target = $region21
  $region20: #{conv_denoiser_forward.13} parent=0 // pred_region
    _
  $region21: #{conv_denoiser_forward.13} parent=0 // pred_fallthru
    _

</llo_original>
